<compile_context>
chip_gen: v6e
topology: v6e:2x2x1
jax: 0.10.0
libtpu: 0.0.40
codegen_flags: <defaults>
</compile_context>

<pallas_src>
import functools

import numpy as np
import jax
import jax.numpy as jnp
from jax.experimental import pallas as pl
from jax.experimental.pallas import tpu as pltpu  # noqa: F401  (memory spaces available if needed)


# ----------------------------------------------------------------------------
# Fused GAT encoder kernel (projection + all heads + epilogue in one body)
# ----------------------------------------------------------------------------
def _gat_encode_kernel(feat_ref, w_ref, a_src_ref, a_trg_ref, mask_ref,
                       bias_ref, o_ref, *, nh, fout):
    """GATLayerImp3 (concat=False, eval mode), all heads unrolled.

    feat_ref : (N, FIN)          input node features
    w_ref    : (FIN, 2*NH*FOUT)  fused [proj | skip_proj] weight (128 lanes)
    a_src_ref: (NH, FOUT)        scoring_fn_source
    a_trg_ref: (NH, FOUT)        scoring_fn_target
    mask_ref : (N, N)            target-major adjacency, mask[j, i] = 1 iff edge i -> j
    bias_ref : (1, FOUT)
    o_ref    : (N, FOUT)         encode_feature (after skip/mean/bias/ELU)
    """
    feat = feat_ref[...]
    # One lane-dense (…,128) MXU pass does both the attention projection and
    # the skip projection (instead of two 64-lane matmuls).
    ps = jnp.dot(feat, w_ref[...], preferred_element_type=jnp.float32)
    mask = mask_ref[...]
    a_src = a_src_ref[...]
    a_trg = a_trg_ref[...]

    acc = None
    for h in range(nh):                                    # unrolled, static slices
        proj_h = ps[:, h * fout:(h + 1) * fout]            # (N, FOUT)
        skip_h = ps[:, (nh + h) * fout:(nh + h + 1) * fout]
        a_s = a_src[h:h + 1, :]                            # (1, FOUT)
        a_t = a_trg[h:h + 1, :]
        s_src = jnp.sum(proj_h * a_s, axis=-1, keepdims=True)   # (N, 1)
        s_trg = jnp.sum(proj_h * a_t, axis=-1, keepdims=True)   # (N, 1)

        # scores[j, i] = s_trg[j] + s_src[i]; LeakyReLU(0.2)
        scores = s_trg + jnp.transpose(s_src)              # (N_trg, N_src)
        scores = jnp.where(scores > 0, scores, 0.2 * scores)

        # Masked, numerically safe softmax over each target's neighborhood.
        # Mask BEFORE exp so a non-edge score can never overflow (no inf*0).
        masked = jnp.where(mask > 0, scores, jnp.float32(-1e30))
        rmax = jnp.max(masked, axis=-1, keepdims=True)
        e = jnp.exp(masked - rmax) * mask
        denom = jnp.sum(e, axis=-1, keepdims=True)

        # Deferred normalization: aggregate, then row-scale by 1/denom
        # (an (N,FOUT) multiply + EUP reciprocal instead of an (N,N) divide).
        agg = jnp.dot(e, proj_h, preferred_element_type=jnp.float32)
        agg = agg * pl.reciprocal(denom + 1e-16, approx=True)

        contrib = agg + skip_h                             # skip added per head
        acc = contrib if acc is None else acc + contrib

    out = acc * (1.0 / nh) + bias_ref[...]                 # mean over heads + bias
    out = jnp.where(out > 0, out, jnp.exp(jnp.minimum(out, 0.0)) - 1.0)   # ELU
    o_ref[...] = out.astype(o_ref.dtype)


def gat_encode(in_feature, w_ps, a_src, a_trg, mask_t, bias):
    N, FIN = in_feature.shape
    nh, fout = a_src.shape
    kern = functools.partial(_gat_encode_kernel, nh=nh, fout=fout)
    # NOTE: optional v6e/v7x micro-opt: cast `e`/`proj` to bf16 for the dots
    # (kept f32 here — negligible at N=128 and preserves exact numerics).
    return pl.pallas_call(
        kern,
        out_shape=jax.ShapeDtypeStruct((N, fout), jnp.float32),
        grid=(1,),
        in_specs=[
            pl.BlockSpec((N, FIN), lambda i: (0, 0)),
            pl.BlockSpec(w_ps.shape, lambda i: (0, 0)),
            pl.BlockSpec(a_src.shape, lambda i: (0, 0)),
            pl.BlockSpec(a_trg.shape, lambda i: (0, 0)),
            pl.BlockSpec((N, N), lambda i: (0, 0)),
            pl.BlockSpec(bias.shape, lambda i: (0, 0)),
        ],
        out_specs=pl.BlockSpec((N, fout), lambda i: (0, 0)),
    )(in_feature.astype(jnp.float32), w_ps, a_src, a_trg, mask_t, bias)


# ----------------------------------------------------------------------------
# Fused head-FC kernel: relu(emb_fc) + relu(dis_fc) + out_fc in one body
# ----------------------------------------------------------------------------
def _head_fc_kernel(femb_ref, temb_ref, dist_ref, emb_w_ref, emb_b_ref,
                    dis_w_ref, dis_b_ref, out_w_ref, out_b_ref, o_ref, *, e):
    fe = femb_ref[...]                                     # (B, E)
    te = temb_ref[...]                                     # (B, E)
    ew = emb_w_ref[...]                                    # (2E, 10)
    # concat([from, to]) @ W  ==  from @ W[:E] + to @ W[E:]
    h1 = jnp.dot(fe, ew[:e, :], preferred_element_type=jnp.float32)
    h1 = h1 + jnp.dot(te, ew[e:, :], preferred_element_type=jnp.float32)
    h1 = jnp.maximum(h1 + emb_b_ref[...], 0.0)             # relu(emb_fc)
    # dis_fc: (B,1) @ (1,10) is just a broadcast multiply
    h2 = jnp.maximum(dist_ref[...] * dis_w_ref[...] + dis_b_ref[...], 0.0)
    ow = out_w_ref[...]                                    # (1, 20) pre-transposed
    out = jnp.sum(h1 * ow[:, :10], axis=-1, keepdims=True)
    out = out + jnp.sum(h2 * ow[:, 10:], axis=-1, keepdims=True)
    o_ref[...] = out + out_b_ref[...]


def head_fc(from_emb, to_emb, dist, emb_w, emb_b, dis_w, dis_b, out_w, out_b):
    B, E = from_emb.shape
    kern = functools.partial(_head_fc_kernel, e=E)
    args = (from_emb, to_emb, dist, emb_w, emb_b, dis_w, dis_b, out_w, out_b)
    return pl.pallas_call(
        kern,
        out_shape=jax.ShapeDtypeStruct((B, 1), jnp.float32),
        grid=(1,),
        in_specs=[pl.BlockSpec(a.shape, lambda i: (0, 0)) for a in args],
        out_specs=pl.BlockSpec((B, 1), lambda i: (0, 0)),
    )(*args)


# ----------------------------------------------------------------------------
# DistanceGatFC forward (glue in plain JAX, hot paths in Pallas)
# ----------------------------------------------------------------------------
@jax.jit
def distance_gat_fc_forward(params, node_features, mask_t, from_node, to_node,
                            distance):
    # GPS embedding lookups + feature concat (tiny gathers, XLA glue)
    lon_idx = node_features[:, -2].astype(jnp.int32)
    lat_idx = node_features[:, -1].astype(jnp.int32)
    lon_emb = params["lon_embed"][lon_idx]
    lat_emb = params["lat_embed"][lat_idx]
    in_feature = jnp.concatenate(
        [lon_emb, lat_emb, node_features[:, :-2]], axis=1)       # (N, FIN)

    # --- fused GATLayerImp3 (proj+skip matmul, all heads, epilogue) ---
    encode_feature = gat_encode(
        in_feature, params["gat_w_ps"], params["gat_a_src"],
        params["gat_a_trg"], mask_t, params["gat_bias"])          # (N, embed_dim)

    # --- fused head FCs ---
    from_emb = encode_feature[from_node]
    to_emb = encode_feature[to_node]
    dist2d = distance.reshape(-1, 1).astype(jnp.float32)
    out = head_fc(from_emb, to_emb, dist2d,
                  params["emb_fc_w"], params["emb_fc_b"],
                  params["dis_fc_w"], params["dis_fc_b"],
                  params["out_fc_w"], params["out_fc_b"])         # (B, 1)
    return out[:, 0]                                              # (B,)


# ----------------------------------------------------------------------------
# Deterministic parameter / data construction and demo run
# ----------------------------------------------------------------------------
def make_params(key, *, fin, embed_dim, num_heads, gps_emb_dim,
                img_height, img_width):
    ks = jax.random.split(key, 12)
    scale = 0.1
    w_proj = scale * jax.random.normal(ks[2], (fin, num_heads * embed_dim), jnp.float32)
    w_skip = scale * jax.random.normal(ks[5], (fin, num_heads * embed_dim), jnp.float32)
    return {
        "lat_embed": scale * jax.random.normal(ks[0], (img_height, gps_emb_dim), jnp.float32),
        "lon_embed": scale * jax.random.normal(ks[1], (img_width, gps_emb_dim), jnp.float32),
        # GATLayerImp3 params; proj and skip_proj weights fused -> 128-lane matmul
        "gat_w_ps": jnp.concatenate([w_proj, w_skip], axis=1),    # (FIN, 2*NH*FOUT)
        "gat_a_src": scale * jax.random.normal(ks[3], (num_heads, embed_dim), jnp.float32),
        "gat_a_trg": scale * jax.random.normal(ks[4], (num_heads, embed_dim), jnp.float32),
        "gat_bias": jnp.zeros((1, embed_dim), jnp.float32),       # concat=False -> (FOUT,)
        # FC heads
        "emb_fc_w": scale * jax.random.normal(ks[6], (2 * embed_dim, 10), jnp.float32),
        "emb_fc_b": scale * jax.random.normal(ks[7], (1, 10), jnp.float32),
        "dis_fc_w": scale * jax.random.normal(ks[8], (1, 10), jnp.float32),
        "dis_fc_b": scale * jax.random.normal(ks[9], (1, 10), jnp.float32),
        "out_fc_w": scale * jax.random.normal(ks[10], (1, 20), jnp.float32),  # stored transposed
        "out_fc_b": scale * jax.random.normal(ks[11], (1, 1), jnp.float32),
    }


if __name__ == "__main__":
    # config (concat=False so GAT output dim == embed_dim, matching emb_fc)
    N_NODES = 128
    BASE_FEATS = 4           # node_features = 4 real feats + lon idx + lat idx
    GPS_EMB_DIM = 8
    EMBED_DIM = 16
    NUM_HEADS = 4
    IMG_H, IMG_W = 32, 48
    BATCH = 32
    FIN = BASE_FEATS + 2 * GPS_EMB_DIM   # feature_dim = F - 2 + 2*gps_emb_dim = 20

    key = jax.random.PRNGKey(0)
    k_feat, k_lon, k_lat, k_adj, k_from, k_to, k_dist, k_par = jax.random.split(key, 8)

    # node_features: (N, 6) -- 4 real features, then lon index, lat index
    feats = jax.random.normal(k_feat, (N_NODES, BASE_FEATS), jnp.float32)
    lon = jax.random.randint(k_lon, (N_NODES, 1), 0, IMG_W).astype(jnp.float32)
    lat = jax.random.randint(k_lat, (N_NODES, 1), 0, IMG_H).astype(jnp.float32)
    node_features = jnp.concatenate([feats, lon, lat], axis=1)

    # sparse adjacency (adj_mx COO): random directed edges, ~10% density.
    # The GAT kernel consumes a dense target-major mask: mask_t[j, i] = 1 iff edge i -> j.
    adj_dense = np.array(jax.random.uniform(k_adj, (N_NODES, N_NODES)) < 0.1)
    np.fill_diagonal(adj_dense, True)    # self loops so every node has a neighbor
    mask_t = jnp.asarray(adj_dense.T, jnp.float32)        # (N_trg, N_src)

    params = make_params(k_par, fin=FIN, embed_dim=EMBED_DIM, num_heads=NUM_HEADS,
                         gps_emb_dim=GPS_EMB_DIM, img_height=IMG_H, img_width=IMG_W)

    from_node = jax.random.randint(k_from, (BATCH,), 0, N_NODES)
    to_node = jax.random.randint(k_to, (BATCH,), 0, N_NODES)
    distance = jax.random.uniform(k_dist, (BATCH,), jnp.float32) * 10.0

    out = distance_gat_fc_forward(params, node_features, mask_t,
                                  from_node, to_node, distance)
    out = jax.block_until_ready(out)

    assert out.shape == (BATCH,), out.shape
    assert bool(jnp.all(jnp.isfinite(out)))
    # TODO(synk): dropout inside GATLayerImp3 is omitted (eval-mode forward);
    # CrossEntropyLoss belongs to calculate_loss, not forward.
    print("KERNEL_OK")
</pallas_src>

<mosaic_0001>
module attributes {stable_mosaic.version = 11 : i64} {
  func.func @_gat_encode_kernel(%arg0: i32, %arg1: memref<128x20xf32, #tpu.memory_space<vmem>>, %arg2: memref<20x128xf32, #tpu.memory_space<vmem>>, %arg3: memref<4x16xf32, #tpu.memory_space<vmem>>, %arg4: memref<4x16xf32, #tpu.memory_space<vmem>>, %arg5: memref<128x128xf32, #tpu.memory_space<vmem>>, %arg6: memref<1x16xf32, #tpu.memory_space<vmem>>, %arg7: memref<128x16xf32, #tpu.memory_space<vmem>>) attributes {dimension_semantics = [#tpu.dimension_semantics<arbitrary>], iteration_bounds = array<i64: 1>, scalar_prefetch = 0 : i64, scratch_operands = 0 : i64, tpu.core_type = #tpu.core_type<tc>, window_params = [{pipeline_mode = #tpu.pipeline_mode<synchronous>, transform_indices = @transform_0, window_bounds = array<i64: 128, 20>}, {pipeline_mode = #tpu.pipeline_mode<synchronous>, transform_indices = @transform_1, window_bounds = array<i64: 20, 128>}, {pipeline_mode = #tpu.pipeline_mode<synchronous>, transform_indices = @transform_2, window_bounds = array<i64: 4, 16>}, {pipeline_mode = #tpu.pipeline_mode<synchronous>, transform_indices = @transform_3, window_bounds = array<i64: 4, 16>}, {pipeline_mode = #tpu.pipeline_mode<synchronous>, transform_indices = @transform_4, window_bounds = array<i64: 128, 128>}, {pipeline_mode = #tpu.pipeline_mode<synchronous>, transform_indices = @transform_5, window_bounds = array<i64: 1, 16>}, {pipeline_mode = #tpu.pipeline_mode<synchronous>, transform_indices = @transform_6, window_bounds = array<i64: 128, 16>}]} {
    %c0 = arith.constant 0 : index
    %c0_0 = arith.constant 0 : index
    %0 = vector.load %arg1[%c0, %c0_0] : memref<128x20xf32, #tpu.memory_space<vmem>>, vector<128x20xf32>
    %c0_1 = arith.constant 0 : index
    %c0_2 = arith.constant 0 : index
    %1 = vector.load %arg2[%c0_1, %c0_2] : memref<20x128xf32, #tpu.memory_space<vmem>>, vector<20x128xf32>
    %cst = arith.constant dense<0.000000e+00> : vector<128x128xf32>
    %2 = tpu.matmul %0, %1, %cst {dimension_numbers = #tpu.dot_dimension_numbers<[1], [0], [0], [1], [0, 0, 1, 1], [], []>} : vector<128x20xf32>, vector<20x128xf32>, vector<128x128xf32> -> vector<128x128xf32>
    %c0_3 = arith.constant 0 : index
    %c0_4 = arith.constant 0 : index
    %3 = vector.load %arg5[%c0_3, %c0_4] : memref<128x128xf32, #tpu.memory_space<vmem>>, vector<128x128xf32>
    %c0_5 = arith.constant 0 : index
    %c0_6 = arith.constant 0 : index
    %4 = vector.load %arg3[%c0_5, %c0_6] : memref<4x16xf32, #tpu.memory_space<vmem>>, vector<4x16xf32>
    %c0_7 = arith.constant 0 : index
    %c0_8 = arith.constant 0 : index
    %5 = vector.load %arg4[%c0_7, %c0_8] : memref<4x16xf32, #tpu.memory_space<vmem>>, vector<4x16xf32>
    %6 = vector.extract_strided_slice %2 {offsets = [0, 0], sizes = [128, 16], strides = [1, 1]} : vector<128x128xf32> to vector<128x16xf32>
    %7 = vector.extract_strided_slice %2 {offsets = [0, 64], sizes = [128, 16], strides = [1, 1]} : vector<128x128xf32> to vector<128x16xf32>
    %8 = vector.extract_strided_slice %4 {offsets = [0, 0], sizes = [1, 16], strides = [1, 1]} : vector<4x16xf32> to vector<1x16xf32>
    %9 = vector.extract_strided_slice %5 {offsets = [0, 0], sizes = [1, 16], strides = [1, 1]} : vector<4x16xf32> to vector<1x16xf32>
    %10 = vector.broadcast %8 : vector<1x16xf32> to vector<128x16xf32>
    %11 = arith.mulf %6, %10 : vector<128x16xf32>
    %cst_9 = arith.constant dense<0.000000e+00> : vector<128xf32>
    %12 = vector.multi_reduction <add>, %11, %cst_9 [1] : vector<128x16xf32> to vector<128xf32>
    %13 = vector.shape_cast %12 : vector<128xf32> to vector<128x1xf32>
    %14 = vector.broadcast %9 : vector<1x16xf32> to vector<128x16xf32>
    %15 = arith.mulf %6, %14 : vector<128x16xf32>
    %cst_10 = arith.constant dense<0.000000e+00> : vector<128xf32>
    %16 = vector.multi_reduction <add>, %15, %cst_10 [1] : vector<128x16xf32> to vector<128xf32>
    %17 = vector.shape_cast %16 : vector<128xf32> to vector<128x1xf32>
    %18 = tpu.transpose %13, [1, 0] : vector<128x1xf32> -> vector<1x128xf32>
    %19 = vector.broadcast %17 : vector<128x1xf32> to vector<128x128xf32>
    %20 = vector.broadcast %18 : vector<1x128xf32> to vector<128x128xf32>
    %21 = arith.addf %19, %20 : vector<128x128xf32>
    %cst_11 = arith.constant 0.000000e+00 : f32
    %22 = vector.broadcast %cst_11 : f32 to vector<128x128xf32>
    %23 = arith.cmpf ogt, %21, %22 : vector<128x128xf32>
    %cst_12 = arith.constant 2.000000e-01 : f32
    %24 = vector.broadcast %cst_12 : f32 to vector<128x128xf32>
    %25 = arith.mulf %24, %21 : vector<128x128xf32>
    %26 = arith.select %23, %21, %25 : vector<128x128xi1>, vector<128x128xf32>
    %cst_13 = arith.constant 0.000000e+00 : f32
    %27 = vector.broadcast %cst_13 : f32 to vector<128x128xf32>
    %28 = arith.cmpf ogt, %3, %27 : vector<128x128xf32>
    %cst_14 = arith.constant -1.000000e+30 : f32
    %29 = vector.broadcast %cst_14 : f32 to vector<128x128xf32>
    %30 = arith.select %28, %26, %29 : vector<128x128xi1>, vector<128x128xf32>
    %cst_15 = arith.constant dense<0xFF800000> : vector<128xf32>
    %31 = vector.multi_reduction <maximumf>, %30, %cst_15 [1] : vector<128x128xf32> to vector<128xf32>
    %32 = vector.shape_cast %31 : vector<128xf32> to vector<128x1xf32>
    %33 = vector.broadcast %32 : vector<128x1xf32> to vector<128x128xf32>
    %34 = arith.subf %30, %33 : vector<128x128xf32>
    %35 = math.exp %34 : vector<128x128xf32>
    %36 = arith.mulf %35, %3 : vector<128x128xf32>
    %cst_16 = arith.constant dense<0.000000e+00> : vector<128xf32>
    %37 = vector.multi_reduction <add>, %36, %cst_16 [1] : vector<128x128xf32> to vector<128xf32>
    %38 = vector.shape_cast %37 : vector<128xf32> to vector<128x1xf32>
    %cst_17 = arith.constant dense<0.000000e+00> : vector<128x16xf32>
    %39 = tpu.matmul %36, %6, %cst_17 {dimension_numbers = #tpu.dot_dimension_numbers<[1], [0], [0], [1], [0, 0, 1, 1], [], []>} : vector<128x128xf32>, vector<128x16xf32>, vector<128x16xf32> -> vector<128x16xf32>
    %cst_18 = arith.constant 1.000000e-16 : f32
    %40 = vector.broadcast %cst_18 : f32 to vector<128x1xf32>
    %41 = arith.addf %38, %40 : vector<128x1xf32>
    %42 = tpu.reciprocal %41 {approx = true} : vector<128x1xf32> -> vector<128x1xf32>
    %43 = vector.broadcast %42 : vector<128x1xf32> to vector<128x16xf32>
    %44 = arith.mulf %39, %43 : vector<128x16xf32>
    %45 = arith.addf %44, %7 : vector<128x16xf32>
    %46 = vector.extract_strided_slice %2 {offsets = [0, 16], sizes = [128, 16], strides = [1, 1]} : vector<128x128xf32> to vector<128x16xf32>
    %47 = vector.extract_strided_slice %2 {offsets = [0, 80], sizes = [128, 16], strides = [1, 1]} : vector<128x128xf32> to vector<128x16xf32>
    %48 = vector.extract_strided_slice %4 {offsets = [1, 0], sizes = [1, 16], strides = [1, 1]} : vector<4x16xf32> to vector<1x16xf32>
    %49 = vector.extract_strided_slice %5 {offsets = [1, 0], sizes = [1, 16], strides = [1, 1]} : vector<4x16xf32> to vector<1x16xf32>
    %50 = vector.broadcast %48 : vector<1x16xf32> to vector<128x16xf32>
    %51 = arith.mulf %46, %50 : vector<128x16xf32>
    %cst_19 = arith.constant dense<0.000000e+00> : vector<128xf32>
    %52 = vector.multi_reduction <add>, %51, %cst_19 [1] : vector<128x16xf32> to vector<128xf32>
    %53 = vector.shape_cast %52 : vector<128xf32> to vector<128x1xf32>
    %54 = vector.broadcast %49 : vector<1x16xf32> to vector<128x16xf32>
    %55 = arith.mulf %46, %54 : vector<128x16xf32>
    %cst_20 = arith.constant dense<0.000000e+00> : vector<128xf32>
    %56 = vector.multi_reduction <add>, %55, %cst_20 [1] : vector<128x16xf32> to vector<128xf32>
    %57 = vector.shape_cast %56 : vector<128xf32> to vector<128x1xf32>
    %58 = tpu.transpose %53, [1, 0] : vector<128x1xf32> -> vector<1x128xf32>
    %59 = vector.broadcast %57 : vector<128x1xf32> to vector<128x128xf32>
    %60 = vector.broadcast %58 : vector<1x128xf32> to vector<128x128xf32>
    %61 = arith.addf %59, %60 : vector<128x128xf32>
    %cst_21 = arith.constant 0.000000e+00 : f32
    %62 = vector.broadcast %cst_21 : f32 to vector<128x128xf32>
    %63 = arith.cmpf ogt, %61, %62 : vector<128x128xf32>
    %cst_22 = arith.constant 2.000000e-01 : f32
    %64 = vector.broadcast %cst_22 : f32 to vector<128x128xf32>
    %65 = arith.mulf %64, %61 : vector<128x128xf32>
    %66 = arith.select %63, %61, %65 : vector<128x128xi1>, vector<128x128xf32>
    %cst_23 = arith.constant 0.000000e+00 : f32
    %67 = vector.broadcast %cst_23 : f32 to vector<128x128xf32>
    %68 = arith.cmpf ogt, %3, %67 : vector<128x128xf32>
    %cst_24 = arith.constant -1.000000e+30 : f32
    %69 = vector.broadcast %cst_24 : f32 to vector<128x128xf32>
    %70 = arith.select %68, %66, %69 : vector<128x128xi1>, vector<128x128xf32>
    %cst_25 = arith.constant dense<0xFF800000> : vector<128xf32>
    %71 = vector.multi_reduction <maximumf>, %70, %cst_25 [1] : vector<128x128xf32> to vector<128xf32>
    %72 = vector.shape_cast %71 : vector<128xf32> to vector<128x1xf32>
    %73 = vector.broadcast %72 : vector<128x1xf32> to vector<128x128xf32>
    %74 = arith.subf %70, %73 : vector<128x128xf32>
    %75 = math.exp %74 : vector<128x128xf32>
    %76 = arith.mulf %75, %3 : vector<128x128xf32>
    %cst_26 = arith.constant dense<0.000000e+00> : vector<128xf32>
    %77 = vector.multi_reduction <add>, %76, %cst_26 [1] : vector<128x128xf32> to vector<128xf32>
    %78 = vector.shape_cast %77 : vector<128xf32> to vector<128x1xf32>
    %cst_27 = arith.constant dense<0.000000e+00> : vector<128x16xf32>
    %79 = tpu.matmul %76, %46, %cst_27 {dimension_numbers = #tpu.dot_dimension_numbers<[1], [0], [0], [1], [0, 0, 1, 1], [], []>} : vector<128x128xf32>, vector<128x16xf32>, vector<128x16xf32> -> vector<128x16xf32>
    %cst_28 = arith.constant 1.000000e-16 : f32
    %80 = vector.broadcast %cst_28 : f32 to vector<128x1xf32>
    %81 = arith.addf %78, %80 : vector<128x1xf32>
    %82 = tpu.reciprocal %81 {approx = true} : vector<128x1xf32> -> vector<128x1xf32>
    %83 = vector.broadcast %82 : vector<128x1xf32> to vector<128x16xf32>
    %84 = arith.mulf %79, %83 : vector<128x16xf32>
    %85 = arith.addf %84, %47 : vector<128x16xf32>
    %86 = arith.addf %45, %85 : vector<128x16xf32>
    %87 = vector.extract_strided_slice %2 {offsets = [0, 32], sizes = [128, 16], strides = [1, 1]} : vector<128x128xf32> to vector<128x16xf32>
    %88 = vector.extract_strided_slice %2 {offsets = [0, 96], sizes = [128, 16], strides = [1, 1]} : vector<128x128xf32> to vector<128x16xf32>
    %89 = vector.extract_strided_slice %4 {offsets = [2, 0], sizes = [1, 16], strides = [1, 1]} : vector<4x16xf32> to vector<1x16xf32>
    %90 = vector.extract_strided_slice %5 {offsets = [2, 0], sizes = [1, 16], strides = [1, 1]} : vector<4x16xf32> to vector<1x16xf32>
    %91 = vector.broadcast %89 : vector<1x16xf32> to vector<128x16xf32>
    %92 = arith.mulf %87, %91 : vector<128x16xf32>
    %cst_29 = arith.constant dense<0.000000e+00> : vector<128xf32>
    %93 = vector.multi_reduction <add>, %92, %cst_29 [1] : vector<128x16xf32> to vector<128xf32>
    %94 = vector.shape_cast %93 : vector<128xf32> to vector<128x1xf32>
    %95 = vector.broadcast %90 : vector<1x16xf32> to vector<128x16xf32>
    %96 = arith.mulf %87, %95 : vector<128x16xf32>
    %cst_30 = arith.constant dense<0.000000e+00> : vector<128xf32>
    %97 = vector.multi_reduction <add>, %96, %cst_30 [1] : vector<128x16xf32> to vector<128xf32>
    %98 = vector.shape_cast %97 : vector<128xf32> to vector<128x1xf32>
    %99 = tpu.transpose %94, [1, 0] : vector<128x1xf32> -> vector<1x128xf32>
    %100 = vector.broadcast %98 : vector<128x1xf32> to vector<128x128xf32>
    %101 = vector.broadcast %99 : vector<1x128xf32> to vector<128x128xf32>
    %102 = arith.addf %100, %101 : vector<128x128xf32>
    %cst_31 = arith.constant 0.000000e+00 : f32
    %103 = vector.broadcast %cst_31 : f32 to vector<128x128xf32>
    %104 = arith.cmpf ogt, %102, %103 : vector<128x128xf32>
    %cst_32 = arith.constant 2.000000e-01 : f32
    %105 = vector.broadcast %cst_32 : f32 to vector<128x128xf32>
    %106 = arith.mulf %105, %102 : vector<128x128xf32>
    %107 = arith.select %104, %102, %106 : vector<128x128xi1>, vector<128x128xf32>
    %cst_33 = arith.constant 0.000000e+00 : f32
    %108 = vector.broadcast %cst_33 : f32 to vector<128x128xf32>
    %109 = arith.cmpf ogt, %3, %108 : vector<128x128xf32>
    %cst_34 = arith.constant -1.000000e+30 : f32
    %110 = vector.broadcast %cst_34 : f32 to vector<128x128xf32>
    %111 = arith.select %109, %107, %110 : vector<128x128xi1>, vector<128x128xf32>
    %cst_35 = arith.constant dense<0xFF800000> : vector<128xf32>
    %112 = vector.multi_reduction <maximumf>, %111, %cst_35 [1] : vector<128x128xf32> to vector<128xf32>
    %113 = vector.shape_cast %112 : vector<128xf32> to vector<128x1xf32>
    %114 = vector.broadcast %113 : vector<128x1xf32> to vector<128x128xf32>
    %115 = arith.subf %111, %114 : vector<128x128xf32>
    %116 = math.exp %115 : vector<128x128xf32>
    %117 = arith.mulf %116, %3 : vector<128x128xf32>
    %cst_36 = arith.constant dense<0.000000e+00> : vector<128xf32>
    %118 = vector.multi_reduction <add>, %117, %cst_36 [1] : vector<128x128xf32> to vector<128xf32>
    %119 = vector.shape_cast %118 : vector<128xf32> to vector<128x1xf32>
    %cst_37 = arith.constant dense<0.000000e+00> : vector<128x16xf32>
    %120 = tpu.matmul %117, %87, %cst_37 {dimension_numbers = #tpu.dot_dimension_numbers<[1], [0], [0], [1], [0, 0, 1, 1], [], []>} : vector<128x128xf32>, vector<128x16xf32>, vector<128x16xf32> -> vector<128x16xf32>
    %cst_38 = arith.constant 1.000000e-16 : f32
    %121 = vector.broadcast %cst_38 : f32 to vector<128x1xf32>
    %122 = arith.addf %119, %121 : vector<128x1xf32>
    %123 = tpu.reciprocal %122 {approx = true} : vector<128x1xf32> -> vector<128x1xf32>
    %124 = vector.broadcast %123 : vector<128x1xf32> to vector<128x16xf32>
    %125 = arith.mulf %120, %124 : vector<128x16xf32>
    %126 = arith.addf %125, %88 : vector<128x16xf32>
    %127 = arith.addf %86, %126 : vector<128x16xf32>
    %128 = vector.extract_strided_slice %2 {offsets = [0, 48], sizes = [128, 16], strides = [1, 1]} : vector<128x128xf32> to vector<128x16xf32>
    %129 = vector.extract_strided_slice %2 {offsets = [0, 112], sizes = [128, 16], strides = [1, 1]} : vector<128x128xf32> to vector<128x16xf32>
    %130 = vector.extract_strided_slice %4 {offsets = [3, 0], sizes = [1, 16], strides = [1, 1]} : vector<4x16xf32> to vector<1x16xf32>
    %131 = vector.extract_strided_slice %5 {offsets = [3, 0], sizes = [1, 16], strides = [1, 1]} : vector<4x16xf32> to vector<1x16xf32>
    %132 = vector.broadcast %130 : vector<1x16xf32> to vector<128x16xf32>
    %133 = arith.mulf %128, %132 : vector<128x16xf32>
    %cst_39 = arith.constant dense<0.000000e+00> : vector<128xf32>
    %134 = vector.multi_reduction <add>, %133, %cst_39 [1] : vector<128x16xf32> to vector<128xf32>
    %135 = vector.shape_cast %134 : vector<128xf32> to vector<128x1xf32>
    %136 = vector.broadcast %131 : vector<1x16xf32> to vector<128x16xf32>
    %137 = arith.mulf %128, %136 : vector<128x16xf32>
    %cst_40 = arith.constant dense<0.000000e+00> : vector<128xf32>
    %138 = vector.multi_reduction <add>, %137, %cst_40 [1] : vector<128x16xf32> to vector<128xf32>
    %139 = vector.shape_cast %138 : vector<128xf32> to vector<128x1xf32>
    %140 = tpu.transpose %135, [1, 0] : vector<128x1xf32> -> vector<1x128xf32>
    %141 = vector.broadcast %139 : vector<128x1xf32> to vector<128x128xf32>
    %142 = vector.broadcast %140 : vector<1x128xf32> to vector<128x128xf32>
    %143 = arith.addf %141, %142 : vector<128x128xf32>
    %cst_41 = arith.constant 0.000000e+00 : f32
    %144 = vector.broadcast %cst_41 : f32 to vector<128x128xf32>
    %145 = arith.cmpf ogt, %143, %144 : vector<128x128xf32>
    %cst_42 = arith.constant 2.000000e-01 : f32
    %146 = vector.broadcast %cst_42 : f32 to vector<128x128xf32>
    %147 = arith.mulf %146, %143 : vector<128x128xf32>
    %148 = arith.select %145, %143, %147 : vector<128x128xi1>, vector<128x128xf32>
    %cst_43 = arith.constant 0.000000e+00 : f32
    %149 = vector.broadcast %cst_43 : f32 to vector<128x128xf32>
    %150 = arith.cmpf ogt, %3, %149 : vector<128x128xf32>
    %cst_44 = arith.constant -1.000000e+30 : f32
    %151 = vector.broadcast %cst_44 : f32 to vector<128x128xf32>
    %152 = arith.select %150, %148, %151 : vector<128x128xi1>, vector<128x128xf32>
    %cst_45 = arith.constant dense<0xFF800000> : vector<128xf32>
    %153 = vector.multi_reduction <maximumf>, %152, %cst_45 [1] : vector<128x128xf32> to vector<128xf32>
    %154 = vector.shape_cast %153 : vector<128xf32> to vector<128x1xf32>
    %155 = vector.broadcast %154 : vector<128x1xf32> to vector<128x128xf32>
    %156 = arith.subf %152, %155 : vector<128x128xf32>
    %157 = math.exp %156 : vector<128x128xf32>
    %158 = arith.mulf %157, %3 : vector<128x128xf32>
    %cst_46 = arith.constant dense<0.000000e+00> : vector<128xf32>
    %159 = vector.multi_reduction <add>, %158, %cst_46 [1] : vector<128x128xf32> to vector<128xf32>
    %160 = vector.shape_cast %159 : vector<128xf32> to vector<128x1xf32>
    %cst_47 = arith.constant dense<0.000000e+00> : vector<128x16xf32>
    %161 = tpu.matmul %158, %128, %cst_47 {dimension_numbers = #tpu.dot_dimension_numbers<[1], [0], [0], [1], [0, 0, 1, 1], [], []>} : vector<128x128xf32>, vector<128x16xf32>, vector<128x16xf32> -> vector<128x16xf32>
    %cst_48 = arith.constant 1.000000e-16 : f32
    %162 = vector.broadcast %cst_48 : f32 to vector<128x1xf32>
    %163 = arith.addf %160, %162 : vector<128x1xf32>
    %164 = tpu.reciprocal %163 {approx = true} : vector<128x1xf32> -> vector<128x1xf32>
    %165 = vector.broadcast %164 : vector<128x1xf32> to vector<128x16xf32>
    %166 = arith.mulf %161, %165 : vector<128x16xf32>
    %167 = arith.addf %166, %129 : vector<128x16xf32>
    %168 = arith.addf %127, %167 : vector<128x16xf32>
    %cst_49 = arith.constant 2.500000e-01 : f32
    %169 = vector.broadcast %cst_49 : f32 to vector<128x16xf32>
    %170 = arith.mulf %168, %169 : vector<128x16xf32>
    %c0_50 = arith.constant 0 : index
    %c0_51 = arith.constant 0 : index
    %171 = vector.load %arg6[%c0_50, %c0_51] : memref<1x16xf32, #tpu.memory_space<vmem>>, vector<1x16xf32>
    %172 = vector.broadcast %171 : vector<1x16xf32> to vector<128x16xf32>
    %173 = arith.addf %170, %172 : vector<128x16xf32>
    %cst_52 = arith.constant 0.000000e+00 : f32
    %174 = vector.broadcast %cst_52 : f32 to vector<128x16xf32>
    %175 = arith.cmpf ogt, %173, %174 : vector<128x16xf32>
    %cst_53 = arith.constant 0.000000e+00 : f32
    %176 = vector.broadcast %cst_53 : f32 to vector<128x16xf32>
    %177 = arith.minimumf %173, %176 : vector<128x16xf32>
    %178 = math.exp %177 : vector<128x16xf32>
    %cst_54 = arith.constant 1.000000e+00 : f32
    %179 = vector.broadcast %cst_54 : f32 to vector<128x16xf32>
    %180 = arith.subf %178, %179 : vector<128x16xf32>
    %181 = arith.select %175, %173, %180 : vector<128x16xi1>, vector<128x16xf32>
    %c0_55 = arith.constant 0 : index
    %c0_56 = arith.constant 0 : index
    %182 = vector.load %arg7[%c0_55, %c0_56] : memref<128x16xf32, #tpu.memory_space<vmem>>, vector<128x16xf32>
    tpu.vector_store %arg7[%c0_55, %c0_56], %181 {strides = array<i32>} : memref<128x16xf32, #tpu.memory_space<vmem>>, vector<128x16xf32>,
    return
  }
  func.func @transform_0(%arg0: i32) -> (i32, i32) {
    %c0_i32 = arith.constant 0 : i32
    %c0_i32_0 = arith.constant 0 : i32
    %c0_i32_1 = arith.constant 0 : i32
    return %c0_i32, %c0_i32_0 : i32, i32
  }
  func.func @transform_1(%arg0: i32) -> (i32, i32) {
    %c0_i32 = arith.constant 0 : i32
    %c0_i32_0 = arith.constant 0 : i32
    %c0_i32_1 = arith.constant 0 : i32
    return %c0_i32, %c0_i32_0 : i32, i32
  }
  func.func @transform_2(%arg0: i32) -> (i32, i32) {
    %c0_i32 = arith.constant 0 : i32
    %c0_i32_0 = arith.constant 0 : i32
    %c0_i32_1 = arith.constant 0 : i32
    return %c0_i32, %c0_i32_0 : i32, i32
  }
  func.func @transform_3(%arg0: i32) -> (i32, i32) {
    %c0_i32 = arith.constant 0 : i32
    %c0_i32_0 = arith.constant 0 : i32
    %c0_i32_1 = arith.constant 0 : i32
    return %c0_i32, %c0_i32_0 : i32, i32
  }
  func.func @transform_4(%arg0: i32) -> (i32, i32) {
    %c0_i32 = arith.constant 0 : i32
    %c0_i32_0 = arith.constant 0 : i32
    %c0_i32_1 = arith.constant 0 : i32
    return %c0_i32, %c0_i32_0 : i32, i32
  }
  func.func @transform_5(%arg0: i32) -> (i32, i32) {
    %c0_i32 = arith.constant 0 : i32
    %c0_i32_0 = arith.constant 0 : i32
    %c0_i32_1 = arith.constant 0 : i32
    return %c0_i32, %c0_i32_0 : i32, i32
  }
  func.func @transform_6(%arg0: i32) -> (i32, i32) {
    %c0_i32 = arith.constant 0 : i32
    %c0_i32_0 = arith.constant 0 : i32
    %c0_i32_1 = arith.constant 0 : i32
    return %c0_i32, %c0_i32_0 : i32, i32
  }
}

module attributes {stable_mosaic.version = 11 : i64} {
  func.func @_head_fc_kernel(%arg0: i32, %arg1: memref<32x16xf32, #tpu.memory_space<vmem>>, %arg2: memref<32x16xf32, #tpu.memory_space<vmem>>, %arg3: memref<32x1xf32, #tpu.memory_space<vmem>>, %arg4: memref<32x10xf32, #tpu.memory_space<vmem>>, %arg5: memref<1x10xf32, #tpu.memory_space<vmem>>, %arg6: memref<1x10xf32, #tpu.memory_space<vmem>>, %arg7: memref<1x10xf32, #tpu.memory_space<vmem>>, %arg8: memref<1x20xf32, #tpu.memory_space<vmem>>, %arg9: memref<1x1xf32, #tpu.memory_space<vmem>>, %arg10: memref<32x1xf32, #tpu.memory_space<vmem>>) attributes {dimension_semantics = [#tpu.dimension_semantics<arbitrary>], iteration_bounds = array<i64: 1>, scalar_prefetch = 0 : i64, scratch_operands = 0 : i64, tpu.core_type = #tpu.core_type<tc>, window_params = [{pipeline_mode = #tpu.pipeline_mode<synchronous>, transform_indices = @transform_0, window_bounds = array<i64: 32, 16>}, {pipeline_mode = #tpu.pipeline_mode<synchronous>, transform_indices = @transform_1, window_bounds = array<i64: 32, 16>}, {pipeline_mode = #tpu.pipeline_mode<synchronous>, transform_indices = @transform_2, window_bounds = array<i64: 32, 1>}, {pipeline_mode = #tpu.pipeline_mode<synchronous>, transform_indices = @transform_3, window_bounds = array<i64: 32, 10>}, {pipeline_mode = #tpu.pipeline_mode<synchronous>, transform_indices = @transform_4, window_bounds = array<i64: 1, 10>}, {pipeline_mode = #tpu.pipeline_mode<synchronous>, transform_indices = @transform_5, window_bounds = array<i64: 1, 10>}, {pipeline_mode = #tpu.pipeline_mode<synchronous>, transform_indices = @transform_6, window_bounds = array<i64: 1, 10>}, {pipeline_mode = #tpu.pipeline_mode<synchronous>, transform_indices = @transform_7, window_bounds = array<i64: 1, 20>}, {pipeline_mode = #tpu.pipeline_mode<synchronous>, transform_indices = @transform_8, window_bounds = array<i64: 1, 1>}, {pipeline_mode = #tpu.pipeline_mode<synchronous>, transform_indices = @transform_9, window_bounds = array<i64: 32, 1>}]} {
    %c0 = arith.constant 0 : index
    %c0_0 = arith.constant 0 : index
    %0 = vector.load %arg1[%c0, %c0_0] : memref<32x16xf32, #tpu.memory_space<vmem>>, vector<32x16xf32>
    %c0_1 = arith.constant 0 : index
    %c0_2 = arith.constant 0 : index
    %1 = vector.load %arg2[%c0_1, %c0_2] : memref<32x16xf32, #tpu.memory_space<vmem>>, vector<32x16xf32>
    %c0_3 = arith.constant 0 : index
    %c0_4 = arith.constant 0 : index
    %2 = vector.load %arg4[%c0_3, %c0_4] : memref<32x10xf32, #tpu.memory_space<vmem>>, vector<32x10xf32>
    %3 = vector.extract_strided_slice %2 {offsets = [0, 0], sizes = [16, 10], strides = [1, 1]} : vector<32x10xf32> to vector<16x10xf32>
    %cst = arith.constant dense<0.000000e+00> : vector<32x10xf32>
    %4 = tpu.matmul %0, %3, %cst {dimension_numbers = #tpu.dot_dimension_numbers<[1], [0], [0], [1], [0, 0, 1, 1], [], []>} : vector<32x16xf32>, vector<16x10xf32>, vector<32x10xf32> -> vector<32x10xf32>
    %5 = vector.extract_strided_slice %2 {offsets = [16, 0], sizes = [16, 10], strides = [1, 1]} : vector<32x10xf32> to vector<16x10xf32>
    %cst_5 = arith.constant dense<0.000000e+00> : vector<32x10xf32>
    %6 = tpu.matmul %1, %5, %cst_5 {dimension_numbers = #tpu.dot_dimension_numbers<[1], [0], [0], [1], [0, 0, 1, 1], [], []>} : vector<32x16xf32>, vector<16x10xf32>, vector<32x10xf32> -> vector<32x10xf32>
    %7 = arith.addf %4, %6 : vector<32x10xf32>
    %c0_6 = arith.constant 0 : index
    %c0_7 = arith.constant 0 : index
    %8 = vector.load %arg5[%c0_6, %c0_7] : memref<1x10xf32, #tpu.memory_space<vmem>>, vector<1x10xf32>
    %9 = vector.broadcast %8 : vector<1x10xf32> to vector<32x10xf32>
    %10 = arith.addf %7, %9 : vector<32x10xf32>
    %cst_8 = arith.constant 0.000000e+00 : f32
    %11 = vector.broadcast %cst_8 : f32 to vector<32x10xf32>
    %12 = arith.maximumf %10, %11 : vector<32x10xf32>
    %c0_9 = arith.constant 0 : index
    %c0_10 = arith.constant 0 : index
    %13 = vector.load %arg3[%c0_9, %c0_10] : memref<32x1xf32, #tpu.memory_space<vmem>>, vector<32x1xf32>
    %c0_11 = arith.constant 0 : index
    %c0_12 = arith.constant 0 : index
    %14 = vector.load %arg6[%c0_11, %c0_12] : memref<1x10xf32, #tpu.memory_space<vmem>>, vector<1x10xf32>
    %15 = vector.broadcast %13 : vector<32x1xf32> to vector<32x10xf32>
    %16 = vector.broadcast %14 : vector<1x10xf32> to vector<32x10xf32>
    %17 = arith.mulf %15, %16 : vector<32x10xf32>
    %c0_13 = arith.constant 0 : index
    %c0_14 = arith.constant 0 : index
    %18 = vector.load %arg7[%c0_13, %c0_14] : memref<1x10xf32, #tpu.memory_space<vmem>>, vector<1x10xf32>
    %19 = vector.broadcast %18 : vector<1x10xf32> to vector<32x10xf32>
    %20 = arith.addf %17, %19 : vector<32x10xf32>
    %cst_15 = arith.constant 0.000000e+00 : f32
    %21 = vector.broadcast %cst_15 : f32 to vector<32x10xf32>
    %22 = arith.maximumf %20, %21 : vector<32x10xf32>
    %c0_16 = arith.constant 0 : index
    %c0_17 = arith.constant 0 : index
    %23 = vector.load %arg8[%c0_16, %c0_17] : memref<1x20xf32, #tpu.memory_space<vmem>>, vector<1x20xf32>
    %24 = vector.extract_strided_slice %23 {offsets = [0, 0], sizes = [1, 10], strides = [1, 1]} : vector<1x20xf32> to vector<1x10xf32>
    %25 = vector.broadcast %24 : vector<1x10xf32> to vector<32x10xf32>
    %26 = arith.mulf %12, %25 : vector<32x10xf32>
    %cst_18 = arith.constant dense<0.000000e+00> : vector<32xf32>
    %27 = vector.multi_reduction <add>, %26, %cst_18 [1] : vector<32x10xf32> to vector<32xf32>
    %28 = vector.shape_cast %27 : vector<32xf32> to vector<32x1xf32>
    %29 = vector.extract_strided_slice %23 {offsets = [0, 10], sizes = [1, 10], strides = [1, 1]} : vector<1x20xf32> to vector<1x10xf32>
    %30 = vector.broadcast %29 : vector<1x10xf32> to vector<32x10xf32>
    %31 = arith.mulf %22, %30 : vector<32x10xf32>
    %cst_19 = arith.constant dense<0.000000e+00> : vector<32xf32>
    %32 = vector.multi_reduction <add>, %31, %cst_19 [1] : vector<32x10xf32> to vector<32xf32>
    %33 = vector.shape_cast %32 : vector<32xf32> to vector<32x1xf32>
    %34 = arith.addf %28, %33 : vector<32x1xf32>
    %c0_20 = arith.constant 0 : index
    %c0_21 = arith.constant 0 : index
    %35 = vector.load %arg9[%c0_20, %c0_21] : memref<1x1xf32, #tpu.memory_space<vmem>>, vector<1x1xf32>
    %36 = vector.broadcast %35 : vector<1x1xf32> to vector<32x1xf32>
    %37 = arith.addf %34, %36 : vector<32x1xf32>
    %c0_22 = arith.constant 0 : index
    %c0_23 = arith.constant 0 : index
    %38 = vector.load %arg10[%c0_22, %c0_23] : memref<32x1xf32, #tpu.memory_space<vmem>>, vector<32x1xf32>
    tpu.vector_store %arg10[%c0_22, %c0_23], %37 {strides = array<i32>} : memref<32x1xf32, #tpu.memory_space<vmem>>, vector<32x1xf32>,
    return
  }
  func.func @transform_0(%arg0: i32) -> (i32, i32) {
    %c0_i32 = arith.constant 0 : i32
    %c0_i32_0 = arith.constant 0 : i32
    %c0_i32_1 = arith.constant 0 : i32
    return %c0_i32, %c0_i32_0 : i32, i32
  }
  func.func @transform_1(%arg0: i32) -> (i32, i32) {
    %c0_i32 = arith.constant 0 : i32
    %c0_i32_0 = arith.constant 0 : i32
    %c0_i32_1 = arith.constant 0 : i32
    return %c0_i32, %c0_i32_0 : i32, i32
  }
  func.func @transform_2(%arg0: i32) -> (i32, i32) {
    %c0_i32 = arith.constant 0 : i32
    %c0_i32_0 = arith.constant 0 : i32
    %c0_i32_1 = arith.constant 0 : i32
    return %c0_i32, %c0_i32_0 : i32, i32
  }
  func.func @transform_3(%arg0: i32) -> (i32, i32) {
    %c0_i32 = arith.constant 0 : i32
    %c0_i32_0 = arith.constant 0 : i32
    %c0_i32_1 = arith.constant 0 : i32
    return %c0_i32, %c0_i32_0 : i32, i32
  }
  func.func @transform_4(%arg0: i32) -> (i32, i32) {
    %c0_i32 = arith.constant 0 : i32
    %c0_i32_0 = arith.constant 0 : i32
    %c0_i32_1 = arith.constant 0 : i32
    return %c0_i32, %c0_i32_0 : i32, i32
  }
  func.func @transform_5(%arg0: i32) -> (i32, i32) {
    %c0_i32 = arith.constant 0 : i32
    %c0_i32_0 = arith.constant 0 : i32
    %c0_i32_1 = arith.constant 0 : i32
    return %c0_i32, %c0_i32_0 : i32, i32
  }
  func.func @transform_6(%arg0: i32) -> (i32, i32) {
    %c0_i32 = arith.constant 0 : i32
    %c0_i32_0 = arith.constant 0 : i32
    %c0_i32_1 = arith.constant 0 : i32
    return %c0_i32, %c0_i32_0 : i32, i32
  }
  func.func @transform_7(%arg0: i32) -> (i32, i32) {
    %c0_i32 = arith.constant 0 : i32
    %c0_i32_0 = arith.constant 0 : i32
    %c0_i32_1 = arith.constant 0 : i32
    return %c0_i32, %c0_i32_0 : i32, i32
  }
  func.func @transform_8(%arg0: i32) -> (i32, i32) {
    %c0_i32 = arith.constant 0 : i32
    %c0_i32_0 = arith.constant 0 : i32
    %c0_i32_1 = arith.constant 0 : i32
    return %c0_i32, %c0_i32_0 : i32, i32
  }
  func.func @transform_9(%arg0: i32) -> (i32, i32) {
    %c0_i32 = arith.constant 0 : i32
    %c0_i32_0 = arith.constant 0 : i32
    %c0_i32_1 = arith.constant 0 : i32
    return %c0_i32, %c0_i32_0 : i32, i32
  }
}

</mosaic_0001>

<llo_original>
// kernel: distance_gat_fc_forward.3
$region0: #{distance_gat_fc_forward.3}
  #allocation0 [shape = 'u32[]', space=smem, size = 0x4, offset = 0x4, fixed_abs, tag = 'smem constant byte address 0x4 - core index']
  #allocation1 [shape = 'u32[144,128]{1,0:T(1,128)}', space=vmem, size = 0x12000, scoped, tag = 'internal scratch']
  #allocation2 [shape = 'f32[1,1]{1,0:T(1,128)S(1)}', space=vmem, size = 0x200, scoped, tag = 'scoped memory for distance_gat_fc_forward.3']
  %s0 = inlined_call_operand.vmem [shape: f32[32,16], index: 0, kind: input, shape index: {}]
  %s1 = inlined_call_operand.vmem [shape: f32[32,16], index: 1, kind: input, shape index: {}]
  %s2 = inlined_call_operand.vmem [shape: f32[32,1], index: 2, kind: input, shape index: {}]
  %s3 = inlined_call_operand.vmem [shape: f32[32,10], index: 3, kind: input, shape index: {}]
  %s4 = inlined_call_operand.vmem [shape: f32[1,10], index: 4, kind: input, shape index: {}]
  %s5 = inlined_call_operand.vmem [shape: f32[1,10], index: 5, kind: input, shape index: {}]
  %s6 = inlined_call_operand.vmem [shape: f32[1,10], index: 6, kind: input, shape index: {}]
  %s7 = inlined_call_operand.vmem [shape: f32[1,20], index: 7, kind: input, shape index: {}]
  %s8 = inlined_call_operand.<no memory space> [shape: f32[1,1], index: 8, kind: input, shape index: {}]
  %s9 = inlined_call_operand.vmem [shape: f32[32,1], index: 9, kind: output, shape index: {}]
  %s10 = sld [smem:[#allocation0]]
  $region46: #{distance_gat_fc_forward.3} parent=0
    _
  %s12 = ssub.s32 1, %s10
  %s13 = scalar_select 0, %s12, %s10
  %v14 = vstv %s8
  %15 = vst [vmem:[#allocation2] sm:$0x1] %v14
  // Predicated region
  $region2: #{distance_gat_fc_forward.3} parent=0 // pred_check
    _
  $region3: #{distance_gat_fc_forward.3} parent=0 // pred_check_branch
    %17 = sbr.rel (0) target = $region5
  $region4: #{distance_gat_fc_forward.3} parent=0 // pred_region
    _
  $region5: #{distance_gat_fc_forward.3} parent=0 // pred_fallthru
    _
  // Predicated region
  $region6: #{distance_gat_fc_forward.3} parent=0 // pred_check
    _
  $region7: #{distance_gat_fc_forward.3} parent=0 // pred_check_branch
    %19 = sbr.rel (0) target = $region9
  $region8: #{distance_gat_fc_forward.3} parent=0 // pred_region
    _
  $region9: #{distance_gat_fc_forward.3} parent=0 // pred_fallthru
    _
  // Predicated region
  $region10: #{distance_gat_fc_forward.3} parent=0 // pred_check
    _
  $region11: #{distance_gat_fc_forward.3} parent=0 // pred_check_branch
    %21 = sbr.rel (0) target = $region13
  $region12: #{distance_gat_fc_forward.3} parent=0 // pred_region
    _
  $region13: #{distance_gat_fc_forward.3} parent=0 // pred_fallthru
    _
  // Predicated region
  $region14: #{distance_gat_fc_forward.3} parent=0 // pred_check
    _
  $region15: #{distance_gat_fc_forward.3} parent=0 // pred_check_branch
    %23 = sbr.rel (0) target = $region17
  $region16: #{distance_gat_fc_forward.3} parent=0 // pred_region
    _
  $region17: #{distance_gat_fc_forward.3} parent=0 // pred_fallthru
    _
  // Predicated region
  $region18: #{distance_gat_fc_forward.3} parent=0 // pred_check
    _
  $region19: #{distance_gat_fc_forward.3} parent=0 // pred_check_branch
    %25 = sbr.rel (0) target = $region21
  $region20: #{distance_gat_fc_forward.3} parent=0 // pred_region
    _
  $region21: #{distance_gat_fc_forward.3} parent=0 // pred_fallthru
    _
  // Predicated region
  $region22: #{distance_gat_fc_forward.3} parent=0 // pred_check
    _
  $region23: #{distance_gat_fc_forward.3} parent=0 // pred_check_branch
    %27 = sbr.rel (0) target = $region25
  $region24: #{distance_gat_fc_forward.3} parent=0 // pred_region
    _
  $region25: #{distance_gat_fc_forward.3} parent=0 // pred_fallthru
    _
  // Predicated region
  $region26: #{distance_gat_fc_forward.3} parent=0 // pred_check
    _
  $region27: #{distance_gat_fc_forward.3} parent=0 // pred_check_branch
    %29 = sbr.rel (0) target = $region29
  $region28: #{distance_gat_fc_forward.3} parent=0 // pred_region
    _
  $region29: #{distance_gat_fc_forward.3} parent=0 // pred_fallthru
    _
  // Predicated region
  $region30: #{distance_gat_fc_forward.3} parent=0 // pred_check
    _
  $region31: #{distance_gat_fc_forward.3} parent=0 // pred_check_branch
    %31 = sbr.rel (0) target = $region33
  $region32: #{distance_gat_fc_forward.3} parent=0 // pred_region
    _
  $region33: #{distance_gat_fc_forward.3} parent=0 // pred_fallthru
    _
  // Predicated region
  $region34: #{distance_gat_fc_forward.3} parent=0 // pred_check
    _
  $region35: #{distance_gat_fc_forward.3} parent=0 // pred_check_branch
    %33 = sbr.rel (0) target = $region37
  $region36: #{distance_gat_fc_forward.3} parent=0 // pred_region
    _
  $region37: #{distance_gat_fc_forward.3} parent=0 // pred_fallthru
    _
  %v34 = vld [vmem:[%s0] sm:$0xff]
  %v35 = vld [vmem:[%s0 + $0x8] sm:$0xff]
  %v36 = vld [vmem:[%s0 + $0x10] sm:$0xff]
  %v37 = vld [vmem:[%s0 + $0x18] sm:$0xff]
  %v38 = vld [vmem:[%s1] sm:$0xff]
  %v39 = vld [vmem:[%s1 + $0x8] sm:$0xff]
  %v40 = vld [vmem:[%s1 + $0x10] sm:$0xff]
  %v41 = vld [vmem:[%s1 + $0x18] sm:$0xff]
  %v42 = vld [vmem:[%s3] sm:$0xff]
  %v43 = vld [vmem:[%s3 + $0x8] sm:$0xff]
  %v44 = vld [vmem:[%s3 + $0x10] sm:$0xff]
  %v45 = vld [vmem:[%s3 + $0x18] sm:$0xff]
  %vm46 = vcmask 130048
  %v48 = vsel %vm46, %v38, 0
  %v51 = vsel %vm46, %v39, 0
  %v54 = vsel %vm46, %v40, 0
  %v57 = vsel %vm46, %v41, 0
  %59 = vmatprep.subr.mxu0 0.0
  %60 = vmatpush1.msra.mxu0 0.0
  %61 = vmatprep.subr.mxu0 0.0
  %62 = vmatpush1.msra.mxu0 0.0
  %63 = vmatprep.subr.mxu0 0.0
  %64 = vmatpush1.msra.mxu0 0.0
  %65 = vmatprep.subr.mxu0 0.0
  %66 = vmatpush1.msra.mxu0 0.0
  %67 = vmatprep.subr.mxu0 0.0
  %68 = vmatpush1.msra.mxu0 0.0
  %69 = vmatprep.subr.mxu0 0.0
  %70 = vmatpush1.msra.mxu0 0.0
  %71 = vmatprep.subr.mxu0 0.0
  %72 = vmatpush1.msra.mxu0 0.0
  %73 = vmatprep.subr.mxu0 0.0
  %74 = vmatpush1.msra.mxu0 0.0
  %75 = vmatprep.subr.mxu0 0.0
  %76 = vmatpush1.msra.mxu0 0.0
  %77 = vmatprep.subr.mxu0 0.0
  %78 = vmatpush1.msra.mxu0 0.0
  %79 = vmatprep.subr.mxu0 0.0
  %80 = vmatpush1.msra.mxu0 0.0
  %81 = vmatprep.subr.mxu0 0.0
  %82 = vmatpush1.msra.mxu0 0.0
  %83 = vmatprep.subr.mxu0 0.0
  %84 = vmatpush1.msra.mxu0 0.0
  %85 = vmatprep.subr.mxu0 0.0
  %86 = vmatpush1.msra.mxu0 0.0
  %87 = vmatprep.subr.mxu0 0.0
  %88 = vmatpush1.msra.mxu0 %v45
  %89 = vmatprep.subr.mxu0 0.0
  %90 = vmatpush1.msra.mxu0 %v44
  %91 = vmatprep.subr.mxu0 0.0
  %92 = vmatpush2.msra.mxu0 0.0
  %93 = vmatprep.subr.mxu0 0.0
  %94 = vmatpush2.msra.mxu0 0.0
  %95 = vmatprep.subr.mxu0 0.0
  %96 = vmatpush2.msra.mxu0 0.0
  %97 = vmatprep.subr.mxu0 0.0
  %98 = vmatpush2.msra.mxu0 0.0
  %99 = vmatprep.subr.mxu0 0.0
  %100 = vmatpush2.msra.mxu0 0.0
  %101 = vmatprep.subr.mxu0 0.0
  %102 = vmatpush2.msra.mxu0 0.0
  %103 = vmatprep.subr.mxu0 0.0
  %104 = vmatpush2.msra.mxu0 0.0
  %105 = vmatprep.subr.mxu0 0.0
  %106 = vmatpush2.msra.mxu0 0.0
  %107 = vmatprep.subr.mxu0 0.0
  %108 = vmatpush2.msra.mxu0 0.0
  %109 = vmatprep.subr.mxu0 0.0
  %110 = vmatpush2.msra.mxu0 0.0
  %111 = vmatprep.subr.mxu0 0.0
  %112 = vmatpush2.msra.mxu0 0.0
  %113 = vmatprep.subr.mxu0 0.0
  %114 = vmatpush2.msra.mxu0 0.0
  %115 = vmatprep.subr.mxu0 0.0
  %116 = vmatpush2.msra.mxu0 0.0
  %117 = vmatprep.subr.mxu0 0.0
  %118 = vmatpush2.msra.mxu0 0.0
  %119 = vmatprep.subr.mxu0 0.0
  %120 = vmatpush2.msra.mxu0 0.0
  %121 = vmatprep.subr.mxu0 0.0
  %122 = vmatpush2.msra.mxu0 0.0
  %123 = vmatprep.mubr.f32.mxu0 0.0
  %124 = vmatmul.mubr.f32.gmra.mxu0 %v48
  %v125 = vpop.f32.mrf.mxu0
  %v126 = vadd.f32 0.0, %v125
  %v127 = vpop.f32.mrf.mxu0
  %128 = vmatprep.mubr.f32.mxu0 0.0
  %129 = vmatmul.mubr.f32.gmra.mxu0 %v51
  %v130 = vpop.f32.mrf.mxu0
  %v131 = vadd.f32 0.0, %v130
  %v132 = vpop.f32.mrf.mxu0
  %133 = vmatprep.mubr.f32.mxu0 0.0
  %134 = vmatmul.mubr.f32.gmra.mxu0 %v54
  %v135 = vpop.f32.mrf.mxu0
  %v136 = vadd.f32 0.0, %v135
  %v137 = vpop.f32.mrf.mxu0
  %138 = vmatprep.mubr.f32.mxu0 0.0
  %139 = vmatmul.mubr.f32.gmra.mxu0 %v57
  %v140 = vpop.f32.mrf.mxu0
  %v141 = vadd.f32 0.0, %v140
  %v142 = vpop.f32.mrf.mxu0
  %143 = vdwg.mxu0
  %v145 = vsel %vm46, %v34, 0
  %v148 = vsel %vm46, %v35, 0
  %v151 = vsel %vm46, %v36, 0
  %v154 = vsel %vm46, %v37, 0
  %156 = vmatprep.subr.mxu0 0.0
  %157 = vmatpush1.msra.mxu0 0.0
  %158 = vmatprep.subr.mxu0 0.0
  %159 = vmatpush1.msra.mxu0 0.0
  %160 = vmatprep.subr.mxu0 0.0
  %161 = vmatpush1.msra.mxu0 0.0
  %162 = vmatprep.subr.mxu0 0.0
  %163 = vmatpush1.msra.mxu0 0.0
  %164 = vmatprep.subr.mxu0 0.0
  %165 = vmatpush1.msra.mxu0 0.0
  %166 = vmatprep.subr.mxu0 0.0
  %167 = vmatpush1.msra.mxu0 0.0
  %168 = vmatprep.subr.mxu0 0.0
  %169 = vmatpush1.msra.mxu0 0.0
  %170 = vmatprep.subr.mxu0 0.0
  %171 = vmatpush1.msra.mxu0 0.0
  %172 = vmatprep.subr.mxu0 0.0
  %173 = vmatpush1.msra.mxu0 0.0
  %174 = vmatprep.subr.mxu0 0.0
  %175 = vmatpush1.msra.mxu0 0.0
  %176 = vmatprep.subr.mxu0 0.0
  %177 = vmatpush1.msra.mxu0 0.0
  %178 = vmatprep.subr.mxu0 0.0
  %179 = vmatpush1.msra.mxu0 0.0
  %180 = vmatprep.subr.mxu0 0.0
  %181 = vmatpush1.msra.mxu0 0.0
  %182 = vmatprep.subr.mxu0 0.0
  %183 = vmatpush1.msra.mxu0 0.0
  %184 = vmatprep.subr.mxu0 0.0
  %185 = vmatpush1.msra.mxu0 %v43
  %186 = vmatprep.subr.mxu0 0.0
  %187 = vmatpush1.msra.mxu0 %v42
  %188 = vmatprep.subr.mxu0 0.0
  %189 = vmatpush2.msra.mxu0 0.0
  %190 = vmatprep.subr.mxu0 0.0
  %191 = vmatpush2.msra.mxu0 0.0
  %192 = vmatprep.subr.mxu0 0.0
  %193 = vmatpush2.msra.mxu0 0.0
  %194 = vmatprep.subr.mxu0 0.0
  %195 = vmatpush2.msra.mxu0 0.0
  %196 = vmatprep.subr.mxu0 0.0
  %197 = vmatpush2.msra.mxu0 0.0
  %198 = vmatprep.subr.mxu0 0.0
  %199 = vmatpush2.msra.mxu0 0.0
  %200 = vmatprep.subr.mxu0 0.0
  %201 = vmatpush2.msra.mxu0 0.0
  %202 = vmatprep.subr.mxu0 0.0
  %203 = vmatpush2.msra.mxu0 0.0
  %204 = vmatprep.subr.mxu0 0.0
  %205 = vmatpush2.msra.mxu0 0.0
  %206 = vmatprep.subr.mxu0 0.0
  %207 = vmatpush2.msra.mxu0 0.0
  %208 = vmatprep.subr.mxu0 0.0
  %209 = vmatpush2.msra.mxu0 0.0
  %210 = vmatprep.subr.mxu0 0.0
  %211 = vmatpush2.msra.mxu0 0.0
  %212 = vmatprep.subr.mxu0 0.0
  %213 = vmatpush2.msra.mxu0 0.0
  %214 = vmatprep.subr.mxu0 0.0
  %215 = vmatpush2.msra.mxu0 0.0
  %216 = vmatprep.subr.mxu0 0.0
  %217 = vmatpush2.msra.mxu0 0.0
  %218 = vmatprep.subr.mxu0 0.0
  %219 = vmatpush2.msra.mxu0 0.0
  %220 = vmatprep.mubr.f32.mxu0 0.0
  %221 = vmatmul.mubr.f32.gmra.mxu0 %v145
  %v222 = vpop.f32.mrf.mxu0
  %v223 = vadd.f32 %v126, %v222
  %v224 = vpop.f32.mrf.mxu0
  %225 = vmatprep.mubr.f32.mxu0 0.0
  %226 = vmatmul.mubr.f32.gmra.mxu0 %v148
  %v227 = vpop.f32.mrf.mxu0
  %v228 = vadd.f32 %v131, %v227
  %v229 = vpop.f32.mrf.mxu0
  %230 = vmatprep.mubr.f32.mxu0 0.0
  %231 = vmatmul.mubr.f32.gmra.mxu0 %v151
  %v232 = vpop.f32.mrf.mxu0
  %v233 = vadd.f32 %v136, %v232
  %v234 = vpop.f32.mrf.mxu0
  %235 = vmatprep.mubr.f32.mxu0 0.0
  %236 = vmatmul.mubr.f32.gmra.mxu0 %v154
  %v237 = vpop.f32.mrf.mxu0
  %v238 = vadd.f32 %v141, %v237
  %v239 = vpop.f32.mrf.mxu0
  %240 = vdwg.mxu0
  %v241 = vld [vmem:[%s4] sm:$0x1]
  %v243 = vlaneseq
  %v244 = vshrl.u32 %v243, 7
  %v245 = vsub.s32 0, %v244
  %v246 = vrot.slane %v241, %v245
  %v248 = vadd.f32 %v223, %v246
  %v249 = vadd.f32 %v228, %v246
  %v250 = vadd.f32 %v233, %v246
  %v251 = vadd.f32 %v238, %v246
  %v252 = vmax.f32 %v248, 0.0
  %v253 = vmax.f32 %v249, 0.0
  %v254 = vmax.f32 %v250, 0.0
  %v255 = vmax.f32 %v251, 0.0
  %v256 = vld [vmem:[%s2] sm:$0xff]
  %v257 = vld [vmem:[%s2 + $0x8] sm:$0xff]
  %v258 = vld [vmem:[%s2 + $0x10] sm:$0xff]
  %v259 = vld [vmem:[%s2 + $0x18] sm:$0xff]
  %v260 = vld [vmem:[%s5] sm:$0x1]
  %262 = vset.pattern.permute.xlu0 0
  %263 = vperm.xlu0 %262, %v256
  %v264 = vpop.permute.xlu0 %263
  %267 = vset.pattern.permute.xlu0 0
  %268 = vperm.xlu0 %267, %v257
  %v269 = vpop.permute.xlu0 %268
  %272 = vset.pattern.permute.xlu0 0
  %273 = vperm.xlu0 %272, %v258
  %v274 = vpop.permute.xlu0 %273
  %277 = vset.pattern.permute.xlu0 0
  %278 = vperm.xlu0 %277, %v259
  %v279 = vpop.permute.xlu0 %278
  %v282 = vlaneseq
  %v283 = vshrl.u32 %v282, 7
  %v284 = vsub.s32 0, %v283
  %v285 = vrot.slane %v260, %v284
  %v287 = vmul.f32 %v264, %v285
  %v288 = vmul.f32 %v269, %v285
  %v289 = vmul.f32 %v274, %v285
  %v290 = vmul.f32 %v279, %v285
  %v291 = vld [vmem:[%s6] sm:$0x1]
  %v293 = vlaneseq
  %v294 = vshrl.u32 %v293, 7
  %v295 = vsub.s32 0, %v294
  %v296 = vrot.slane %v291, %v295
  %v298 = vadd.f32 %v287, %v296
  %v299 = vadd.f32 %v288, %v296
  %v300 = vadd.f32 %v289, %v296
  %v301 = vadd.f32 %v290, %v296
  %v302 = vmax.f32 %v298, 0.0
  %v303 = vmax.f32 %v299, 0.0
  %v304 = vmax.f32 %v300, 0.0
  %v305 = vmax.f32 %v301, 0.0
  %v306 = vld [vmem:[%s7] sm:$0x1]
  %v308 = vlaneseq
  %v309 = vshrl.u32 %v308, 7
  %v310 = vsub.s32 0, %v309
  %v311 = vrot.slane %v306, %v310
  %v313 = vmul.f32 %v252, %v311
  %v314 = vmul.f32 %v253, %v311
  %v315 = vmul.f32 %v254, %v311
  %v316 = vmul.f32 %v255, %v311
  %vm317 = vcmask 80896
  %v318 = vsel %vm317, %v313, 0.0
  %319 = vadd.xlane.f32.xlu0 %v318
  %v320 = vpop.xlane.xlu0 %319
  %v321 = vsel %vm317, %v314, 0.0
  %322 = vadd.xlane.f32.xlu0 %v321
  %v323 = vpop.xlane.xlu0 %322
  %v324 = vsel %vm317, %v315, 0.0
  %325 = vadd.xlane.f32.xlu0 %v324
  %v326 = vpop.xlane.xlu0 %325
  %v327 = vsel %vm317, %v316, 0.0
  %328 = vadd.xlane.f32.xlu0 %v327
  %v329 = vpop.xlane.xlu0 %328
  %330 = vrot.lane.b32.xlu0 %v311, 118
  %v331 = vpop.permute.xlu0 %330
  %v333 = vmul.f32 %v302, %v331
  %v334 = vmul.f32 %v303, %v331
  %v335 = vmul.f32 %v304, %v331
  %v336 = vmul.f32 %v305, %v331
  %v337 = vsel %vm317, %v333, 0.0
  %338 = vadd.xlane.f32.xlu0 %v337
  %v339 = vpop.xlane.xlu0 %338
  %v340 = vsel %vm317, %v334, 0.0
  %341 = vadd.xlane.f32.xlu0 %v340
  %v342 = vpop.xlane.xlu0 %341
  %v343 = vsel %vm317, %v335, 0.0
  %344 = vadd.xlane.f32.xlu0 %v343
  %v345 = vpop.xlane.xlu0 %344
  %v346 = vsel %vm317, %v336, 0.0
  %347 = vadd.xlane.f32.xlu0 %v346
  %v348 = vpop.xlane.xlu0 %347
  %v349 = vadd.f32 %v320, %v339
  %v350 = vadd.f32 %v323, %v342
  %v351 = vadd.f32 %v326, %v345
  %v352 = vadd.f32 %v329, %v348
  %v353 = vld [vmem:[#allocation2] sm:$0x1]
  %v355 = vlaneseq
  %v356 = vshrl.u32 %v355, 7
  %v357 = vsub.s32 0, %v356
  %v358 = vrot.slane %v353, %v357
  %v360 = vadd.f32 %v349, %v358
  %v361 = vadd.f32 %v350, %v358
  %v362 = vadd.f32 %v351, %v358
  %v363 = vadd.f32 %v352, %v358
  %vm364 = vcmask 7168
  %365 = vst.msk [vmem:[%s9] sm:$0xff] %vm364, %v360
  %366 = vst.msk [vmem:[%s9 + $0x8] sm:$0xff] %vm364, %v361
  %367 = vst.msk [vmem:[%s9 + $0x10] sm:$0xff] %vm364, %v362
  %368 = vst.msk [vmem:[%s9 + $0x18] sm:$0xff] %vm364, %v363
  // Predicated region
  $region38: #{distance_gat_fc_forward.3} parent=0 // pred_check
    _
  $region39: #{distance_gat_fc_forward.3} parent=0 // pred_check_branch
    %370 = sbr.rel (0) target = $region41
  $region40: #{distance_gat_fc_forward.3} parent=0 // pred_region
    _
  $region41: #{distance_gat_fc_forward.3} parent=0 // pred_fallthru
    _
  // Predicated region
  $region42: #{distance_gat_fc_forward.3} parent=0 // pred_check
    _
  $region43: #{distance_gat_fc_forward.3} parent=0 // pred_check_branch
    %372 = sbr.rel (0) target = $region45
  $region44: #{distance_gat_fc_forward.3} parent=0 // pred_region
    _
  $region45: #{distance_gat_fc_forward.3} parent=0 // pred_fallthru
    _

// kernel: distance_gat_fc_forward.2
$region0: #{distance_gat_fc_forward.2}
  #allocation0 [shape = 'u32[]', space=smem, size = 0x4, offset = 0x4, fixed_abs, tag = 'smem constant byte address 0x4 - core index']
  #allocation1 [shape = 'u32[144,128]{1,0:T(1,128)}', space=vmem, size = 0x12000, scoped, tag = 'internal scratch']
  %s0 = inlined_call_operand.vmem [shape: f32[128,20], index: 0, kind: input, shape index: {}]
  %s1 = inlined_call_operand.vmem [shape: f32[20,128], index: 1, kind: input, shape index: {}]
  %s2 = inlined_call_operand.vmem [shape: f32[4,16], index: 2, kind: input, shape index: {}]
  %s3 = inlined_call_operand.vmem [shape: f32[4,16], index: 3, kind: input, shape index: {}]
  %s4 = inlined_call_operand.vmem [shape: f32[128,128], index: 4, kind: input, shape index: {}]
  %s5 = inlined_call_operand.vmem [shape: f32[1,16], index: 5, kind: input, shape index: {}]
  %s6 = inlined_call_operand.vmem [shape: f32[128,16], index: 6, kind: output, shape index: {}]
  %s7 = sld [smem:[#allocation0]]
  $region34: #{distance_gat_fc_forward.2} parent=0
    _
  %s9 = ssub.s32 1, %s7
  %s10 = scalar_select 0, %s9, %s7
  // Predicated region
  $region2: #{distance_gat_fc_forward.2} parent=0 // pred_check
    _
  $region3: #{distance_gat_fc_forward.2} parent=0 // pred_check_branch
    %12 = sbr.rel (0) target = $region5
  $region4: #{distance_gat_fc_forward.2} parent=0 // pred_region
    _
  $region5: #{distance_gat_fc_forward.2} parent=0 // pred_fallthru
    _
  // Predicated region
  $region6: #{distance_gat_fc_forward.2} parent=0 // pred_check
    _
  $region7: #{distance_gat_fc_forward.2} parent=0 // pred_check_branch
    %14 = sbr.rel (0) target = $region9
  $region8: #{distance_gat_fc_forward.2} parent=0 // pred_region
    _
  $region9: #{distance_gat_fc_forward.2} parent=0 // pred_fallthru
    _
  // Predicated region
  $region10: #{distance_gat_fc_forward.2} parent=0 // pred_check
    _
  $region11: #{distance_gat_fc_forward.2} parent=0 // pred_check_branch
    %16 = sbr.rel (0) target = $region13
  $region12: #{distance_gat_fc_forward.2} parent=0 // pred_region
    _
  $region13: #{distance_gat_fc_forward.2} parent=0 // pred_fallthru
    _
  // Predicated region
  $region14: #{distance_gat_fc_forward.2} parent=0 // pred_check
    _
  $region15: #{distance_gat_fc_forward.2} parent=0 // pred_check_branch
    %18 = sbr.rel (0) target = $region17
  $region16: #{distance_gat_fc_forward.2} parent=0 // pred_region
    _
  $region17: #{distance_gat_fc_forward.2} parent=0 // pred_fallthru
    _
  // Predicated region
  $region18: #{distance_gat_fc_forward.2} parent=0 // pred_check
    _
  $region19: #{distance_gat_fc_forward.2} parent=0 // pred_check_branch
    %20 = sbr.rel (0) target = $region21
  $region20: #{distance_gat_fc_forward.2} parent=0 // pred_region
    _
  $region21: #{distance_gat_fc_forward.2} parent=0 // pred_fallthru
    _
  // Predicated region
  $region22: #{distance_gat_fc_forward.2} parent=0 // pred_check
    _
  $region23: #{distance_gat_fc_forward.2} parent=0 // pred_check_branch
    %22 = sbr.rel (0) target = $region25
  $region24: #{distance_gat_fc_forward.2} parent=0 // pred_region
    _
  $region25: #{distance_gat_fc_forward.2} parent=0 // pred_fallthru
    _
  %v23 = vld [vmem:[%s0] sm:$0xff]
  %v24 = vld [vmem:[%s0 + $0x8] sm:$0xff]
  %v25 = vld [vmem:[%s0 + $0x10] sm:$0xff]
  %v26 = vld [vmem:[%s0 + $0x18] sm:$0xff]
  %v27 = vld [vmem:[%s0 + $0x20] sm:$0xff]
  %v28 = vld [vmem:[%s0 + $0x28] sm:$0xff]
  %v29 = vld [vmem:[%s0 + $0x30] sm:$0xff]
  %v30 = vld [vmem:[%s0 + $0x38] sm:$0xff]
  %v31 = vld [vmem:[%s0 + $0x40] sm:$0xff]
  %v32 = vld [vmem:[%s0 + $0x48] sm:$0xff]
  %v33 = vld [vmem:[%s0 + $0x50] sm:$0xff]
  %v34 = vld [vmem:[%s0 + $0x58] sm:$0xff]
  %v35 = vld [vmem:[%s0 + $0x60] sm:$0xff]
  %v36 = vld [vmem:[%s0 + $0x68] sm:$0xff]
  %v37 = vld [vmem:[%s0 + $0x70] sm:$0xff]
  %v38 = vld [vmem:[%s0 + $0x78] sm:$0xff]
  %v39 = vld [vmem:[%s1] sm:$0xff]
  %v40 = vld [vmem:[%s1 + $0x8] sm:$0xff]
  %v41 = vld [vmem:[%s1 + $0x10] sm:$0xf]
  %vm42 = vcmask 162816
  %v44 = vsel %vm42, %v23, 0
  %v47 = vsel %vm42, %v24, 0
  %v50 = vsel %vm42, %v25, 0
  %v53 = vsel %vm42, %v26, 0
  %v56 = vsel %vm42, %v27, 0
  %v59 = vsel %vm42, %v28, 0
  %v62 = vsel %vm42, %v29, 0
  %v65 = vsel %vm42, %v30, 0
  %v68 = vsel %vm42, %v31, 0
  %v71 = vsel %vm42, %v32, 0
  %v74 = vsel %vm42, %v33, 0
  %v77 = vsel %vm42, %v34, 0
  %v80 = vsel %vm42, %v35, 0
  %v83 = vsel %vm42, %v36, 0
  %v86 = vsel %vm42, %v37, 0
  %v89 = vsel %vm42, %v38, 0
  %vm91 = vcmask 1043456
  %v93 = vsel %vm91, %v41, 0
  %95 = vmatprep.subr.mxu0 0.0
  %96 = vmatpush1.msra.mxu0 0.0
  %97 = vmatprep.subr.mxu0 0.0
  %98 = vmatpush1.msra.mxu0 0.0
  %99 = vmatprep.subr.mxu0 0.0
  %100 = vmatpush1.msra.mxu0 0.0
  %101 = vmatprep.subr.mxu0 0.0
  %102 = vmatpush1.msra.mxu0 0.0
  %103 = vmatprep.subr.mxu0 0.0
  %104 = vmatpush1.msra.mxu0 0.0
  %105 = vmatprep.subr.mxu0 0.0
  %106 = vmatpush1.msra.mxu0 0.0
  %107 = vmatprep.subr.mxu0 0.0
  %108 = vmatpush1.msra.mxu0 0.0
  %109 = vmatprep.subr.mxu0 0.0
  %110 = vmatpush1.msra.mxu0 0.0
  %111 = vmatprep.subr.mxu0 0.0
  %112 = vmatpush1.msra.mxu0 0.0
  %113 = vmatprep.subr.mxu0 0.0
  %114 = vmatpush1.msra.mxu0 0.0
  %115 = vmatprep.subr.mxu0 0.0
  %116 = vmatpush1.msra.mxu0 0.0
  %117 = vmatprep.subr.mxu0 0.0
  %118 = vmatpush1.msra.mxu0 0.0
  %119 = vmatprep.subr.mxu0 0.0
  %120 = vmatpush1.msra.mxu0 0.0
  %121 = vmatprep.subr.mxu0 0.0
  %122 = vmatpush1.msra.mxu0 %v93
  %123 = vmatprep.subr.mxu0 0.0
  %124 = vmatpush1.msra.mxu0 %v40
  %125 = vmatprep.subr.mxu0 0.0
  %126 = vmatpush1.msra.mxu0 %v39
  %127 = vmatprep.subr.mxu0 0.0
  %128 = vmatpush2.msra.mxu0 0.0
  %129 = vmatprep.subr.mxu0 0.0
  %130 = vmatpush2.msra.mxu0 0.0
  %131 = vmatprep.subr.mxu0 0.0
  %132 = vmatpush2.msra.mxu0 0.0
  %133 = vmatprep.subr.mxu0 0.0
  %134 = vmatpush2.msra.mxu0 0.0
  %135 = vmatprep.subr.mxu0 0.0
  %136 = vmatpush2.msra.mxu0 0.0
  %137 = vmatprep.subr.mxu0 0.0
  %138 = vmatpush2.msra.mxu0 0.0
  %139 = vmatprep.subr.mxu0 0.0
  %140 = vmatpush2.msra.mxu0 0.0
  %141 = vmatprep.subr.mxu0 0.0
  %142 = vmatpush2.msra.mxu0 0.0
  %143 = vmatprep.subr.mxu0 0.0
  %144 = vmatpush2.msra.mxu0 0.0
  %145 = vmatprep.subr.mxu0 0.0
  %146 = vmatpush2.msra.mxu0 0.0
  %147 = vmatprep.subr.mxu0 0.0
  %148 = vmatpush2.msra.mxu0 0.0
  %149 = vmatprep.subr.mxu0 0.0
  %150 = vmatpush2.msra.mxu0 0.0
  %151 = vmatprep.subr.mxu0 0.0
  %152 = vmatpush2.msra.mxu0 0.0
  %153 = vmatprep.subr.mxu0 0.0
  %154 = vmatpush2.msra.mxu0 0.0
  %155 = vmatprep.subr.mxu0 0.0
  %156 = vmatpush2.msra.mxu0 0.0
  %157 = vmatprep.subr.mxu0 0.0
  %158 = vmatpush2.msra.mxu0 0.0
  %159 = vmatprep.mubr.f32.mxu0 0.0
  %160 = vmatmul.mubr.f32.gmra.mxu0 %v44
  %v161 = vpop.f32.mrf.mxu0
  %v162 = vadd.f32 0.0, %v161
  %v163 = vpop.f32.mrf.mxu0
  %164 = vmatprep.mubr.f32.mxu0 0.0
  %165 = vmatmul.mubr.f32.gmra.mxu0 %v47
  %v166 = vpop.f32.mrf.mxu0
  %v167 = vadd.f32 0.0, %v166
  %v168 = vpop.f32.mrf.mxu0
  %169 = vmatprep.mubr.f32.mxu0 0.0
  %170 = vmatmul.mubr.f32.gmra.mxu0 %v50
  %v171 = vpop.f32.mrf.mxu0
  %v172 = vadd.f32 0.0, %v171
  %v173 = vpop.f32.mrf.mxu0
  %174 = vmatprep.mubr.f32.mxu0 0.0
  %175 = vmatmul.mubr.f32.gmra.mxu0 %v53
  %v176 = vpop.f32.mrf.mxu0
  %v177 = vadd.f32 0.0, %v176
  %v178 = vpop.f32.mrf.mxu0
  %179 = vmatprep.mubr.f32.mxu0 0.0
  %180 = vmatmul.mubr.f32.gmra.mxu0 %v56
  %v181 = vpop.f32.mrf.mxu0
  %v182 = vadd.f32 0.0, %v181
  %v183 = vpop.f32.mrf.mxu0
  %184 = vmatprep.mubr.f32.mxu0 0.0
  %185 = vmatmul.mubr.f32.gmra.mxu0 %v59
  %v186 = vpop.f32.mrf.mxu0
  %v187 = vadd.f32 0.0, %v186
  %v188 = vpop.f32.mrf.mxu0
  %189 = vmatprep.mubr.f32.mxu0 0.0
  %190 = vmatmul.mubr.f32.gmra.mxu0 %v62
  %v191 = vpop.f32.mrf.mxu0
  %v192 = vadd.f32 0.0, %v191
  %v193 = vpop.f32.mrf.mxu0
  %194 = vmatprep.mubr.f32.mxu0 0.0
  %195 = vmatmul.mubr.f32.gmra.mxu0 %v65
  %v196 = vpop.f32.mrf.mxu0
  %v197 = vadd.f32 0.0, %v196
  %v198 = vpop.f32.mrf.mxu0
  %199 = vmatprep.mubr.f32.mxu0 0.0
  %200 = vmatmul.mubr.f32.gmra.mxu0 %v68
  %v201 = vpop.f32.mrf.mxu0
  %v202 = vadd.f32 0.0, %v201
  %v203 = vpop.f32.mrf.mxu0
  %204 = vmatprep.mubr.f32.mxu0 0.0
  %205 = vmatmul.mubr.f32.gmra.mxu0 %v71
  %v206 = vpop.f32.mrf.mxu0
  %v207 = vadd.f32 0.0, %v206
  %v208 = vpop.f32.mrf.mxu0
  %209 = vmatprep.mubr.f32.mxu0 0.0
  %210 = vmatmul.mubr.f32.gmra.mxu0 %v74
  %v211 = vpop.f32.mrf.mxu0
  %v212 = vadd.f32 0.0, %v211
  %v213 = vpop.f32.mrf.mxu0
  %214 = vmatprep.mubr.f32.mxu0 0.0
  %215 = vmatmul.mubr.f32.gmra.mxu0 %v77
  %v216 = vpop.f32.mrf.mxu0
  %v217 = vadd.f32 0.0, %v216
  %v218 = vpop.f32.mrf.mxu0
  %219 = vmatprep.mubr.f32.mxu0 0.0
  %220 = vmatmul.mubr.f32.gmra.mxu0 %v80
  %v221 = vpop.f32.mrf.mxu0
  %v222 = vadd.f32 0.0, %v221
  %v223 = vpop.f32.mrf.mxu0
  %224 = vmatprep.mubr.f32.mxu0 0.0
  %225 = vmatmul.mubr.f32.gmra.mxu0 %v83
  %v226 = vpop.f32.mrf.mxu0
  %v227 = vadd.f32 0.0, %v226
  %v228 = vpop.f32.mrf.mxu0
  %229 = vmatprep.mubr.f32.mxu0 0.0
  %230 = vmatmul.mubr.f32.gmra.mxu0 %v86
  %v231 = vpop.f32.mrf.mxu0
  %v232 = vadd.f32 0.0, %v231
  %v233 = vpop.f32.mrf.mxu0
  %234 = vmatprep.mubr.f32.mxu0 0.0
  %235 = vmatmul.mubr.f32.gmra.mxu0 %v89
  %v236 = vpop.f32.mrf.mxu0
  %v237 = vadd.f32 0.0, %v236
  %v238 = vpop.f32.mrf.mxu0
  %239 = vdwg.mxu0
  %v240 = vld [vmem:[%s4] sm:$0xff]
  %v241 = vld [vmem:[%s4 + $0x8] sm:$0xff]
  %v242 = vld [vmem:[%s4 + $0x10] sm:$0xff]
  %v243 = vld [vmem:[%s4 + $0x18] sm:$0xff]
  %v244 = vld [vmem:[%s4 + $0x20] sm:$0xff]
  %v245 = vld [vmem:[%s4 + $0x28] sm:$0xff]
  %v246 = vld [vmem:[%s4 + $0x30] sm:$0xff]
  %v247 = vld [vmem:[%s4 + $0x38] sm:$0xff]
  %v248 = vld [vmem:[%s4 + $0x40] sm:$0xff]
  %v249 = vld [vmem:[%s4 + $0x48] sm:$0xff]
  %v250 = vld [vmem:[%s4 + $0x50] sm:$0xff]
  %v251 = vld [vmem:[%s4 + $0x58] sm:$0xff]
  %v252 = vld [vmem:[%s4 + $0x60] sm:$0xff]
  %v253 = vld [vmem:[%s4 + $0x68] sm:$0xff]
  %v254 = vld [vmem:[%s4 + $0x70] sm:$0xff]
  %v255 = vld [vmem:[%s4 + $0x78] sm:$0xff]
  %v256 = vld [vmem:[%s2] sm:$0xf]
  %v257 = vld [vmem:[%s3] sm:$0xf]
  %v258 = vlaneseq
  %v259 = vshrl.u32 %v258, 7
  %v260 = vsub.s32 0, %v259
  %v261 = vrot.slane %v256, %v260
  %v262 = vmul.f32 %v162, %v261
  %v263 = vmul.f32 %v167, %v261
  %v264 = vmul.f32 %v172, %v261
  %v265 = vmul.f32 %v177, %v261
  %v266 = vmul.f32 %v182, %v261
  %v267 = vmul.f32 %v187, %v261
  %v268 = vmul.f32 %v192, %v261
  %v269 = vmul.f32 %v197, %v261
  %v270 = vmul.f32 %v202, %v261
  %v271 = vmul.f32 %v207, %v261
  %v272 = vmul.f32 %v212, %v261
  %v273 = vmul.f32 %v217, %v261
  %v274 = vmul.f32 %v222, %v261
  %v275 = vmul.f32 %v227, %v261
  %v276 = vmul.f32 %v232, %v261
  %v277 = vmul.f32 %v237, %v261
  %vm278 = vcmask 130048
  %v279 = vsel %vm278, %v262, 0.0
  %280 = vadd.xlane.f32.xlu0 %v279
  %v281 = vpop.xlane.xlu0 %280
  %v282 = vsel %vm278, %v263, 0.0
  %283 = vadd.xlane.f32.xlu0 %v282
  %v284 = vpop.xlane.xlu0 %283
  %v285 = vsel %vm278, %v264, 0.0
  %286 = vadd.xlane.f32.xlu0 %v285
  %v287 = vpop.xlane.xlu0 %286
  %v288 = vsel %vm278, %v265, 0.0
  %289 = vadd.xlane.f32.xlu0 %v288
  %v290 = vpop.xlane.xlu0 %289
  %v291 = vsel %vm278, %v266, 0.0
  %292 = vadd.xlane.f32.xlu0 %v291
  %v293 = vpop.xlane.xlu0 %292
  %v294 = vsel %vm278, %v267, 0.0
  %295 = vadd.xlane.f32.xlu0 %v294
  %v296 = vpop.xlane.xlu0 %295
  %v297 = vsel %vm278, %v268, 0.0
  %298 = vadd.xlane.f32.xlu0 %v297
  %v299 = vpop.xlane.xlu0 %298
  %v300 = vsel %vm278, %v269, 0.0
  %301 = vadd.xlane.f32.xlu0 %v300
  %v302 = vpop.xlane.xlu0 %301
  %v303 = vsel %vm278, %v270, 0.0
  %304 = vadd.xlane.f32.xlu0 %v303
  %v305 = vpop.xlane.xlu0 %304
  %v306 = vsel %vm278, %v271, 0.0
  %307 = vadd.xlane.f32.xlu0 %v306
  %v308 = vpop.xlane.xlu0 %307
  %v309 = vsel %vm278, %v272, 0.0
  %310 = vadd.xlane.f32.xlu0 %v309
  %v311 = vpop.xlane.xlu0 %310
  %v312 = vsel %vm278, %v273, 0.0
  %313 = vadd.xlane.f32.xlu0 %v312
  %v314 = vpop.xlane.xlu0 %313
  %v315 = vsel %vm278, %v274, 0.0
  %316 = vadd.xlane.f32.xlu0 %v315
  %v317 = vpop.xlane.xlu0 %316
  %v318 = vsel %vm278, %v275, 0.0
  %319 = vadd.xlane.f32.xlu0 %v318
  %v320 = vpop.xlane.xlu0 %319
  %v321 = vsel %vm278, %v276, 0.0
  %322 = vadd.xlane.f32.xlu0 %v321
  %v323 = vpop.xlane.xlu0 %322
  %v324 = vsel %vm278, %v277, 0.0
  %325 = vadd.xlane.f32.xlu0 %v324
  %v326 = vpop.xlane.xlu0 %325
  %v327 = vlaneseq
  %v328 = vshrl.u32 %v327, 7
  %v329 = vsub.s32 0, %v328
  %v330 = vrot.slane %v257, %v329
  %v331 = vmul.f32 %v162, %v330
  %v332 = vmul.f32 %v167, %v330
  %v333 = vmul.f32 %v172, %v330
  %v334 = vmul.f32 %v177, %v330
  %v335 = vmul.f32 %v182, %v330
  %v336 = vmul.f32 %v187, %v330
  %v337 = vmul.f32 %v192, %v330
  %v338 = vmul.f32 %v197, %v330
  %v339 = vmul.f32 %v202, %v330
  %v340 = vmul.f32 %v207, %v330
  %v341 = vmul.f32 %v212, %v330
  %v342 = vmul.f32 %v217, %v330
  %v343 = vmul.f32 %v222, %v330
  %v344 = vmul.f32 %v227, %v330
  %v345 = vmul.f32 %v232, %v330
  %v346 = vmul.f32 %v237, %v330
  %v347 = vsel %vm278, %v331, 0.0
  %348 = vadd.xlane.f32.xlu0 %v347
  %v349 = vpop.xlane.xlu0 %348
  %v350 = vsel %vm278, %v332, 0.0
  %351 = vadd.xlane.f32.xlu0 %v350
  %v352 = vpop.xlane.xlu0 %351
  %v353 = vsel %vm278, %v333, 0.0
  %354 = vadd.xlane.f32.xlu0 %v353
  %v355 = vpop.xlane.xlu0 %354
  %v356 = vsel %vm278, %v334, 0.0
  %357 = vadd.xlane.f32.xlu0 %v356
  %v358 = vpop.xlane.xlu0 %357
  %v359 = vsel %vm278, %v335, 0.0
  %360 = vadd.xlane.f32.xlu0 %v359
  %v361 = vpop.xlane.xlu0 %360
  %v362 = vsel %vm278, %v336, 0.0
  %363 = vadd.xlane.f32.xlu0 %v362
  %v364 = vpop.xlane.xlu0 %363
  %v365 = vsel %vm278, %v337, 0.0
  %366 = vadd.xlane.f32.xlu0 %v365
  %v367 = vpop.xlane.xlu0 %366
  %v368 = vsel %vm278, %v338, 0.0
  %369 = vadd.xlane.f32.xlu0 %v368
  %v370 = vpop.xlane.xlu0 %369
  %v371 = vsel %vm278, %v339, 0.0
  %372 = vadd.xlane.f32.xlu0 %v371
  %v373 = vpop.xlane.xlu0 %372
  %v374 = vsel %vm278, %v340, 0.0
  %375 = vadd.xlane.f32.xlu0 %v374
  %v376 = vpop.xlane.xlu0 %375
  %v377 = vsel %vm278, %v341, 0.0
  %378 = vadd.xlane.f32.xlu0 %v377
  %v379 = vpop.xlane.xlu0 %378
  %v380 = vsel %vm278, %v342, 0.0
  %381 = vadd.xlane.f32.xlu0 %v380
  %v382 = vpop.xlane.xlu0 %381
  %v383 = vsel %vm278, %v343, 0.0
  %384 = vadd.xlane.f32.xlu0 %v383
  %v385 = vpop.xlane.xlu0 %384
  %v386 = vsel %vm278, %v344, 0.0
  %387 = vadd.xlane.f32.xlu0 %v386
  %v388 = vpop.xlane.xlu0 %387
  %v389 = vsel %vm278, %v345, 0.0
  %390 = vadd.xlane.f32.xlu0 %v389
  %v391 = vpop.xlane.xlu0 %390
  %v392 = vsel %vm278, %v346, 0.0
  %393 = vadd.xlane.f32.xlu0 %v392
  %v394 = vpop.xlane.xlu0 %393
  %395 = vxpose.xlu0.b32.start [1/16] %v281, 128
  %396 = vxpose.xlu0.b32.cont [2/16] %v284, 128
  %397 = vxpose.xlu0.b32.cont [3/16] %v287, 128
  %398 = vxpose.xlu0.b32.cont [4/16] %v290, 128
  %399 = vxpose.xlu0.b32.cont [5/16] %v293, 128
  %400 = vxpose.xlu0.b32.cont [6/16] %v296, 128
  %401 = vxpose.xlu0.b32.cont [7/16] %v299, 128
  %402 = vxpose.xlu0.b32.cont [8/16] %v302, 128
  %403 = vxpose.xlu0.b32.cont [9/16] %v305, 128
  %404 = vxpose.xlu0.b32.cont [10/16] %v308, 128
  %405 = vxpose.xlu0.b32.cont [11/16] %v311, 128
  %406 = vxpose.xlu0.b32.cont [12/16] %v314, 128
  %407 = vxpose.xlu0.b32.cont [13/16] %v317, 128
  %408 = vxpose.xlu0.b32.cont [14/16] %v320, 128
  %409 = vxpose.xlu0.b32.cont [15/16] %v323, 128
  %410 = vxpose.xlu0.b32.end [16/16] %v326, 128
  %v411 = vpop.trf.xlu0
  %v412 = vpop.trf.xlu0
  %v413 = vpop.trf.xlu0
  %v414 = vpop.trf.xlu0
  %v415 = vpop.trf.xlu0
  %v416 = vpop.trf.xlu0
  %v417 = vpop.trf.xlu0
  %v418 = vpop.trf.xlu0
  %v419 = vpop.trf.xlu0
  %v420 = vpop.trf.xlu0
  %v421 = vpop.trf.xlu0
  %v422 = vpop.trf.xlu0
  %v423 = vpop.trf.xlu0
  %v424 = vpop.trf.xlu0
  %v425 = vpop.trf.xlu0
  %v426 = vpop.trf.xlu0
  %v427 = vlaneseq
  %v428 = vshrl.u32 %v427, 7
  %v429 = vsub.s32 0, %v428
  %v430 = vrot.slane %v411, %v429
  %v431 = vadd.f32 %v349, %v430
  %v432 = vadd.f32 %v352, %v430
  %v433 = vadd.f32 %v355, %v430
  %v434 = vadd.f32 %v358, %v430
  %v435 = vadd.f32 %v361, %v430
  %v436 = vadd.f32 %v364, %v430
  %v437 = vadd.f32 %v367, %v430
  %v438 = vadd.f32 %v370, %v430
  %v439 = vadd.f32 %v373, %v430
  %v440 = vadd.f32 %v376, %v430
  %v441 = vadd.f32 %v379, %v430
  %v442 = vadd.f32 %v382, %v430
  %v443 = vadd.f32 %v385, %v430
  %v444 = vadd.f32 %v388, %v430
  %v445 = vadd.f32 %v391, %v430
  %v446 = vadd.f32 %v394, %v430
  %vm447 = vcmp.gt.f32.partialorder %v431, 0.0
  %vm448 = vcmp.gt.f32.partialorder %v432, 0.0
  %vm449 = vcmp.gt.f32.partialorder %v433, 0.0
  %vm450 = vcmp.gt.f32.partialorder %v434, 0.0
  %vm451 = vcmp.gt.f32.partialorder %v435, 0.0
  %vm452 = vcmp.gt.f32.partialorder %v436, 0.0
  %vm453 = vcmp.gt.f32.partialorder %v437, 0.0
  %vm454 = vcmp.gt.f32.partialorder %v438, 0.0
  %vm455 = vcmp.gt.f32.partialorder %v439, 0.0
  %vm456 = vcmp.gt.f32.partialorder %v440, 0.0
  %vm457 = vcmp.gt.f32.partialorder %v441, 0.0
  %vm458 = vcmp.gt.f32.partialorder %v442, 0.0
  %vm459 = vcmp.gt.f32.partialorder %v443, 0.0
  %vm460 = vcmp.gt.f32.partialorder %v444, 0.0
  %vm461 = vcmp.gt.f32.partialorder %v445, 0.0
  %vm462 = vcmp.gt.f32.partialorder %v446, 0.0
  %v463 = vmul.f32 %v431, 0.2
  %v464 = vmul.f32 %v432, 0.2
  %v465 = vmul.f32 %v433, 0.2
  %v466 = vmul.f32 %v434, 0.2
  %v467 = vmul.f32 %v435, 0.2
  %v468 = vmul.f32 %v436, 0.2
  %v469 = vmul.f32 %v437, 0.2
  %v470 = vmul.f32 %v438, 0.2
  %v471 = vmul.f32 %v439, 0.2
  %v472 = vmul.f32 %v440, 0.2
  %v473 = vmul.f32 %v441, 0.2
  %v474 = vmul.f32 %v442, 0.2
  %v475 = vmul.f32 %v443, 0.2
  %v476 = vmul.f32 %v444, 0.2
  %v477 = vmul.f32 %v445, 0.2
  %v478 = vmul.f32 %v446, 0.2
  %v479 = vsel %vm447, %v431, %v463
  %v480 = vsel %vm448, %v432, %v464
  %v481 = vsel %vm449, %v433, %v465
  %v482 = vsel %vm450, %v434, %v466
  %v483 = vsel %vm451, %v435, %v467
  %v484 = vsel %vm452, %v436, %v468
  %v485 = vsel %vm453, %v437, %v469
  %v486 = vsel %vm454, %v438, %v470
  %v487 = vsel %vm455, %v439, %v471
  %v488 = vsel %vm456, %v440, %v472
  %v489 = vsel %vm457, %v441, %v473
  %v490 = vsel %vm458, %v442, %v474
  %v491 = vsel %vm459, %v443, %v475
  %v492 = vsel %vm460, %v444, %v476
  %v493 = vsel %vm461, %v445, %v477
  %v494 = vsel %vm462, %v446, %v478
  %vm495 = vcmp.gt.f32.partialorder %v240, 0.0
  %vm496 = vcmp.gt.f32.partialorder %v241, 0.0
  %vm497 = vcmp.gt.f32.partialorder %v242, 0.0
  %vm498 = vcmp.gt.f32.partialorder %v243, 0.0
  %vm499 = vcmp.gt.f32.partialorder %v244, 0.0
  %vm500 = vcmp.gt.f32.partialorder %v245, 0.0
  %vm501 = vcmp.gt.f32.partialorder %v246, 0.0
  %vm502 = vcmp.gt.f32.partialorder %v247, 0.0
  %vm503 = vcmp.gt.f32.partialorder %v248, 0.0
  %vm504 = vcmp.gt.f32.partialorder %v249, 0.0
  %vm505 = vcmp.gt.f32.partialorder %v250, 0.0
  %vm506 = vcmp.gt.f32.partialorder %v251, 0.0
  %vm507 = vcmp.gt.f32.partialorder %v252, 0.0
  %vm508 = vcmp.gt.f32.partialorder %v253, 0.0
  %vm509 = vcmp.gt.f32.partialorder %v254, 0.0
  %vm510 = vcmp.gt.f32.partialorder %v255, 0.0
  %v511 = vsel %vm495, %v479, -1e+30
  %v512 = vsel %vm496, %v480, -1e+30
  %v513 = vsel %vm497, %v481, -1e+30
  %v514 = vsel %vm498, %v482, -1e+30
  %v515 = vsel %vm499, %v483, -1e+30
  %v516 = vsel %vm500, %v484, -1e+30
  %v517 = vsel %vm501, %v485, -1e+30
  %v518 = vsel %vm502, %v486, -1e+30
  %v519 = vsel %vm503, %v487, -1e+30
  %v520 = vsel %vm504, %v488, -1e+30
  %v521 = vsel %vm505, %v489, -1e+30
  %v522 = vsel %vm506, %v490, -1e+30
  %v523 = vsel %vm507, %v491, -1e+30
  %v524 = vsel %vm508, %v492, -1e+30
  %v525 = vsel %vm509, %v493, -1e+30
  %v526 = vsel %vm510, %v494, -1e+30
  %527 = vmax.xlane.f32.xlu0 %v511
  %v528 = vpop.xlane.xlu0 %527
  %529 = vmax.xlane.f32.xlu0 %v512
  %v530 = vpop.xlane.xlu0 %529
  %531 = vmax.xlane.f32.xlu0 %v513
  %v532 = vpop.xlane.xlu0 %531
  %533 = vmax.xlane.f32.xlu0 %v514
  %v534 = vpop.xlane.xlu0 %533
  %535 = vmax.xlane.f32.xlu0 %v515
  %v536 = vpop.xlane.xlu0 %535
  %537 = vmax.xlane.f32.xlu0 %v516
  %v538 = vpop.xlane.xlu0 %537
  %539 = vmax.xlane.f32.xlu0 %v517
  %v540 = vpop.xlane.xlu0 %539
  %541 = vmax.xlane.f32.xlu0 %v518
  %v542 = vpop.xlane.xlu0 %541
  %543 = vmax.xlane.f32.xlu0 %v519
  %v544 = vpop.xlane.xlu0 %543
  %545 = vmax.xlane.f32.xlu0 %v520
  %v546 = vpop.xlane.xlu0 %545
  %547 = vmax.xlane.f32.xlu0 %v521
  %v548 = vpop.xlane.xlu0 %547
  %549 = vmax.xlane.f32.xlu0 %v522
  %v550 = vpop.xlane.xlu0 %549
  %551 = vmax.xlane.f32.xlu0 %v523
  %v552 = vpop.xlane.xlu0 %551
  %553 = vmax.xlane.f32.xlu0 %v524
  %v554 = vpop.xlane.xlu0 %553
  %555 = vmax.xlane.f32.xlu0 %v525
  %v556 = vpop.xlane.xlu0 %555
  %557 = vmax.xlane.f32.xlu0 %v526
  %v558 = vpop.xlane.xlu0 %557
  %v559 = vsub.f32 %v511, %v528
  %v560 = vsub.f32 %v512, %v530
  %v561 = vsub.f32 %v513, %v532
  %v562 = vsub.f32 %v514, %v534
  %v563 = vsub.f32 %v515, %v536
  %v564 = vsub.f32 %v516, %v538
  %v565 = vsub.f32 %v517, %v540
  %v566 = vsub.f32 %v518, %v542
  %v567 = vsub.f32 %v519, %v544
  %v568 = vsub.f32 %v520, %v546
  %v569 = vsub.f32 %v521, %v548
  %v570 = vsub.f32 %v522, %v550
  %v571 = vsub.f32 %v523, %v552
  %v572 = vsub.f32 %v524, %v554
  %v573 = vsub.f32 %v525, %v556
  %v574 = vsub.f32 %v526, %v558
  %v575 = vmul.f32 %v559, 1.442695
  %v576 = vpow.pop %v575
  %v577 = vmul.f32 %v560, 1.442695
  %v578 = vpow.pop %v577
  %v579 = vmul.f32 %v561, 1.442695
  %v580 = vpow.pop %v579
  %v581 = vmul.f32 %v562, 1.442695
  %v582 = vpow.pop %v581
  %v583 = vmul.f32 %v563, 1.442695
  %v584 = vpow.pop %v583
  %v585 = vmul.f32 %v564, 1.442695
  %v586 = vpow.pop %v585
  %v587 = vmul.f32 %v565, 1.442695
  %v588 = vpow.pop %v587
  %v589 = vmul.f32 %v566, 1.442695
  %v590 = vpow.pop %v589
  %v591 = vmul.f32 %v567, 1.442695
  %v592 = vpow.pop %v591
  %v593 = vmul.f32 %v568, 1.442695
  %v594 = vpow.pop %v593
  %v595 = vmul.f32 %v569, 1.442695
  %v596 = vpow.pop %v595
  %v597 = vmul.f32 %v570, 1.442695
  %v598 = vpow.pop %v597
  %v599 = vmul.f32 %v571, 1.442695
  %v600 = vpow.pop %v599
  %v601 = vmul.f32 %v572, 1.442695
  %v602 = vpow.pop %v601
  %v603 = vmul.f32 %v573, 1.442695
  %v604 = vpow.pop %v603
  %v605 = vmul.f32 %v574, 1.442695
  %v606 = vpow.pop %v605
  %v607 = vmul.f32 %v576, %v240
  %v608 = vmul.f32 %v578, %v241
  %v609 = vmul.f32 %v580, %v242
  %v610 = vmul.f32 %v582, %v243
  %v611 = vmul.f32 %v584, %v244
  %v612 = vmul.f32 %v586, %v245
  %v613 = vmul.f32 %v588, %v246
  %v614 = vmul.f32 %v590, %v247
  %v615 = vmul.f32 %v592, %v248
  %v616 = vmul.f32 %v594, %v249
  %v617 = vmul.f32 %v596, %v250
  %v618 = vmul.f32 %v598, %v251
  %v619 = vmul.f32 %v600, %v252
  %v620 = vmul.f32 %v602, %v253
  %v621 = vmul.f32 %v604, %v254
  %v622 = vmul.f32 %v606, %v255
  %623 = vadd.xlane.f32.xlu0 %v607
  %v624 = vpop.xlane.xlu0 %623
  %625 = vadd.xlane.f32.xlu0 %v608
  %v626 = vpop.xlane.xlu0 %625
  %627 = vadd.xlane.f32.xlu0 %v609
  %v628 = vpop.xlane.xlu0 %627
  %629 = vadd.xlane.f32.xlu0 %v610
  %v630 = vpop.xlane.xlu0 %629
  %631 = vadd.xlane.f32.xlu0 %v611
  %v632 = vpop.xlane.xlu0 %631
  %633 = vadd.xlane.f32.xlu0 %v612
  %v634 = vpop.xlane.xlu0 %633
  %635 = vadd.xlane.f32.xlu0 %v613
  %v636 = vpop.xlane.xlu0 %635
  %637 = vadd.xlane.f32.xlu0 %v614
  %v638 = vpop.xlane.xlu0 %637
  %639 = vadd.xlane.f32.xlu0 %v615
  %v640 = vpop.xlane.xlu0 %639
  %641 = vadd.xlane.f32.xlu0 %v616
  %v642 = vpop.xlane.xlu0 %641
  %643 = vadd.xlane.f32.xlu0 %v617
  %v644 = vpop.xlane.xlu0 %643
  %645 = vadd.xlane.f32.xlu0 %v618
  %v646 = vpop.xlane.xlu0 %645
  %647 = vadd.xlane.f32.xlu0 %v619
  %v648 = vpop.xlane.xlu0 %647
  %649 = vadd.xlane.f32.xlu0 %v620
  %v650 = vpop.xlane.xlu0 %649
  %651 = vadd.xlane.f32.xlu0 %v621
  %v652 = vpop.xlane.xlu0 %651
  %653 = vadd.xlane.f32.xlu0 %v622
  %v654 = vpop.xlane.xlu0 %653
  %655 = vmatprep.subr.mxu0 0.0
  %656 = vmatpush1.msra.mxu0 %v237
  %657 = vmatprep.subr.mxu0 0.0
  %658 = vmatpush1.msra.mxu0 %v232
  %659 = vmatprep.subr.mxu0 0.0
  %660 = vmatpush1.msra.mxu0 %v227
  %661 = vmatprep.subr.mxu0 0.0
  %662 = vmatpush1.msra.mxu0 %v222
  %663 = vmatprep.subr.mxu0 0.0
  %664 = vmatpush1.msra.mxu0 %v217
  %665 = vmatprep.subr.mxu0 0.0
  %666 = vmatpush1.msra.mxu0 %v212
  %667 = vmatprep.subr.mxu0 0.0
  %668 = vmatpush1.msra.mxu0 %v207
  %669 = vmatprep.subr.mxu0 0.0
  %670 = vmatpush1.msra.mxu0 %v202
  %671 = vmatprep.subr.mxu0 0.0
  %672 = vmatpush1.msra.mxu0 %v197
  %673 = vmatprep.subr.mxu0 0.0
  %674 = vmatpush1.msra.mxu0 %v192
  %675 = vmatprep.subr.mxu0 0.0
  %676 = vmatpush1.msra.mxu0 %v187
  %677 = vmatprep.subr.mxu0 0.0
  %678 = vmatpush1.msra.mxu0 %v182
  %679 = vmatprep.subr.mxu0 0.0
  %680 = vmatpush1.msra.mxu0 %v177
  %681 = vmatprep.subr.mxu0 0.0
  %682 = vmatpush1.msra.mxu0 %v172
  %683 = vmatprep.subr.mxu0 0.0
  %684 = vmatpush1.msra.mxu0 %v167
  %685 = vmatprep.subr.mxu0 0.0
  %686 = vmatpush1.msra.mxu0 %v162
  %687 = vmatprep.subr.mxu0 0.0
  %688 = vmatpush2.msra.mxu0 0.0
  %689 = vmatprep.subr.mxu0 0.0
  %690 = vmatpush2.msra.mxu0 0.0
  %691 = vmatprep.subr.mxu0 0.0
  %692 = vmatpush2.msra.mxu0 0.0
  %693 = vmatprep.subr.mxu0 0.0
  %694 = vmatpush2.msra.mxu0 0.0
  %695 = vmatprep.subr.mxu0 0.0
  %696 = vmatpush2.msra.mxu0 0.0
  %697 = vmatprep.subr.mxu0 0.0
  %698 = vmatpush2.msra.mxu0 0.0
  %699 = vmatprep.subr.mxu0 0.0
  %700 = vmatpush2.msra.mxu0 0.0
  %701 = vmatprep.subr.mxu0 0.0
  %702 = vmatpush2.msra.mxu0 0.0
  %703 = vmatprep.subr.mxu0 0.0
  %704 = vmatpush2.msra.mxu0 0.0
  %705 = vmatprep.subr.mxu0 0.0
  %706 = vmatpush2.msra.mxu0 0.0
  %707 = vmatprep.subr.mxu0 0.0
  %708 = vmatpush2.msra.mxu0 0.0
  %709 = vmatprep.subr.mxu0 0.0
  %710 = vmatpush2.msra.mxu0 0.0
  %711 = vmatprep.subr.mxu0 0.0
  %712 = vmatpush2.msra.mxu0 0.0
  %713 = vmatprep.subr.mxu0 0.0
  %714 = vmatpush2.msra.mxu0 0.0
  %715 = vmatprep.subr.mxu0 0.0
  %716 = vmatpush2.msra.mxu0 0.0
  %717 = vmatprep.subr.mxu0 0.0
  %718 = vmatpush2.msra.mxu0 0.0
  %719 = vmatprep.mubr.f32.mxu0 0.0
  %720 = vmatmul.mubr.f32.gmra.mxu0 %v607
  %v721 = vpop.f32.mrf.mxu0
  %v722 = vadd.f32 0.0, %v721
  %v723 = vpop.f32.mrf.mxu0
  %724 = vmatprep.mubr.f32.mxu0 0.0
  %725 = vmatmul.mubr.f32.gmra.mxu0 %v608
  %v726 = vpop.f32.mrf.mxu0
  %v727 = vadd.f32 0.0, %v726
  %v728 = vpop.f32.mrf.mxu0
  %729 = vmatprep.mubr.f32.mxu0 0.0
  %730 = vmatmul.mubr.f32.gmra.mxu0 %v609
  %v731 = vpop.f32.mrf.mxu0
  %v732 = vadd.f32 0.0, %v731
  %v733 = vpop.f32.mrf.mxu0
  %734 = vmatprep.mubr.f32.mxu0 0.0
  %735 = vmatmul.mubr.f32.gmra.mxu0 %v610
  %v736 = vpop.f32.mrf.mxu0
  %v737 = vadd.f32 0.0, %v736
  %v738 = vpop.f32.mrf.mxu0
  %739 = vmatprep.mubr.f32.mxu0 0.0
  %740 = vmatmul.mubr.f32.gmra.mxu0 %v611
  %v741 = vpop.f32.mrf.mxu0
  %v742 = vadd.f32 0.0, %v741
  %v743 = vpop.f32.mrf.mxu0
  %744 = vmatprep.mubr.f32.mxu0 0.0
  %745 = vmatmul.mubr.f32.gmra.mxu0 %v612
  %v746 = vpop.f32.mrf.mxu0
  %v747 = vadd.f32 0.0, %v746
  %v748 = vpop.f32.mrf.mxu0
  %749 = vmatprep.mubr.f32.mxu0 0.0
  %750 = vmatmul.mubr.f32.gmra.mxu0 %v613
  %v751 = vpop.f32.mrf.mxu0
  %v752 = vadd.f32 0.0, %v751
  %v753 = vpop.f32.mrf.mxu0
  %754 = vmatprep.mubr.f32.mxu0 0.0
  %755 = vmatmul.mubr.f32.gmra.mxu0 %v614
  %v756 = vpop.f32.mrf.mxu0
  %v757 = vadd.f32 0.0, %v756
  %v758 = vpop.f32.mrf.mxu0
  %759 = vmatprep.mubr.f32.mxu0 0.0
  %760 = vmatmul.mubr.f32.gmra.mxu0 %v615
  %v761 = vpop.f32.mrf.mxu0
  %v762 = vadd.f32 0.0, %v761
  %v763 = vpop.f32.mrf.mxu0
  %764 = vmatprep.mubr.f32.mxu0 0.0
  %765 = vmatmul.mubr.f32.gmra.mxu0 %v616
  %v766 = vpop.f32.mrf.mxu0
  %v767 = vadd.f32 0.0, %v766
  %v768 = vpop.f32.mrf.mxu0
  %769 = vmatprep.mubr.f32.mxu0 0.0
  %770 = vmatmul.mubr.f32.gmra.mxu0 %v617
  %v771 = vpop.f32.mrf.mxu0
  %v772 = vadd.f32 0.0, %v771
  %v773 = vpop.f32.mrf.mxu0
  %774 = vmatprep.mubr.f32.mxu0 0.0
  %775 = vmatmul.mubr.f32.gmra.mxu0 %v618
  %v776 = vpop.f32.mrf.mxu0
  %v777 = vadd.f32 0.0, %v776
  %v778 = vpop.f32.mrf.mxu0
  %779 = vmatprep.mubr.f32.mxu0 0.0
  %780 = vmatmul.mubr.f32.gmra.mxu0 %v619
  %v781 = vpop.f32.mrf.mxu0
  %v782 = vadd.f32 0.0, %v781
  %v783 = vpop.f32.mrf.mxu0
  %784 = vmatprep.mubr.f32.mxu0 0.0
  %785 = vmatmul.mubr.f32.gmra.mxu0 %v620
  %v786 = vpop.f32.mrf.mxu0
  %v787 = vadd.f32 0.0, %v786
  %v788 = vpop.f32.mrf.mxu0
  %789 = vmatprep.mubr.f32.mxu0 0.0
  %790 = vmatmul.mubr.f32.gmra.mxu0 %v621
  %v791 = vpop.f32.mrf.mxu0
  %v792 = vadd.f32 0.0, %v791
  %v793 = vpop.f32.mrf.mxu0
  %794 = vmatprep.mubr.f32.mxu0 0.0
  %795 = vmatmul.mubr.f32.gmra.mxu0 %v622
  %v796 = vpop.f32.mrf.mxu0
  %v797 = vadd.f32 0.0, %v796
  %v798 = vpop.f32.mrf.mxu0
  %799 = vdwg.mxu0
  %v800 = vadd.f32 %v624, 1e-16
  %v801 = vadd.f32 %v626, 1e-16
  %v802 = vadd.f32 %v628, 1e-16
  %v803 = vadd.f32 %v630, 1e-16
  %v804 = vadd.f32 %v632, 1e-16
  %v805 = vadd.f32 %v634, 1e-16
  %v806 = vadd.f32 %v636, 1e-16
  %v807 = vadd.f32 %v638, 1e-16
  %v808 = vadd.f32 %v640, 1e-16
  %v809 = vadd.f32 %v642, 1e-16
  %v810 = vadd.f32 %v644, 1e-16
  %v811 = vadd.f32 %v646, 1e-16
  %v812 = vadd.f32 %v648, 1e-16
  %v813 = vadd.f32 %v650, 1e-16
  %v814 = vadd.f32 %v652, 1e-16
  %v815 = vadd.f32 %v654, 1e-16
  %v816 = vrcp.pop %v800
  %v817 = vrcp.pop %v801
  %v818 = vrcp.pop %v802
  %v819 = vrcp.pop %v803
  %v820 = vrcp.pop %v804
  %v821 = vrcp.pop %v805
  %v822 = vrcp.pop %v806
  %v823 = vrcp.pop %v807
  %v824 = vrcp.pop %v808
  %v825 = vrcp.pop %v809
  %v826 = vrcp.pop %v810
  %v827 = vrcp.pop %v811
  %v828 = vrcp.pop %v812
  %v829 = vrcp.pop %v813
  %v830 = vrcp.pop %v814
  %v831 = vrcp.pop %v815
  %v832 = vmul.f32 %v722, %v816
  %v833 = vmul.f32 %v727, %v817
  %v834 = vmul.f32 %v732, %v818
  %v835 = vmul.f32 %v737, %v819
  %v836 = vmul.f32 %v742, %v820
  %v837 = vmul.f32 %v747, %v821
  %v838 = vmul.f32 %v752, %v822
  %v839 = vmul.f32 %v757, %v823
  %v840 = vmul.f32 %v762, %v824
  %v841 = vmul.f32 %v767, %v825
  %v842 = vmul.f32 %v772, %v826
  %v843 = vmul.f32 %v777, %v827
  %v844 = vmul.f32 %v782, %v828
  %v845 = vmul.f32 %v787, %v829
  %v846 = vmul.f32 %v792, %v830
  %v847 = vmul.f32 %v797, %v831
  %864 = vrot.lane.b32.xlu0 %v162, 64
  %v865 = vpop.permute.xlu0 %864
  %866 = vrot.lane.b32.xlu0 %v167, 64
  %v867 = vpop.permute.xlu0 %866
  %868 = vrot.lane.b32.xlu0 %v172, 64
  %v869 = vpop.permute.xlu0 %868
  %870 = vrot.lane.b32.xlu0 %v177, 64
  %v871 = vpop.permute.xlu0 %870
  %872 = vrot.lane.b32.xlu0 %v182, 64
  %v873 = vpop.permute.xlu0 %872
  %874 = vrot.lane.b32.xlu0 %v187, 64
  %v875 = vpop.permute.xlu0 %874
  %876 = vrot.lane.b32.xlu0 %v192, 64
  %v877 = vpop.permute.xlu0 %876
  %878 = vrot.lane.b32.xlu0 %v197, 64
  %v879 = vpop.permute.xlu0 %878
  %880 = vrot.lane.b32.xlu0 %v202, 64
  %v881 = vpop.permute.xlu0 %880
  %882 = vrot.lane.b32.xlu0 %v207, 64
  %v883 = vpop.permute.xlu0 %882
  %884 = vrot.lane.b32.xlu0 %v212, 64
  %v885 = vpop.permute.xlu0 %884
  %886 = vrot.lane.b32.xlu0 %v217, 64
  %v887 = vpop.permute.xlu0 %886
  %888 = vrot.lane.b32.xlu0 %v222, 64
  %v889 = vpop.permute.xlu0 %888
  %890 = vrot.lane.b32.xlu0 %v227, 64
  %v891 = vpop.permute.xlu0 %890
  %892 = vrot.lane.b32.xlu0 %v232, 64
  %v893 = vpop.permute.xlu0 %892
  %894 = vrot.lane.b32.xlu0 %v237, 64
  %v895 = vpop.permute.xlu0 %894
  %v912 = vadd.f32 %v832, %v865
  %v913 = vadd.f32 %v833, %v867
  %v914 = vadd.f32 %v834, %v869
  %v915 = vadd.f32 %v835, %v871
  %v916 = vadd.f32 %v836, %v873
  %v917 = vadd.f32 %v837, %v875
  %v918 = vadd.f32 %v838, %v877
  %v919 = vadd.f32 %v839, %v879
  %v920 = vadd.f32 %v840, %v881
  %v921 = vadd.f32 %v841, %v883
  %v922 = vadd.f32 %v842, %v885
  %v923 = vadd.f32 %v843, %v887
  %v924 = vadd.f32 %v844, %v889
  %v925 = vadd.f32 %v845, %v891
  %v926 = vadd.f32 %v846, %v893
  %v927 = vadd.f32 %v847, %v895
  %v928 = vlaneseq
  %v929 = vshrl.u32 %v928, 7
  %v930 = vsub.s32 1, %v929
  %v931 = vrot.slane %v256, %v930
  %933 = vrot.lane.b32.xlu0 %v931, 16
  %v934 = vpop.permute.xlu0 %933
  %v936 = vmul.f32 %v162, %v934
  %v937 = vmul.f32 %v167, %v934
  %v938 = vmul.f32 %v172, %v934
  %v939 = vmul.f32 %v177, %v934
  %v940 = vmul.f32 %v182, %v934
  %v941 = vmul.f32 %v187, %v934
  %v942 = vmul.f32 %v192, %v934
  %v943 = vmul.f32 %v197, %v934
  %v944 = vmul.f32 %v202, %v934
  %v945 = vmul.f32 %v207, %v934
  %v946 = vmul.f32 %v212, %v934
  %v947 = vmul.f32 %v217, %v934
  %v948 = vmul.f32 %v222, %v934
  %v949 = vmul.f32 %v227, %v934
  %v950 = vmul.f32 %v232, %v934
  %v951 = vmul.f32 %v237, %v934
  %968 = vrot.lane.b32.xlu0 %v936, 112
  %v969 = vpop.permute.xlu0 %968
  %970 = vrot.lane.b32.xlu0 %v937, 112
  %v971 = vpop.permute.xlu0 %970
  %972 = vrot.lane.b32.xlu0 %v938, 112
  %v973 = vpop.permute.xlu0 %972
  %974 = vrot.lane.b32.xlu0 %v939, 112
  %v975 = vpop.permute.xlu0 %974
  %976 = vrot.lane.b32.xlu0 %v940, 112
  %v977 = vpop.permute.xlu0 %976
  %978 = vrot.lane.b32.xlu0 %v941, 112
  %v979 = vpop.permute.xlu0 %978
  %980 = vrot.lane.b32.xlu0 %v942, 112
  %v981 = vpop.permute.xlu0 %980
  %982 = vrot.lane.b32.xlu0 %v943, 112
  %v983 = vpop.permute.xlu0 %982
  %984 = vrot.lane.b32.xlu0 %v944, 112
  %v985 = vpop.permute.xlu0 %984
  %986 = vrot.lane.b32.xlu0 %v945, 112
  %v987 = vpop.permute.xlu0 %986
  %988 = vrot.lane.b32.xlu0 %v946, 112
  %v989 = vpop.permute.xlu0 %988
  %990 = vrot.lane.b32.xlu0 %v947, 112
  %v991 = vpop.permute.xlu0 %990
  %992 = vrot.lane.b32.xlu0 %v948, 112
  %v993 = vpop.permute.xlu0 %992
  %994 = vrot.lane.b32.xlu0 %v949, 112
  %v995 = vpop.permute.xlu0 %994
  %996 = vrot.lane.b32.xlu0 %v950, 112
  %v997 = vpop.permute.xlu0 %996
  %998 = vrot.lane.b32.xlu0 %v951, 112
  %v999 = vpop.permute.xlu0 %998
  %v1016 = vsel %vm278, %v969, 0.0
  %1017 = vadd.xlane.f32.xlu0 %v1016
  %v1018 = vpop.xlane.xlu0 %1017
  %v1019 = vsel %vm278, %v971, 0.0
  %1020 = vadd.xlane.f32.xlu0 %v1019
  %v1021 = vpop.xlane.xlu0 %1020
  %v1022 = vsel %vm278, %v973, 0.0
  %1023 = vadd.xlane.f32.xlu0 %v1022
  %v1024 = vpop.xlane.xlu0 %1023
  %v1025 = vsel %vm278, %v975, 0.0
  %1026 = vadd.xlane.f32.xlu0 %v1025
  %v1027 = vpop.xlane.xlu0 %1026
  %v1028 = vsel %vm278, %v977, 0.0
  %1029 = vadd.xlane.f32.xlu0 %v1028
  %v1030 = vpop.xlane.xlu0 %1029
  %v1031 = vsel %vm278, %v979, 0.0
  %1032 = vadd.xlane.f32.xlu0 %v1031
  %v1033 = vpop.xlane.xlu0 %1032
  %v1034 = vsel %vm278, %v981, 0.0
  %1035 = vadd.xlane.f32.xlu0 %v1034
  %v1036 = vpop.xlane.xlu0 %1035
  %v1037 = vsel %vm278, %v983, 0.0
  %1038 = vadd.xlane.f32.xlu0 %v1037
  %v1039 = vpop.xlane.xlu0 %1038
  %v1040 = vsel %vm278, %v985, 0.0
  %1041 = vadd.xlane.f32.xlu0 %v1040
  %v1042 = vpop.xlane.xlu0 %1041
  %v1043 = vsel %vm278, %v987, 0.0
  %1044 = vadd.xlane.f32.xlu0 %v1043
  %v1045 = vpop.xlane.xlu0 %1044
  %v1046 = vsel %vm278, %v989, 0.0
  %1047 = vadd.xlane.f32.xlu0 %v1046
  %v1048 = vpop.xlane.xlu0 %1047
  %v1049 = vsel %vm278, %v991, 0.0
  %1050 = vadd.xlane.f32.xlu0 %v1049
  %v1051 = vpop.xlane.xlu0 %1050
  %v1052 = vsel %vm278, %v993, 0.0
  %1053 = vadd.xlane.f32.xlu0 %v1052
  %v1054 = vpop.xlane.xlu0 %1053
  %v1055 = vsel %vm278, %v995, 0.0
  %1056 = vadd.xlane.f32.xlu0 %v1055
  %v1057 = vpop.xlane.xlu0 %1056
  %v1058 = vsel %vm278, %v997, 0.0
  %1059 = vadd.xlane.f32.xlu0 %v1058
  %v1060 = vpop.xlane.xlu0 %1059
  %v1061 = vsel %vm278, %v999, 0.0
  %1062 = vadd.xlane.f32.xlu0 %v1061
  %v1063 = vpop.xlane.xlu0 %1062
  %v1064 = vlaneseq
  %v1065 = vshrl.u32 %v1064, 7
  %v1066 = vsub.s32 1, %v1065
  %v1067 = vrot.slane %v257, %v1066
  %1069 = vrot.lane.b32.xlu0 %v1067, 16
  %v1070 = vpop.permute.xlu0 %1069
  %v1072 = vmul.f32 %v162, %v1070
  %v1073 = vmul.f32 %v167, %v1070
  %v1074 = vmul.f32 %v172, %v1070
  %v1075 = vmul.f32 %v177, %v1070
  %v1076 = vmul.f32 %v182, %v1070
  %v1077 = vmul.f32 %v187, %v1070
  %v1078 = vmul.f32 %v192, %v1070
  %v1079 = vmul.f32 %v197, %v1070
  %v1080 = vmul.f32 %v202, %v1070
  %v1081 = vmul.f32 %v207, %v1070
  %v1082 = vmul.f32 %v212, %v1070
  %v1083 = vmul.f32 %v217, %v1070
  %v1084 = vmul.f32 %v222, %v1070
  %v1085 = vmul.f32 %v227, %v1070
  %v1086 = vmul.f32 %v232, %v1070
  %v1087 = vmul.f32 %v237, %v1070
  %1104 = vrot.lane.b32.xlu0 %v1072, 112
  %v1105 = vpop.permute.xlu0 %1104
  %1106 = vrot.lane.b32.xlu0 %v1073, 112
  %v1107 = vpop.permute.xlu0 %1106
  %1108 = vrot.lane.b32.xlu0 %v1074, 112
  %v1109 = vpop.permute.xlu0 %1108
  %1110 = vrot.lane.b32.xlu0 %v1075, 112
  %v1111 = vpop.permute.xlu0 %1110
  %1112 = vrot.lane.b32.xlu0 %v1076, 112
  %v1113 = vpop.permute.xlu0 %1112
  %1114 = vrot.lane.b32.xlu0 %v1077, 112
  %v1115 = vpop.permute.xlu0 %1114
  %1116 = vrot.lane.b32.xlu0 %v1078, 112
  %v1117 = vpop.permute.xlu0 %1116
  %1118 = vrot.lane.b32.xlu0 %v1079, 112
  %v1119 = vpop.permute.xlu0 %1118
  %1120 = vrot.lane.b32.xlu0 %v1080, 112
  %v1121 = vpop.permute.xlu0 %1120
  %1122 = vrot.lane.b32.xlu0 %v1081, 112
  %v1123 = vpop.permute.xlu0 %1122
  %1124 = vrot.lane.b32.xlu0 %v1082, 112
  %v1125 = vpop.permute.xlu0 %1124
  %1126 = vrot.lane.b32.xlu0 %v1083, 112
  %v1127 = vpop.permute.xlu0 %1126
  %1128 = vrot.lane.b32.xlu0 %v1084, 112
  %v1129 = vpop.permute.xlu0 %1128
  %1130 = vrot.lane.b32.xlu0 %v1085, 112
  %v1131 = vpop.permute.xlu0 %1130
  %1132 = vrot.lane.b32.xlu0 %v1086, 112
  %v1133 = vpop.permute.xlu0 %1132
  %1134 = vrot.lane.b32.xlu0 %v1087, 112
  %v1135 = vpop.permute.xlu0 %1134
  %v1152 = vsel %vm278, %v1105, 0.0
  %1153 = vadd.xlane.f32.xlu0 %v1152
  %v1154 = vpop.xlane.xlu0 %1153
  %v1155 = vsel %vm278, %v1107, 0.0
  %1156 = vadd.xlane.f32.xlu0 %v1155
  %v1157 = vpop.xlane.xlu0 %1156
  %v1158 = vsel %vm278, %v1109, 0.0
  %1159 = vadd.xlane.f32.xlu0 %v1158
  %v1160 = vpop.xlane.xlu0 %1159
  %v1161 = vsel %vm278, %v1111, 0.0
  %1162 = vadd.xlane.f32.xlu0 %v1161
  %v1163 = vpop.xlane.xlu0 %1162
  %v1164 = vsel %vm278, %v1113, 0.0
  %1165 = vadd.xlane.f32.xlu0 %v1164
  %v1166 = vpop.xlane.xlu0 %1165
  %v1167 = vsel %vm278, %v1115, 0.0
  %1168 = vadd.xlane.f32.xlu0 %v1167
  %v1169 = vpop.xlane.xlu0 %1168
  %v1170 = vsel %vm278, %v1117, 0.0
  %1171 = vadd.xlane.f32.xlu0 %v1170
  %v1172 = vpop.xlane.xlu0 %1171
  %v1173 = vsel %vm278, %v1119, 0.0
  %1174 = vadd.xlane.f32.xlu0 %v1173
  %v1175 = vpop.xlane.xlu0 %1174
  %v1176 = vsel %vm278, %v1121, 0.0
  %1177 = vadd.xlane.f32.xlu0 %v1176
  %v1178 = vpop.xlane.xlu0 %1177
  %v1179 = vsel %vm278, %v1123, 0.0
  %1180 = vadd.xlane.f32.xlu0 %v1179
  %v1181 = vpop.xlane.xlu0 %1180
  %v1182 = vsel %vm278, %v1125, 0.0
  %1183 = vadd.xlane.f32.xlu0 %v1182
  %v1184 = vpop.xlane.xlu0 %1183
  %v1185 = vsel %vm278, %v1127, 0.0
  %1186 = vadd.xlane.f32.xlu0 %v1185
  %v1187 = vpop.xlane.xlu0 %1186
  %v1188 = vsel %vm278, %v1129, 0.0
  %1189 = vadd.xlane.f32.xlu0 %v1188
  %v1190 = vpop.xlane.xlu0 %1189
  %v1191 = vsel %vm278, %v1131, 0.0
  %1192 = vadd.xlane.f32.xlu0 %v1191
  %v1193 = vpop.xlane.xlu0 %1192
  %v1194 = vsel %vm278, %v1133, 0.0
  %1195 = vadd.xlane.f32.xlu0 %v1194
  %v1196 = vpop.xlane.xlu0 %1195
  %v1197 = vsel %vm278, %v1135, 0.0
  %1198 = vadd.xlane.f32.xlu0 %v1197
  %v1199 = vpop.xlane.xlu0 %1198
  %1200 = vxpose.xlu0.b32.start [1/16] %v1018, 128
  %1201 = vxpose.xlu0.b32.cont [2/16] %v1021, 128
  %1202 = vxpose.xlu0.b32.cont [3/16] %v1024, 128
  %1203 = vxpose.xlu0.b32.cont [4/16] %v1027, 128
  %1204 = vxpose.xlu0.b32.cont [5/16] %v1030, 128
  %1205 = vxpose.xlu0.b32.cont [6/16] %v1033, 128
  %1206 = vxpose.xlu0.b32.cont [7/16] %v1036, 128
  %1207 = vxpose.xlu0.b32.cont [8/16] %v1039, 128
  %1208 = vxpose.xlu0.b32.cont [9/16] %v1042, 128
  %1209 = vxpose.xlu0.b32.cont [10/16] %v1045, 128
  %1210 = vxpose.xlu0.b32.cont [11/16] %v1048, 128
  %1211 = vxpose.xlu0.b32.cont [12/16] %v1051, 128
  %1212 = vxpose.xlu0.b32.cont [13/16] %v1054, 128
  %1213 = vxpose.xlu0.b32.cont [14/16] %v1057, 128
  %1214 = vxpose.xlu0.b32.cont [15/16] %v1060, 128
  %1215 = vxpose.xlu0.b32.end [16/16] %v1063, 128
  %v1216 = vpop.trf.xlu0
  %v1217 = vpop.trf.xlu0
  %v1218 = vpop.trf.xlu0
  %v1219 = vpop.trf.xlu0
  %v1220 = vpop.trf.xlu0
  %v1221 = vpop.trf.xlu0
  %v1222 = vpop.trf.xlu0
  %v1223 = vpop.trf.xlu0
  %v1224 = vpop.trf.xlu0
  %v1225 = vpop.trf.xlu0
  %v1226 = vpop.trf.xlu0
  %v1227 = vpop.trf.xlu0
  %v1228 = vpop.trf.xlu0
  %v1229 = vpop.trf.xlu0
  %v1230 = vpop.trf.xlu0
  %v1231 = vpop.trf.xlu0
  %v1232 = vlaneseq
  %v1233 = vshrl.u32 %v1232, 7
  %v1234 = vsub.s32 0, %v1233
  %v1235 = vrot.slane %v1216, %v1234
  %v1236 = vadd.f32 %v1154, %v1235
  %v1237 = vadd.f32 %v1157, %v1235
  %v1238 = vadd.f32 %v1160, %v1235
  %v1239 = vadd.f32 %v1163, %v1235
  %v1240 = vadd.f32 %v1166, %v1235
  %v1241 = vadd.f32 %v1169, %v1235
  %v1242 = vadd.f32 %v1172, %v1235
  %v1243 = vadd.f32 %v1175, %v1235
  %v1244 = vadd.f32 %v1178, %v1235
  %v1245 = vadd.f32 %v1181, %v1235
  %v1246 = vadd.f32 %v1184, %v1235
  %v1247 = vadd.f32 %v1187, %v1235
  %v1248 = vadd.f32 %v1190, %v1235
  %v1249 = vadd.f32 %v1193, %v1235
  %v1250 = vadd.f32 %v1196, %v1235
  %v1251 = vadd.f32 %v1199, %v1235
  %vm1252 = vcmp.gt.f32.partialorder %v1236, 0.0
  %vm1253 = vcmp.gt.f32.partialorder %v1237, 0.0
  %vm1254 = vcmp.gt.f32.partialorder %v1238, 0.0
  %vm1255 = vcmp.gt.f32.partialorder %v1239, 0.0
  %vm1256 = vcmp.gt.f32.partialorder %v1240, 0.0
  %vm1257 = vcmp.gt.f32.partialorder %v1241, 0.0
  %vm1258 = vcmp.gt.f32.partialorder %v1242, 0.0
  %vm1259 = vcmp.gt.f32.partialorder %v1243, 0.0
  %vm1260 = vcmp.gt.f32.partialorder %v1244, 0.0
  %vm1261 = vcmp.gt.f32.partialorder %v1245, 0.0
  %vm1262 = vcmp.gt.f32.partialorder %v1246, 0.0
  %vm1263 = vcmp.gt.f32.partialorder %v1247, 0.0
  %vm1264 = vcmp.gt.f32.partialorder %v1248, 0.0
  %vm1265 = vcmp.gt.f32.partialorder %v1249, 0.0
  %vm1266 = vcmp.gt.f32.partialorder %v1250, 0.0
  %vm1267 = vcmp.gt.f32.partialorder %v1251, 0.0
  %v1268 = vmul.f32 %v1236, 0.2
  %v1269 = vmul.f32 %v1237, 0.2
  %v1270 = vmul.f32 %v1238, 0.2
  %v1271 = vmul.f32 %v1239, 0.2
  %v1272 = vmul.f32 %v1240, 0.2
  %v1273 = vmul.f32 %v1241, 0.2
  %v1274 = vmul.f32 %v1242, 0.2
  %v1275 = vmul.f32 %v1243, 0.2
  %v1276 = vmul.f32 %v1244, 0.2
  %v1277 = vmul.f32 %v1245, 0.2
  %v1278 = vmul.f32 %v1246, 0.2
  %v1279 = vmul.f32 %v1247, 0.2
  %v1280 = vmul.f32 %v1248, 0.2
  %v1281 = vmul.f32 %v1249, 0.2
  %v1282 = vmul.f32 %v1250, 0.2
  %v1283 = vmul.f32 %v1251, 0.2
  %v1284 = vsel %vm1252, %v1236, %v1268
  %v1285 = vsel %vm1253, %v1237, %v1269
  %v1286 = vsel %vm1254, %v1238, %v1270
  %v1287 = vsel %vm1255, %v1239, %v1271
  %v1288 = vsel %vm1256, %v1240, %v1272
  %v1289 = vsel %vm1257, %v1241, %v1273
  %v1290 = vsel %vm1258, %v1242, %v1274
  %v1291 = vsel %vm1259, %v1243, %v1275
  %v1292 = vsel %vm1260, %v1244, %v1276
  %v1293 = vsel %vm1261, %v1245, %v1277
  %v1294 = vsel %vm1262, %v1246, %v1278
  %v1295 = vsel %vm1263, %v1247, %v1279
  %v1296 = vsel %vm1264, %v1248, %v1280
  %v1297 = vsel %vm1265, %v1249, %v1281
  %v1298 = vsel %vm1266, %v1250, %v1282
  %v1299 = vsel %vm1267, %v1251, %v1283
  %v1300 = vsel %vm495, %v1284, -1e+30
  %v1301 = vsel %vm496, %v1285, -1e+30
  %v1302 = vsel %vm497, %v1286, -1e+30
  %v1303 = vsel %vm498, %v1287, -1e+30
  %v1304 = vsel %vm499, %v1288, -1e+30
  %v1305 = vsel %vm500, %v1289, -1e+30
  %v1306 = vsel %vm501, %v1290, -1e+30
  %v1307 = vsel %vm502, %v1291, -1e+30
  %v1308 = vsel %vm503, %v1292, -1e+30
  %v1309 = vsel %vm504, %v1293, -1e+30
  %v1310 = vsel %vm505, %v1294, -1e+30
  %v1311 = vsel %vm506, %v1295, -1e+30
  %v1312 = vsel %vm507, %v1296, -1e+30
  %v1313 = vsel %vm508, %v1297, -1e+30
  %v1314 = vsel %vm509, %v1298, -1e+30
  %v1315 = vsel %vm510, %v1299, -1e+30
  %1316 = vmax.xlane.f32.xlu0 %v1300
  %v1317 = vpop.xlane.xlu0 %1316
  %1318 = vmax.xlane.f32.xlu0 %v1301
  %v1319 = vpop.xlane.xlu0 %1318
  %1320 = vmax.xlane.f32.xlu0 %v1302
  %v1321 = vpop.xlane.xlu0 %1320
  %1322 = vmax.xlane.f32.xlu0 %v1303
  %v1323 = vpop.xlane.xlu0 %1322
  %1324 = vmax.xlane.f32.xlu0 %v1304
  %v1325 = vpop.xlane.xlu0 %1324
  %1326 = vmax.xlane.f32.xlu0 %v1305
  %v1327 = vpop.xlane.xlu0 %1326
  %1328 = vmax.xlane.f32.xlu0 %v1306
  %v1329 = vpop.xlane.xlu0 %1328
  %1330 = vmax.xlane.f32.xlu0 %v1307
  %v1331 = vpop.xlane.xlu0 %1330
  %1332 = vmax.xlane.f32.xlu0 %v1308
  %v1333 = vpop.xlane.xlu0 %1332
  %1334 = vmax.xlane.f32.xlu0 %v1309
  %v1335 = vpop.xlane.xlu0 %1334
  %1336 = vmax.xlane.f32.xlu0 %v1310
  %v1337 = vpop.xlane.xlu0 %1336
  %1338 = vmax.xlane.f32.xlu0 %v1311
  %v1339 = vpop.xlane.xlu0 %1338
  %1340 = vmax.xlane.f32.xlu0 %v1312
  %v1341 = vpop.xlane.xlu0 %1340
  %1342 = vmax.xlane.f32.xlu0 %v1313
  %v1343 = vpop.xlane.xlu0 %1342
  %1344 = vmax.xlane.f32.xlu0 %v1314
  %v1345 = vpop.xlane.xlu0 %1344
  %1346 = vmax.xlane.f32.xlu0 %v1315
  %v1347 = vpop.xlane.xlu0 %1346
  %v1348 = vsub.f32 %v1300, %v1317
  %v1349 = vsub.f32 %v1301, %v1319
  %v1350 = vsub.f32 %v1302, %v1321
  %v1351 = vsub.f32 %v1303, %v1323
  %v1352 = vsub.f32 %v1304, %v1325
  %v1353 = vsub.f32 %v1305, %v1327
  %v1354 = vsub.f32 %v1306, %v1329
  %v1355 = vsub.f32 %v1307, %v1331
  %v1356 = vsub.f32 %v1308, %v1333
  %v1357 = vsub.f32 %v1309, %v1335
  %v1358 = vsub.f32 %v1310, %v1337
  %v1359 = vsub.f32 %v1311, %v1339
  %v1360 = vsub.f32 %v1312, %v1341
  %v1361 = vsub.f32 %v1313, %v1343
  %v1362 = vsub.f32 %v1314, %v1345
  %v1363 = vsub.f32 %v1315, %v1347
  %v1364 = vmul.f32 %v1348, 1.442695
  %v1365 = vpow.pop %v1364
  %v1366 = vmul.f32 %v1349, 1.442695
  %v1367 = vpow.pop %v1366
  %v1368 = vmul.f32 %v1350, 1.442695
  %v1369 = vpow.pop %v1368
  %v1370 = vmul.f32 %v1351, 1.442695
  %v1371 = vpow.pop %v1370
  %v1372 = vmul.f32 %v1352, 1.442695
  %v1373 = vpow.pop %v1372
  %v1374 = vmul.f32 %v1353, 1.442695
  %v1375 = vpow.pop %v1374
  %v1376 = vmul.f32 %v1354, 1.442695
  %v1377 = vpow.pop %v1376
  %v1378 = vmul.f32 %v1355, 1.442695
  %v1379 = vpow.pop %v1378
  %v1380 = vmul.f32 %v1356, 1.442695
  %v1381 = vpow.pop %v1380
  %v1382 = vmul.f32 %v1357, 1.442695
  %v1383 = vpow.pop %v1382
  %v1384 = vmul.f32 %v1358, 1.442695
  %v1385 = vpow.pop %v1384
  %v1386 = vmul.f32 %v1359, 1.442695
  %v1387 = vpow.pop %v1386
  %v1388 = vmul.f32 %v1360, 1.442695
  %v1389 = vpow.pop %v1388
  %v1390 = vmul.f32 %v1361, 1.442695
  %v1391 = vpow.pop %v1390
  %v1392 = vmul.f32 %v1362, 1.442695
  %v1393 = vpow.pop %v1392
  %v1394 = vmul.f32 %v1363, 1.442695
  %v1395 = vpow.pop %v1394
  %v1396 = vmul.f32 %v1365, %v240
  %v1397 = vmul.f32 %v1367, %v241
  %v1398 = vmul.f32 %v1369, %v242
  %v1399 = vmul.f32 %v1371, %v243
  %v1400 = vmul.f32 %v1373, %v244
  %v1401 = vmul.f32 %v1375, %v245
  %v1402 = vmul.f32 %v1377, %v246
  %v1403 = vmul.f32 %v1379, %v247
  %v1404 = vmul.f32 %v1381, %v248
  %v1405 = vmul.f32 %v1383, %v249
  %v1406 = vmul.f32 %v1385, %v250
  %v1407 = vmul.f32 %v1387, %v251
  %v1408 = vmul.f32 %v1389, %v252
  %v1409 = vmul.f32 %v1391, %v253
  %v1410 = vmul.f32 %v1393, %v254
  %v1411 = vmul.f32 %v1395, %v255
  %1412 = vadd.xlane.f32.xlu0 %v1396
  %v1413 = vpop.xlane.xlu0 %1412
  %1414 = vadd.xlane.f32.xlu0 %v1397
  %v1415 = vpop.xlane.xlu0 %1414
  %1416 = vadd.xlane.f32.xlu0 %v1398
  %v1417 = vpop.xlane.xlu0 %1416
  %1418 = vadd.xlane.f32.xlu0 %v1399
  %v1419 = vpop.xlane.xlu0 %1418
  %1420 = vadd.xlane.f32.xlu0 %v1400
  %v1421 = vpop.xlane.xlu0 %1420
  %1422 = vadd.xlane.f32.xlu0 %v1401
  %v1423 = vpop.xlane.xlu0 %1422
  %1424 = vadd.xlane.f32.xlu0 %v1402
  %v1425 = vpop.xlane.xlu0 %1424
  %1426 = vadd.xlane.f32.xlu0 %v1403
  %v1427 = vpop.xlane.xlu0 %1426
  %1428 = vadd.xlane.f32.xlu0 %v1404
  %v1429 = vpop.xlane.xlu0 %1428
  %1430 = vadd.xlane.f32.xlu0 %v1405
  %v1431 = vpop.xlane.xlu0 %1430
  %1432 = vadd.xlane.f32.xlu0 %v1406
  %v1433 = vpop.xlane.xlu0 %1432
  %1434 = vadd.xlane.f32.xlu0 %v1407
  %v1435 = vpop.xlane.xlu0 %1434
  %1436 = vadd.xlane.f32.xlu0 %v1408
  %v1437 = vpop.xlane.xlu0 %1436
  %1438 = vadd.xlane.f32.xlu0 %v1409
  %v1439 = vpop.xlane.xlu0 %1438
  %1440 = vadd.xlane.f32.xlu0 %v1410
  %v1441 = vpop.xlane.xlu0 %1440
  %1442 = vadd.xlane.f32.xlu0 %v1411
  %v1443 = vpop.xlane.xlu0 %1442
  %1444 = vrot.lane.b32.xlu0 %v162, 112
  %v1445 = vpop.permute.xlu0 %1444
  %1446 = vrot.lane.b32.xlu0 %v167, 112
  %v1447 = vpop.permute.xlu0 %1446
  %1448 = vrot.lane.b32.xlu0 %v172, 112
  %v1449 = vpop.permute.xlu0 %1448
  %1450 = vrot.lane.b32.xlu0 %v177, 112
  %v1451 = vpop.permute.xlu0 %1450
  %1452 = vrot.lane.b32.xlu0 %v182, 112
  %v1453 = vpop.permute.xlu0 %1452
  %1454 = vrot.lane.b32.xlu0 %v187, 112
  %v1455 = vpop.permute.xlu0 %1454
  %1456 = vrot.lane.b32.xlu0 %v192, 112
  %v1457 = vpop.permute.xlu0 %1456
  %1458 = vrot.lane.b32.xlu0 %v197, 112
  %v1459 = vpop.permute.xlu0 %1458
  %1460 = vrot.lane.b32.xlu0 %v202, 112
  %v1461 = vpop.permute.xlu0 %1460
  %1462 = vrot.lane.b32.xlu0 %v207, 112
  %v1463 = vpop.permute.xlu0 %1462
  %1464 = vrot.lane.b32.xlu0 %v212, 112
  %v1465 = vpop.permute.xlu0 %1464
  %1466 = vrot.lane.b32.xlu0 %v217, 112
  %v1467 = vpop.permute.xlu0 %1466
  %1468 = vrot.lane.b32.xlu0 %v222, 112
  %v1469 = vpop.permute.xlu0 %1468
  %1470 = vrot.lane.b32.xlu0 %v227, 112
  %v1471 = vpop.permute.xlu0 %1470
  %1472 = vrot.lane.b32.xlu0 %v232, 112
  %v1473 = vpop.permute.xlu0 %1472
  %1474 = vrot.lane.b32.xlu0 %v237, 112
  %v1475 = vpop.permute.xlu0 %1474
  %1492 = vmatprep.subr.mxu0 0.0
  %1493 = vmatpush1.msra.mxu0 %v1475
  %1494 = vmatprep.subr.mxu0 0.0
  %1495 = vmatpush1.msra.mxu0 %v1473
  %1496 = vmatprep.subr.mxu0 0.0
  %1497 = vmatpush1.msra.mxu0 %v1471
  %1498 = vmatprep.subr.mxu0 0.0
  %1499 = vmatpush1.msra.mxu0 %v1469
  %1500 = vmatprep.subr.mxu0 0.0
  %1501 = vmatpush1.msra.mxu0 %v1467
  %1502 = vmatprep.subr.mxu0 0.0
  %1503 = vmatpush1.msra.mxu0 %v1465
  %1504 = vmatprep.subr.mxu0 0.0
  %1505 = vmatpush1.msra.mxu0 %v1463
  %1506 = vmatprep.subr.mxu0 0.0
  %1507 = vmatpush1.msra.mxu0 %v1461
  %1508 = vmatprep.subr.mxu0 0.0
  %1509 = vmatpush1.msra.mxu0 %v1459
  %1510 = vmatprep.subr.mxu0 0.0
  %1511 = vmatpush1.msra.mxu0 %v1457
  %1512 = vmatprep.subr.mxu0 0.0
  %1513 = vmatpush1.msra.mxu0 %v1455
  %1514 = vmatprep.subr.mxu0 0.0
  %1515 = vmatpush1.msra.mxu0 %v1453
  %1516 = vmatprep.subr.mxu0 0.0
  %1517 = vmatpush1.msra.mxu0 %v1451
  %1518 = vmatprep.subr.mxu0 0.0
  %1519 = vmatpush1.msra.mxu0 %v1449
  %1520 = vmatprep.subr.mxu0 0.0
  %1521 = vmatpush1.msra.mxu0 %v1447
  %1522 = vmatprep.subr.mxu0 0.0
  %1523 = vmatpush1.msra.mxu0 %v1445
  %1524 = vmatprep.subr.mxu0 0.0
  %1525 = vmatpush2.msra.mxu0 0.0
  %1526 = vmatprep.subr.mxu0 0.0
  %1527 = vmatpush2.msra.mxu0 0.0
  %1528 = vmatprep.subr.mxu0 0.0
  %1529 = vmatpush2.msra.mxu0 0.0
  %1530 = vmatprep.subr.mxu0 0.0
  %1531 = vmatpush2.msra.mxu0 0.0
  %1532 = vmatprep.subr.mxu0 0.0
  %1533 = vmatpush2.msra.mxu0 0.0
  %1534 = vmatprep.subr.mxu0 0.0
  %1535 = vmatpush2.msra.mxu0 0.0
  %1536 = vmatprep.subr.mxu0 0.0
  %1537 = vmatpush2.msra.mxu0 0.0
  %1538 = vmatprep.subr.mxu0 0.0
  %1539 = vmatpush2.msra.mxu0 0.0
  %1540 = vmatprep.subr.mxu0 0.0
  %1541 = vmatpush2.msra.mxu0 0.0
  %1542 = vmatprep.subr.mxu0 0.0
  %1543 = vmatpush2.msra.mxu0 0.0
  %1544 = vmatprep.subr.mxu0 0.0
  %1545 = vmatpush2.msra.mxu0 0.0
  %1546 = vmatprep.subr.mxu0 0.0
  %1547 = vmatpush2.msra.mxu0 0.0
  %1548 = vmatprep.subr.mxu0 0.0
  %1549 = vmatpush2.msra.mxu0 0.0
  %1550 = vmatprep.subr.mxu0 0.0
  %1551 = vmatpush2.msra.mxu0 0.0
  %1552 = vmatprep.subr.mxu0 0.0
  %1553 = vmatpush2.msra.mxu0 0.0
  %1554 = vmatprep.subr.mxu0 0.0
  %1555 = vmatpush2.msra.mxu0 0.0
  %1556 = vmatprep.mubr.f32.mxu0 0.0
  %1557 = vmatmul.mubr.f32.gmra.mxu0 %v1396
  %v1558 = vpop.f32.mrf.mxu0
  %v1559 = vadd.f32 0.0, %v1558
  %v1560 = vpop.f32.mrf.mxu0
  %1561 = vmatprep.mubr.f32.mxu0 0.0
  %1562 = vmatmul.mubr.f32.gmra.mxu0 %v1397
  %v1563 = vpop.f32.mrf.mxu0
  %v1564 = vadd.f32 0.0, %v1563
  %v1565 = vpop.f32.mrf.mxu0
  %1566 = vmatprep.mubr.f32.mxu0 0.0
  %1567 = vmatmul.mubr.f32.gmra.mxu0 %v1398
  %v1568 = vpop.f32.mrf.mxu0
  %v1569 = vadd.f32 0.0, %v1568
  %v1570 = vpop.f32.mrf.mxu0
  %1571 = vmatprep.mubr.f32.mxu0 0.0
  %1572 = vmatmul.mubr.f32.gmra.mxu0 %v1399
  %v1573 = vpop.f32.mrf.mxu0
  %v1574 = vadd.f32 0.0, %v1573
  %v1575 = vpop.f32.mrf.mxu0
  %1576 = vmatprep.mubr.f32.mxu0 0.0
  %1577 = vmatmul.mubr.f32.gmra.mxu0 %v1400
  %v1578 = vpop.f32.mrf.mxu0
  %v1579 = vadd.f32 0.0, %v1578
  %v1580 = vpop.f32.mrf.mxu0
  %1581 = vmatprep.mubr.f32.mxu0 0.0
  %1582 = vmatmul.mubr.f32.gmra.mxu0 %v1401
  %v1583 = vpop.f32.mrf.mxu0
  %v1584 = vadd.f32 0.0, %v1583
  %v1585 = vpop.f32.mrf.mxu0
  %1586 = vmatprep.mubr.f32.mxu0 0.0
  %1587 = vmatmul.mubr.f32.gmra.mxu0 %v1402
  %v1588 = vpop.f32.mrf.mxu0
  %v1589 = vadd.f32 0.0, %v1588
  %v1590 = vpop.f32.mrf.mxu0
  %1591 = vmatprep.mubr.f32.mxu0 0.0
  %1592 = vmatmul.mubr.f32.gmra.mxu0 %v1403
  %v1593 = vpop.f32.mrf.mxu0
  %v1594 = vadd.f32 0.0, %v1593
  %v1595 = vpop.f32.mrf.mxu0
  %1596 = vmatprep.mubr.f32.mxu0 0.0
  %1597 = vmatmul.mubr.f32.gmra.mxu0 %v1404
  %v1598 = vpop.f32.mrf.mxu0
  %v1599 = vadd.f32 0.0, %v1598
  %v1600 = vpop.f32.mrf.mxu0
  %1601 = vmatprep.mubr.f32.mxu0 0.0
  %1602 = vmatmul.mubr.f32.gmra.mxu0 %v1405
  %v1603 = vpop.f32.mrf.mxu0
  %v1604 = vadd.f32 0.0, %v1603
  %v1605 = vpop.f32.mrf.mxu0
  %1606 = vmatprep.mubr.f32.mxu0 0.0
  %1607 = vmatmul.mubr.f32.gmra.mxu0 %v1406
  %v1608 = vpop.f32.mrf.mxu0
  %v1609 = vadd.f32 0.0, %v1608
  %v1610 = vpop.f32.mrf.mxu0
  %1611 = vmatprep.mubr.f32.mxu0 0.0
  %1612 = vmatmul.mubr.f32.gmra.mxu0 %v1407
  %v1613 = vpop.f32.mrf.mxu0
  %v1614 = vadd.f32 0.0, %v1613
  %v1615 = vpop.f32.mrf.mxu0
  %1616 = vmatprep.mubr.f32.mxu0 0.0
  %1617 = vmatmul.mubr.f32.gmra.mxu0 %v1408
  %v1618 = vpop.f32.mrf.mxu0
  %v1619 = vadd.f32 0.0, %v1618
  %v1620 = vpop.f32.mrf.mxu0
  %1621 = vmatprep.mubr.f32.mxu0 0.0
  %1622 = vmatmul.mubr.f32.gmra.mxu0 %v1409
  %v1623 = vpop.f32.mrf.mxu0
  %v1624 = vadd.f32 0.0, %v1623
  %v1625 = vpop.f32.mrf.mxu0
  %1626 = vmatprep.mubr.f32.mxu0 0.0
  %1627 = vmatmul.mubr.f32.gmra.mxu0 %v1410
  %v1628 = vpop.f32.mrf.mxu0
  %v1629 = vadd.f32 0.0, %v1628
  %v1630 = vpop.f32.mrf.mxu0
  %1631 = vmatprep.mubr.f32.mxu0 0.0
  %1632 = vmatmul.mubr.f32.gmra.mxu0 %v1411
  %v1633 = vpop.f32.mrf.mxu0
  %v1634 = vadd.f32 0.0, %v1633
  %v1635 = vpop.f32.mrf.mxu0
  %1636 = vdwg.mxu0
  %v1637 = vadd.f32 %v1413, 1e-16
  %v1638 = vadd.f32 %v1415, 1e-16
  %v1639 = vadd.f32 %v1417, 1e-16
  %v1640 = vadd.f32 %v1419, 1e-16
  %v1641 = vadd.f32 %v1421, 1e-16
  %v1642 = vadd.f32 %v1423, 1e-16
  %v1643 = vadd.f32 %v1425, 1e-16
  %v1644 = vadd.f32 %v1427, 1e-16
  %v1645 = vadd.f32 %v1429, 1e-16
  %v1646 = vadd.f32 %v1431, 1e-16
  %v1647 = vadd.f32 %v1433, 1e-16
  %v1648 = vadd.f32 %v1435, 1e-16
  %v1649 = vadd.f32 %v1437, 1e-16
  %v1650 = vadd.f32 %v1439, 1e-16
  %v1651 = vadd.f32 %v1441, 1e-16
  %v1652 = vadd.f32 %v1443, 1e-16
  %v1653 = vrcp.pop %v1637
  %v1654 = vrcp.pop %v1638
  %v1655 = vrcp.pop %v1639
  %v1656 = vrcp.pop %v1640
  %v1657 = vrcp.pop %v1641
  %v1658 = vrcp.pop %v1642
  %v1659 = vrcp.pop %v1643
  %v1660 = vrcp.pop %v1644
  %v1661 = vrcp.pop %v1645
  %v1662 = vrcp.pop %v1646
  %v1663 = vrcp.pop %v1647
  %v1664 = vrcp.pop %v1648
  %v1665 = vrcp.pop %v1649
  %v1666 = vrcp.pop %v1650
  %v1667 = vrcp.pop %v1651
  %v1668 = vrcp.pop %v1652
  %v1669 = vmul.f32 %v1559, %v1653
  %v1670 = vmul.f32 %v1564, %v1654
  %v1671 = vmul.f32 %v1569, %v1655
  %v1672 = vmul.f32 %v1574, %v1656
  %v1673 = vmul.f32 %v1579, %v1657
  %v1674 = vmul.f32 %v1584, %v1658
  %v1675 = vmul.f32 %v1589, %v1659
  %v1676 = vmul.f32 %v1594, %v1660
  %v1677 = vmul.f32 %v1599, %v1661
  %v1678 = vmul.f32 %v1604, %v1662
  %v1679 = vmul.f32 %v1609, %v1663
  %v1680 = vmul.f32 %v1614, %v1664
  %v1681 = vmul.f32 %v1619, %v1665
  %v1682 = vmul.f32 %v1624, %v1666
  %v1683 = vmul.f32 %v1629, %v1667
  %v1684 = vmul.f32 %v1634, %v1668
  %1685 = vrot.lane.b32.xlu0 %v162, 48
  %v1686 = vpop.permute.xlu0 %1685
  %1687 = vrot.lane.b32.xlu0 %v167, 48
  %v1688 = vpop.permute.xlu0 %1687
  %1689 = vrot.lane.b32.xlu0 %v172, 48
  %v1690 = vpop.permute.xlu0 %1689
  %1691 = vrot.lane.b32.xlu0 %v177, 48
  %v1692 = vpop.permute.xlu0 %1691
  %1693 = vrot.lane.b32.xlu0 %v182, 48
  %v1694 = vpop.permute.xlu0 %1693
  %1695 = vrot.lane.b32.xlu0 %v187, 48
  %v1696 = vpop.permute.xlu0 %1695
  %1697 = vrot.lane.b32.xlu0 %v192, 48
  %v1698 = vpop.permute.xlu0 %1697
  %1699 = vrot.lane.b32.xlu0 %v197, 48
  %v1700 = vpop.permute.xlu0 %1699
  %1701 = vrot.lane.b32.xlu0 %v202, 48
  %v1702 = vpop.permute.xlu0 %1701
  %1703 = vrot.lane.b32.xlu0 %v207, 48
  %v1704 = vpop.permute.xlu0 %1703
  %1705 = vrot.lane.b32.xlu0 %v212, 48
  %v1706 = vpop.permute.xlu0 %1705
  %1707 = vrot.lane.b32.xlu0 %v217, 48
  %v1708 = vpop.permute.xlu0 %1707
  %1709 = vrot.lane.b32.xlu0 %v222, 48
  %v1710 = vpop.permute.xlu0 %1709
  %1711 = vrot.lane.b32.xlu0 %v227, 48
  %v1712 = vpop.permute.xlu0 %1711
  %1713 = vrot.lane.b32.xlu0 %v232, 48
  %v1714 = vpop.permute.xlu0 %1713
  %1715 = vrot.lane.b32.xlu0 %v237, 48
  %v1716 = vpop.permute.xlu0 %1715
  %v1733 = vadd.f32 %v1669, %v1686
  %v1734 = vadd.f32 %v1670, %v1688
  %v1735 = vadd.f32 %v1671, %v1690
  %v1736 = vadd.f32 %v1672, %v1692
  %v1737 = vadd.f32 %v1673, %v1694
  %v1738 = vadd.f32 %v1674, %v1696
  %v1739 = vadd.f32 %v1675, %v1698
  %v1740 = vadd.f32 %v1676, %v1700
  %v1741 = vadd.f32 %v1677, %v1702
  %v1742 = vadd.f32 %v1678, %v1704
  %v1743 = vadd.f32 %v1679, %v1706
  %v1744 = vadd.f32 %v1680, %v1708
  %v1745 = vadd.f32 %v1681, %v1710
  %v1746 = vadd.f32 %v1682, %v1712
  %v1747 = vadd.f32 %v1683, %v1714
  %v1748 = vadd.f32 %v1684, %v1716
  %v1749 = vadd.f32 %v912, %v1733
  %v1750 = vadd.f32 %v913, %v1734
  %v1751 = vadd.f32 %v914, %v1735
  %v1752 = vadd.f32 %v915, %v1736
  %v1753 = vadd.f32 %v916, %v1737
  %v1754 = vadd.f32 %v917, %v1738
  %v1755 = vadd.f32 %v918, %v1739
  %v1756 = vadd.f32 %v919, %v1740
  %v1757 = vadd.f32 %v920, %v1741
  %v1758 = vadd.f32 %v921, %v1742
  %v1759 = vadd.f32 %v922, %v1743
  %v1760 = vadd.f32 %v923, %v1744
  %v1761 = vadd.f32 %v924, %v1745
  %v1762 = vadd.f32 %v925, %v1746
  %v1763 = vadd.f32 %v926, %v1747
  %v1764 = vadd.f32 %v927, %v1748
  %v1765 = vlaneseq
  %v1766 = vshrl.u32 %v1765, 7
  %v1767 = vsub.s32 2, %v1766
  %v1768 = vrot.slane %v256, %v1767
  %1770 = vrot.lane.b32.xlu0 %v1768, 32
  %v1771 = vpop.permute.xlu0 %1770
  %v1773 = vmul.f32 %v162, %v1771
  %v1774 = vmul.f32 %v167, %v1771
  %v1775 = vmul.f32 %v172, %v1771
  %v1776 = vmul.f32 %v177, %v1771
  %v1777 = vmul.f32 %v182, %v1771
  %v1778 = vmul.f32 %v187, %v1771
  %v1779 = vmul.f32 %v192, %v1771
  %v1780 = vmul.f32 %v197, %v1771
  %v1781 = vmul.f32 %v202, %v1771
  %v1782 = vmul.f32 %v207, %v1771
  %v1783 = vmul.f32 %v212, %v1771
  %v1784 = vmul.f32 %v217, %v1771
  %v1785 = vmul.f32 %v222, %v1771
  %v1786 = vmul.f32 %v227, %v1771
  %v1787 = vmul.f32 %v232, %v1771
  %v1788 = vmul.f32 %v237, %v1771
  %1805 = vrot.lane.b32.xlu0 %v1773, 96
  %v1806 = vpop.permute.xlu0 %1805
  %1807 = vrot.lane.b32.xlu0 %v1774, 96
  %v1808 = vpop.permute.xlu0 %1807
  %1809 = vrot.lane.b32.xlu0 %v1775, 96
  %v1810 = vpop.permute.xlu0 %1809
  %1811 = vrot.lane.b32.xlu0 %v1776, 96
  %v1812 = vpop.permute.xlu0 %1811
  %1813 = vrot.lane.b32.xlu0 %v1777, 96
  %v1814 = vpop.permute.xlu0 %1813
  %1815 = vrot.lane.b32.xlu0 %v1778, 96
  %v1816 = vpop.permute.xlu0 %1815
  %1817 = vrot.lane.b32.xlu0 %v1779, 96
  %v1818 = vpop.permute.xlu0 %1817
  %1819 = vrot.lane.b32.xlu0 %v1780, 96
  %v1820 = vpop.permute.xlu0 %1819
  %1821 = vrot.lane.b32.xlu0 %v1781, 96
  %v1822 = vpop.permute.xlu0 %1821
  %1823 = vrot.lane.b32.xlu0 %v1782, 96
  %v1824 = vpop.permute.xlu0 %1823
  %1825 = vrot.lane.b32.xlu0 %v1783, 96
  %v1826 = vpop.permute.xlu0 %1825
  %1827 = vrot.lane.b32.xlu0 %v1784, 96
  %v1828 = vpop.permute.xlu0 %1827
  %1829 = vrot.lane.b32.xlu0 %v1785, 96
  %v1830 = vpop.permute.xlu0 %1829
  %1831 = vrot.lane.b32.xlu0 %v1786, 96
  %v1832 = vpop.permute.xlu0 %1831
  %1833 = vrot.lane.b32.xlu0 %v1787, 96
  %v1834 = vpop.permute.xlu0 %1833
  %1835 = vrot.lane.b32.xlu0 %v1788, 96
  %v1836 = vpop.permute.xlu0 %1835
  %v1853 = vsel %vm278, %v1806, 0.0
  %1854 = vadd.xlane.f32.xlu0 %v1853
  %v1855 = vpop.xlane.xlu0 %1854
  %v1856 = vsel %vm278, %v1808, 0.0
  %1857 = vadd.xlane.f32.xlu0 %v1856
  %v1858 = vpop.xlane.xlu0 %1857
  %v1859 = vsel %vm278, %v1810, 0.0
  %1860 = vadd.xlane.f32.xlu0 %v1859
  %v1861 = vpop.xlane.xlu0 %1860
  %v1862 = vsel %vm278, %v1812, 0.0
  %1863 = vadd.xlane.f32.xlu0 %v1862
  %v1864 = vpop.xlane.xlu0 %1863
  %v1865 = vsel %vm278, %v1814, 0.0
  %1866 = vadd.xlane.f32.xlu0 %v1865
  %v1867 = vpop.xlane.xlu0 %1866
  %v1868 = vsel %vm278, %v1816, 0.0
  %1869 = vadd.xlane.f32.xlu0 %v1868
  %v1870 = vpop.xlane.xlu0 %1869
  %v1871 = vsel %vm278, %v1818, 0.0
  %1872 = vadd.xlane.f32.xlu0 %v1871
  %v1873 = vpop.xlane.xlu0 %1872
  %v1874 = vsel %vm278, %v1820, 0.0
  %1875 = vadd.xlane.f32.xlu0 %v1874
  %v1876 = vpop.xlane.xlu0 %1875
  %v1877 = vsel %vm278, %v1822, 0.0
  %1878 = vadd.xlane.f32.xlu0 %v1877
  %v1879 = vpop.xlane.xlu0 %1878
  %v1880 = vsel %vm278, %v1824, 0.0
  %1881 = vadd.xlane.f32.xlu0 %v1880
  %v1882 = vpop.xlane.xlu0 %1881
  %v1883 = vsel %vm278, %v1826, 0.0
  %1884 = vadd.xlane.f32.xlu0 %v1883
  %v1885 = vpop.xlane.xlu0 %1884
  %v1886 = vsel %vm278, %v1828, 0.0
  %1887 = vadd.xlane.f32.xlu0 %v1886
  %v1888 = vpop.xlane.xlu0 %1887
  %v1889 = vsel %vm278, %v1830, 0.0
  %1890 = vadd.xlane.f32.xlu0 %v1889
  %v1891 = vpop.xlane.xlu0 %1890
  %v1892 = vsel %vm278, %v1832, 0.0
  %1893 = vadd.xlane.f32.xlu0 %v1892
  %v1894 = vpop.xlane.xlu0 %1893
  %v1895 = vsel %vm278, %v1834, 0.0
  %1896 = vadd.xlane.f32.xlu0 %v1895
  %v1897 = vpop.xlane.xlu0 %1896
  %v1898 = vsel %vm278, %v1836, 0.0
  %1899 = vadd.xlane.f32.xlu0 %v1898
  %v1900 = vpop.xlane.xlu0 %1899
  %v1901 = vlaneseq
  %v1902 = vshrl.u32 %v1901, 7
  %v1903 = vsub.s32 2, %v1902
  %v1904 = vrot.slane %v257, %v1903
  %1906 = vrot.lane.b32.xlu0 %v1904, 32
  %v1907 = vpop.permute.xlu0 %1906
  %v1909 = vmul.f32 %v162, %v1907
  %v1910 = vmul.f32 %v167, %v1907
  %v1911 = vmul.f32 %v172, %v1907
  %v1912 = vmul.f32 %v177, %v1907
  %v1913 = vmul.f32 %v182, %v1907
  %v1914 = vmul.f32 %v187, %v1907
  %v1915 = vmul.f32 %v192, %v1907
  %v1916 = vmul.f32 %v197, %v1907
  %v1917 = vmul.f32 %v202, %v1907
  %v1918 = vmul.f32 %v207, %v1907
  %v1919 = vmul.f32 %v212, %v1907
  %v1920 = vmul.f32 %v217, %v1907
  %v1921 = vmul.f32 %v222, %v1907
  %v1922 = vmul.f32 %v227, %v1907
  %v1923 = vmul.f32 %v232, %v1907
  %v1924 = vmul.f32 %v237, %v1907
  %1941 = vrot.lane.b32.xlu0 %v1909, 96
  %v1942 = vpop.permute.xlu0 %1941
  %1943 = vrot.lane.b32.xlu0 %v1910, 96
  %v1944 = vpop.permute.xlu0 %1943
  %1945 = vrot.lane.b32.xlu0 %v1911, 96
  %v1946 = vpop.permute.xlu0 %1945
  %1947 = vrot.lane.b32.xlu0 %v1912, 96
  %v1948 = vpop.permute.xlu0 %1947
  %1949 = vrot.lane.b32.xlu0 %v1913, 96
  %v1950 = vpop.permute.xlu0 %1949
  %1951 = vrot.lane.b32.xlu0 %v1914, 96
  %v1952 = vpop.permute.xlu0 %1951
  %1953 = vrot.lane.b32.xlu0 %v1915, 96
  %v1954 = vpop.permute.xlu0 %1953
  %1955 = vrot.lane.b32.xlu0 %v1916, 96
  %v1956 = vpop.permute.xlu0 %1955
  %1957 = vrot.lane.b32.xlu0 %v1917, 96
  %v1958 = vpop.permute.xlu0 %1957
  %1959 = vrot.lane.b32.xlu0 %v1918, 96
  %v1960 = vpop.permute.xlu0 %1959
  %1961 = vrot.lane.b32.xlu0 %v1919, 96
  %v1962 = vpop.permute.xlu0 %1961
  %1963 = vrot.lane.b32.xlu0 %v1920, 96
  %v1964 = vpop.permute.xlu0 %1963
  %1965 = vrot.lane.b32.xlu0 %v1921, 96
  %v1966 = vpop.permute.xlu0 %1965
  %1967 = vrot.lane.b32.xlu0 %v1922, 96
  %v1968 = vpop.permute.xlu0 %1967
  %1969 = vrot.lane.b32.xlu0 %v1923, 96
  %v1970 = vpop.permute.xlu0 %1969
  %1971 = vrot.lane.b32.xlu0 %v1924, 96
  %v1972 = vpop.permute.xlu0 %1971
  %v1989 = vsel %vm278, %v1942, 0.0
  %1990 = vadd.xlane.f32.xlu0 %v1989
  %v1991 = vpop.xlane.xlu0 %1990
  %v1992 = vsel %vm278, %v1944, 0.0
  %1993 = vadd.xlane.f32.xlu0 %v1992
  %v1994 = vpop.xlane.xlu0 %1993
  %v1995 = vsel %vm278, %v1946, 0.0
  %1996 = vadd.xlane.f32.xlu0 %v1995
  %v1997 = vpop.xlane.xlu0 %1996
  %v1998 = vsel %vm278, %v1948, 0.0
  %1999 = vadd.xlane.f32.xlu0 %v1998
  %v2000 = vpop.xlane.xlu0 %1999
  %v2001 = vsel %vm278, %v1950, 0.0
  %2002 = vadd.xlane.f32.xlu0 %v2001
  %v2003 = vpop.xlane.xlu0 %2002
  %v2004 = vsel %vm278, %v1952, 0.0
  %2005 = vadd.xlane.f32.xlu0 %v2004
  %v2006 = vpop.xlane.xlu0 %2005
  %v2007 = vsel %vm278, %v1954, 0.0
  %2008 = vadd.xlane.f32.xlu0 %v2007
  %v2009 = vpop.xlane.xlu0 %2008
  %v2010 = vsel %vm278, %v1956, 0.0
  %2011 = vadd.xlane.f32.xlu0 %v2010
  %v2012 = vpop.xlane.xlu0 %2011
  %v2013 = vsel %vm278, %v1958, 0.0
  %2014 = vadd.xlane.f32.xlu0 %v2013
  %v2015 = vpop.xlane.xlu0 %2014
  %v2016 = vsel %vm278, %v1960, 0.0
  %2017 = vadd.xlane.f32.xlu0 %v2016
  %v2018 = vpop.xlane.xlu0 %2017
  %v2019 = vsel %vm278, %v1962, 0.0
  %2020 = vadd.xlane.f32.xlu0 %v2019
  %v2021 = vpop.xlane.xlu0 %2020
  %v2022 = vsel %vm278, %v1964, 0.0
  %2023 = vadd.xlane.f32.xlu0 %v2022
  %v2024 = vpop.xlane.xlu0 %2023
  %v2025 = vsel %vm278, %v1966, 0.0
  %2026 = vadd.xlane.f32.xlu0 %v2025
  %v2027 = vpop.xlane.xlu0 %2026
  %v2028 = vsel %vm278, %v1968, 0.0
  %2029 = vadd.xlane.f32.xlu0 %v2028
  %v2030 = vpop.xlane.xlu0 %2029
  %v2031 = vsel %vm278, %v1970, 0.0
  %2032 = vadd.xlane.f32.xlu0 %v2031
  %v2033 = vpop.xlane.xlu0 %2032
  %v2034 = vsel %vm278, %v1972, 0.0
  %2035 = vadd.xlane.f32.xlu0 %v2034
  %v2036 = vpop.xlane.xlu0 %2035
  %2037 = vxpose.xlu0.b32.start [1/16] %v1855, 128
  %2038 = vxpose.xlu0.b32.cont [2/16] %v1858, 128
  %2039 = vxpose.xlu0.b32.cont [3/16] %v1861, 128
  %2040 = vxpose.xlu0.b32.cont [4/16] %v1864, 128
  %2041 = vxpose.xlu0.b32.cont [5/16] %v1867, 128
  %2042 = vxpose.xlu0.b32.cont [6/16] %v1870, 128
  %2043 = vxpose.xlu0.b32.cont [7/16] %v1873, 128
  %2044 = vxpose.xlu0.b32.cont [8/16] %v1876, 128
  %2045 = vxpose.xlu0.b32.cont [9/16] %v1879, 128
  %2046 = vxpose.xlu0.b32.cont [10/16] %v1882, 128
  %2047 = vxpose.xlu0.b32.cont [11/16] %v1885, 128
  %2048 = vxpose.xlu0.b32.cont [12/16] %v1888, 128
  %2049 = vxpose.xlu0.b32.cont [13/16] %v1891, 128
  %2050 = vxpose.xlu0.b32.cont [14/16] %v1894, 128
  %2051 = vxpose.xlu0.b32.cont [15/16] %v1897, 128
  %2052 = vxpose.xlu0.b32.end [16/16] %v1900, 128
  %v2053 = vpop.trf.xlu0
  %v2054 = vpop.trf.xlu0
  %v2055 = vpop.trf.xlu0
  %v2056 = vpop.trf.xlu0
  %v2057 = vpop.trf.xlu0
  %v2058 = vpop.trf.xlu0
  %v2059 = vpop.trf.xlu0
  %v2060 = vpop.trf.xlu0
  %v2061 = vpop.trf.xlu0
  %v2062 = vpop.trf.xlu0
  %v2063 = vpop.trf.xlu0
  %v2064 = vpop.trf.xlu0
  %v2065 = vpop.trf.xlu0
  %v2066 = vpop.trf.xlu0
  %v2067 = vpop.trf.xlu0
  %v2068 = vpop.trf.xlu0
  %v2069 = vlaneseq
  %v2070 = vshrl.u32 %v2069, 7
  %v2071 = vsub.s32 0, %v2070
  %v2072 = vrot.slane %v2053, %v2071
  %v2073 = vadd.f32 %v1991, %v2072
  %v2074 = vadd.f32 %v1994, %v2072
  %v2075 = vadd.f32 %v1997, %v2072
  %v2076 = vadd.f32 %v2000, %v2072
  %v2077 = vadd.f32 %v2003, %v2072
  %v2078 = vadd.f32 %v2006, %v2072
  %v2079 = vadd.f32 %v2009, %v2072
  %v2080 = vadd.f32 %v2012, %v2072
  %v2081 = vadd.f32 %v2015, %v2072
  %v2082 = vadd.f32 %v2018, %v2072
  %v2083 = vadd.f32 %v2021, %v2072
  %v2084 = vadd.f32 %v2024, %v2072
  %v2085 = vadd.f32 %v2027, %v2072
  %v2086 = vadd.f32 %v2030, %v2072
  %v2087 = vadd.f32 %v2033, %v2072
  %v2088 = vadd.f32 %v2036, %v2072
  %vm2089 = vcmp.gt.f32.partialorder %v2073, 0.0
  %vm2090 = vcmp.gt.f32.partialorder %v2074, 0.0
  %vm2091 = vcmp.gt.f32.partialorder %v2075, 0.0
  %vm2092 = vcmp.gt.f32.partialorder %v2076, 0.0
  %vm2093 = vcmp.gt.f32.partialorder %v2077, 0.0
  %vm2094 = vcmp.gt.f32.partialorder %v2078, 0.0
  %vm2095 = vcmp.gt.f32.partialorder %v2079, 0.0
  %vm2096 = vcmp.gt.f32.partialorder %v2080, 0.0
  %vm2097 = vcmp.gt.f32.partialorder %v2081, 0.0
  %vm2098 = vcmp.gt.f32.partialorder %v2082, 0.0
  %vm2099 = vcmp.gt.f32.partialorder %v2083, 0.0
  %vm2100 = vcmp.gt.f32.partialorder %v2084, 0.0
  %vm2101 = vcmp.gt.f32.partialorder %v2085, 0.0
  %vm2102 = vcmp.gt.f32.partialorder %v2086, 0.0
  %vm2103 = vcmp.gt.f32.partialorder %v2087, 0.0
  %vm2104 = vcmp.gt.f32.partialorder %v2088, 0.0
  %v2105 = vmul.f32 %v2073, 0.2
  %v2106 = vmul.f32 %v2074, 0.2
  %v2107 = vmul.f32 %v2075, 0.2
  %v2108 = vmul.f32 %v2076, 0.2
  %v2109 = vmul.f32 %v2077, 0.2
  %v2110 = vmul.f32 %v2078, 0.2
  %v2111 = vmul.f32 %v2079, 0.2
  %v2112 = vmul.f32 %v2080, 0.2
  %v2113 = vmul.f32 %v2081, 0.2
  %v2114 = vmul.f32 %v2082, 0.2
  %v2115 = vmul.f32 %v2083, 0.2
  %v2116 = vmul.f32 %v2084, 0.2
  %v2117 = vmul.f32 %v2085, 0.2
  %v2118 = vmul.f32 %v2086, 0.2
  %v2119 = vmul.f32 %v2087, 0.2
  %v2120 = vmul.f32 %v2088, 0.2
  %v2121 = vsel %vm2089, %v2073, %v2105
  %v2122 = vsel %vm2090, %v2074, %v2106
  %v2123 = vsel %vm2091, %v2075, %v2107
  %v2124 = vsel %vm2092, %v2076, %v2108
  %v2125 = vsel %vm2093, %v2077, %v2109
  %v2126 = vsel %vm2094, %v2078, %v2110
  %v2127 = vsel %vm2095, %v2079, %v2111
  %v2128 = vsel %vm2096, %v2080, %v2112
  %v2129 = vsel %vm2097, %v2081, %v2113
  %v2130 = vsel %vm2098, %v2082, %v2114
  %v2131 = vsel %vm2099, %v2083, %v2115
  %v2132 = vsel %vm2100, %v2084, %v2116
  %v2133 = vsel %vm2101, %v2085, %v2117
  %v2134 = vsel %vm2102, %v2086, %v2118
  %v2135 = vsel %vm2103, %v2087, %v2119
  %v2136 = vsel %vm2104, %v2088, %v2120
  %v2137 = vsel %vm495, %v2121, -1e+30
  %v2138 = vsel %vm496, %v2122, -1e+30
  %v2139 = vsel %vm497, %v2123, -1e+30
  %v2140 = vsel %vm498, %v2124, -1e+30
  %v2141 = vsel %vm499, %v2125, -1e+30
  %v2142 = vsel %vm500, %v2126, -1e+30
  %v2143 = vsel %vm501, %v2127, -1e+30
  %v2144 = vsel %vm502, %v2128, -1e+30
  %v2145 = vsel %vm503, %v2129, -1e+30
  %v2146 = vsel %vm504, %v2130, -1e+30
  %v2147 = vsel %vm505, %v2131, -1e+30
  %v2148 = vsel %vm506, %v2132, -1e+30
  %v2149 = vsel %vm507, %v2133, -1e+30
  %v2150 = vsel %vm508, %v2134, -1e+30
  %v2151 = vsel %vm509, %v2135, -1e+30
  %v2152 = vsel %vm510, %v2136, -1e+30
  %2153 = vmax.xlane.f32.xlu0 %v2137
  %v2154 = vpop.xlane.xlu0 %2153
  %2155 = vmax.xlane.f32.xlu0 %v2138
  %v2156 = vpop.xlane.xlu0 %2155
  %2157 = vmax.xlane.f32.xlu0 %v2139
  %v2158 = vpop.xlane.xlu0 %2157
  %2159 = vmax.xlane.f32.xlu0 %v2140
  %v2160 = vpop.xlane.xlu0 %2159
  %2161 = vmax.xlane.f32.xlu0 %v2141
  %v2162 = vpop.xlane.xlu0 %2161
  %2163 = vmax.xlane.f32.xlu0 %v2142
  %v2164 = vpop.xlane.xlu0 %2163
  %2165 = vmax.xlane.f32.xlu0 %v2143
  %v2166 = vpop.xlane.xlu0 %2165
  %2167 = vmax.xlane.f32.xlu0 %v2144
  %v2168 = vpop.xlane.xlu0 %2167
  %2169 = vmax.xlane.f32.xlu0 %v2145
  %v2170 = vpop.xlane.xlu0 %2169
  %2171 = vmax.xlane.f32.xlu0 %v2146
  %v2172 = vpop.xlane.xlu0 %2171
  %2173 = vmax.xlane.f32.xlu0 %v2147
  %v2174 = vpop.xlane.xlu0 %2173
  %2175 = vmax.xlane.f32.xlu0 %v2148
  %v2176 = vpop.xlane.xlu0 %2175
  %2177 = vmax.xlane.f32.xlu0 %v2149
  %v2178 = vpop.xlane.xlu0 %2177
  %2179 = vmax.xlane.f32.xlu0 %v2150
  %v2180 = vpop.xlane.xlu0 %2179
  %2181 = vmax.xlane.f32.xlu0 %v2151
  %v2182 = vpop.xlane.xlu0 %2181
  %2183 = vmax.xlane.f32.xlu0 %v2152
  %v2184 = vpop.xlane.xlu0 %2183
  %v2185 = vsub.f32 %v2137, %v2154
  %v2186 = vsub.f32 %v2138, %v2156
  %v2187 = vsub.f32 %v2139, %v2158
  %v2188 = vsub.f32 %v2140, %v2160
  %v2189 = vsub.f32 %v2141, %v2162
  %v2190 = vsub.f32 %v2142, %v2164
  %v2191 = vsub.f32 %v2143, %v2166
  %v2192 = vsub.f32 %v2144, %v2168
  %v2193 = vsub.f32 %v2145, %v2170
  %v2194 = vsub.f32 %v2146, %v2172
  %v2195 = vsub.f32 %v2147, %v2174
  %v2196 = vsub.f32 %v2148, %v2176
  %v2197 = vsub.f32 %v2149, %v2178
  %v2198 = vsub.f32 %v2150, %v2180
  %v2199 = vsub.f32 %v2151, %v2182
  %v2200 = vsub.f32 %v2152, %v2184
  %v2201 = vmul.f32 %v2185, 1.442695
  %v2202 = vpow.pop %v2201
  %v2203 = vmul.f32 %v2186, 1.442695
  %v2204 = vpow.pop %v2203
  %v2205 = vmul.f32 %v2187, 1.442695
  %v2206 = vpow.pop %v2205
  %v2207 = vmul.f32 %v2188, 1.442695
  %v2208 = vpow.pop %v2207
  %v2209 = vmul.f32 %v2189, 1.442695
  %v2210 = vpow.pop %v2209
  %v2211 = vmul.f32 %v2190, 1.442695
  %v2212 = vpow.pop %v2211
  %v2213 = vmul.f32 %v2191, 1.442695
  %v2214 = vpow.pop %v2213
  %v2215 = vmul.f32 %v2192, 1.442695
  %v2216 = vpow.pop %v2215
  %v2217 = vmul.f32 %v2193, 1.442695
  %v2218 = vpow.pop %v2217
  %v2219 = vmul.f32 %v2194, 1.442695
  %v2220 = vpow.pop %v2219
  %v2221 = vmul.f32 %v2195, 1.442695
  %v2222 = vpow.pop %v2221
  %v2223 = vmul.f32 %v2196, 1.442695
  %v2224 = vpow.pop %v2223
  %v2225 = vmul.f32 %v2197, 1.442695
  %v2226 = vpow.pop %v2225
  %v2227 = vmul.f32 %v2198, 1.442695
  %v2228 = vpow.pop %v2227
  %v2229 = vmul.f32 %v2199, 1.442695
  %v2230 = vpow.pop %v2229
  %v2231 = vmul.f32 %v2200, 1.442695
  %v2232 = vpow.pop %v2231
  %v2233 = vmul.f32 %v2202, %v240
  %v2234 = vmul.f32 %v2204, %v241
  %v2235 = vmul.f32 %v2206, %v242
  %v2236 = vmul.f32 %v2208, %v243
  %v2237 = vmul.f32 %v2210, %v244
  %v2238 = vmul.f32 %v2212, %v245
  %v2239 = vmul.f32 %v2214, %v246
  %v2240 = vmul.f32 %v2216, %v247
  %v2241 = vmul.f32 %v2218, %v248
  %v2242 = vmul.f32 %v2220, %v249
  %v2243 = vmul.f32 %v2222, %v250
  %v2244 = vmul.f32 %v2224, %v251
  %v2245 = vmul.f32 %v2226, %v252
  %v2246 = vmul.f32 %v2228, %v253
  %v2247 = vmul.f32 %v2230, %v254
  %v2248 = vmul.f32 %v2232, %v255
  %2249 = vadd.xlane.f32.xlu0 %v2233
  %v2250 = vpop.xlane.xlu0 %2249
  %2251 = vadd.xlane.f32.xlu0 %v2234
  %v2252 = vpop.xlane.xlu0 %2251
  %2253 = vadd.xlane.f32.xlu0 %v2235
  %v2254 = vpop.xlane.xlu0 %2253
  %2255 = vadd.xlane.f32.xlu0 %v2236
  %v2256 = vpop.xlane.xlu0 %2255
  %2257 = vadd.xlane.f32.xlu0 %v2237
  %v2258 = vpop.xlane.xlu0 %2257
  %2259 = vadd.xlane.f32.xlu0 %v2238
  %v2260 = vpop.xlane.xlu0 %2259
  %2261 = vadd.xlane.f32.xlu0 %v2239
  %v2262 = vpop.xlane.xlu0 %2261
  %2263 = vadd.xlane.f32.xlu0 %v2240
  %v2264 = vpop.xlane.xlu0 %2263
  %2265 = vadd.xlane.f32.xlu0 %v2241
  %v2266 = vpop.xlane.xlu0 %2265
  %2267 = vadd.xlane.f32.xlu0 %v2242
  %v2268 = vpop.xlane.xlu0 %2267
  %2269 = vadd.xlane.f32.xlu0 %v2243
  %v2270 = vpop.xlane.xlu0 %2269
  %2271 = vadd.xlane.f32.xlu0 %v2244
  %v2272 = vpop.xlane.xlu0 %2271
  %2273 = vadd.xlane.f32.xlu0 %v2245
  %v2274 = vpop.xlane.xlu0 %2273
  %2275 = vadd.xlane.f32.xlu0 %v2246
  %v2276 = vpop.xlane.xlu0 %2275
  %2277 = vadd.xlane.f32.xlu0 %v2247
  %v2278 = vpop.xlane.xlu0 %2277
  %2279 = vadd.xlane.f32.xlu0 %v2248
  %v2280 = vpop.xlane.xlu0 %2279
  %2281 = vrot.lane.b32.xlu0 %v162, 96
  %v2282 = vpop.permute.xlu0 %2281
  %2283 = vrot.lane.b32.xlu0 %v167, 96
  %v2284 = vpop.permute.xlu0 %2283
  %2285 = vrot.lane.b32.xlu0 %v172, 96
  %v2286 = vpop.permute.xlu0 %2285
  %2287 = vrot.lane.b32.xlu0 %v177, 96
  %v2288 = vpop.permute.xlu0 %2287
  %2289 = vrot.lane.b32.xlu0 %v182, 96
  %v2290 = vpop.permute.xlu0 %2289
  %2291 = vrot.lane.b32.xlu0 %v187, 96
  %v2292 = vpop.permute.xlu0 %2291
  %2293 = vrot.lane.b32.xlu0 %v192, 96
  %v2294 = vpop.permute.xlu0 %2293
  %2295 = vrot.lane.b32.xlu0 %v197, 96
  %v2296 = vpop.permute.xlu0 %2295
  %2297 = vrot.lane.b32.xlu0 %v202, 96
  %v2298 = vpop.permute.xlu0 %2297
  %2299 = vrot.lane.b32.xlu0 %v207, 96
  %v2300 = vpop.permute.xlu0 %2299
  %2301 = vrot.lane.b32.xlu0 %v212, 96
  %v2302 = vpop.permute.xlu0 %2301
  %2303 = vrot.lane.b32.xlu0 %v217, 96
  %v2304 = vpop.permute.xlu0 %2303
  %2305 = vrot.lane.b32.xlu0 %v222, 96
  %v2306 = vpop.permute.xlu0 %2305
  %2307 = vrot.lane.b32.xlu0 %v227, 96
  %v2308 = vpop.permute.xlu0 %2307
  %2309 = vrot.lane.b32.xlu0 %v232, 96
  %v2310 = vpop.permute.xlu0 %2309
  %2311 = vrot.lane.b32.xlu0 %v237, 96
  %v2312 = vpop.permute.xlu0 %2311
  %2329 = vmatprep.subr.mxu0 0.0
  %2330 = vmatpush1.msra.mxu0 %v2312
  %2331 = vmatprep.subr.mxu0 0.0
  %2332 = vmatpush1.msra.mxu0 %v2310
  %2333 = vmatprep.subr.mxu0 0.0
  %2334 = vmatpush1.msra.mxu0 %v2308
  %2335 = vmatprep.subr.mxu0 0.0
  %2336 = vmatpush1.msra.mxu0 %v2306
  %2337 = vmatprep.subr.mxu0 0.0
  %2338 = vmatpush1.msra.mxu0 %v2304
  %2339 = vmatprep.subr.mxu0 0.0
  %2340 = vmatpush1.msra.mxu0 %v2302
  %2341 = vmatprep.subr.mxu0 0.0
  %2342 = vmatpush1.msra.mxu0 %v2300
  %2343 = vmatprep.subr.mxu0 0.0
  %2344 = vmatpush1.msra.mxu0 %v2298
  %2345 = vmatprep.subr.mxu0 0.0
  %2346 = vmatpush1.msra.mxu0 %v2296
  %2347 = vmatprep.subr.mxu0 0.0
  %2348 = vmatpush1.msra.mxu0 %v2294
  %2349 = vmatprep.subr.mxu0 0.0
  %2350 = vmatpush1.msra.mxu0 %v2292
  %2351 = vmatprep.subr.mxu0 0.0
  %2352 = vmatpush1.msra.mxu0 %v2290
  %2353 = vmatprep.subr.mxu0 0.0
  %2354 = vmatpush1.msra.mxu0 %v2288
  %2355 = vmatprep.subr.mxu0 0.0
  %2356 = vmatpush1.msra.mxu0 %v2286
  %2357 = vmatprep.subr.mxu0 0.0
  %2358 = vmatpush1.msra.mxu0 %v2284
  %2359 = vmatprep.subr.mxu0 0.0
  %2360 = vmatpush1.msra.mxu0 %v2282
  %2361 = vmatprep.subr.mxu0 0.0
  %2362 = vmatpush2.msra.mxu0 0.0
  %2363 = vmatprep.subr.mxu0 0.0
  %2364 = vmatpush2.msra.mxu0 0.0
  %2365 = vmatprep.subr.mxu0 0.0
  %2366 = vmatpush2.msra.mxu0 0.0
  %2367 = vmatprep.subr.mxu0 0.0
  %2368 = vmatpush2.msra.mxu0 0.0
  %2369 = vmatprep.subr.mxu0 0.0
  %2370 = vmatpush2.msra.mxu0 0.0
  %2371 = vmatprep.subr.mxu0 0.0
  %2372 = vmatpush2.msra.mxu0 0.0
  %2373 = vmatprep.subr.mxu0 0.0
  %2374 = vmatpush2.msra.mxu0 0.0
  %2375 = vmatprep.subr.mxu0 0.0
  %2376 = vmatpush2.msra.mxu0 0.0
  %2377 = vmatprep.subr.mxu0 0.0
  %2378 = vmatpush2.msra.mxu0 0.0
  %2379 = vmatprep.subr.mxu0 0.0
  %2380 = vmatpush2.msra.mxu0 0.0
  %2381 = vmatprep.subr.mxu0 0.0
  %2382 = vmatpush2.msra.mxu0 0.0
  %2383 = vmatprep.subr.mxu0 0.0
  %2384 = vmatpush2.msra.mxu0 0.0
  %2385 = vmatprep.subr.mxu0 0.0
  %2386 = vmatpush2.msra.mxu0 0.0
  %2387 = vmatprep.subr.mxu0 0.0
  %2388 = vmatpush2.msra.mxu0 0.0
  %2389 = vmatprep.subr.mxu0 0.0
  %2390 = vmatpush2.msra.mxu0 0.0
  %2391 = vmatprep.subr.mxu0 0.0
  %2392 = vmatpush2.msra.mxu0 0.0
  %2393 = vmatprep.mubr.f32.mxu0 0.0
  %2394 = vmatmul.mubr.f32.gmra.mxu0 %v2233
  %v2395 = vpop.f32.mrf.mxu0
  %v2396 = vadd.f32 0.0, %v2395
  %v2397 = vpop.f32.mrf.mxu0
  %2398 = vmatprep.mubr.f32.mxu0 0.0
  %2399 = vmatmul.mubr.f32.gmra.mxu0 %v2234
  %v2400 = vpop.f32.mrf.mxu0
  %v2401 = vadd.f32 0.0, %v2400
  %v2402 = vpop.f32.mrf.mxu0
  %2403 = vmatprep.mubr.f32.mxu0 0.0
  %2404 = vmatmul.mubr.f32.gmra.mxu0 %v2235
  %v2405 = vpop.f32.mrf.mxu0
  %v2406 = vadd.f32 0.0, %v2405
  %v2407 = vpop.f32.mrf.mxu0
  %2408 = vmatprep.mubr.f32.mxu0 0.0
  %2409 = vmatmul.mubr.f32.gmra.mxu0 %v2236
  %v2410 = vpop.f32.mrf.mxu0
  %v2411 = vadd.f32 0.0, %v2410
  %v2412 = vpop.f32.mrf.mxu0
  %2413 = vmatprep.mubr.f32.mxu0 0.0
  %2414 = vmatmul.mubr.f32.gmra.mxu0 %v2237
  %v2415 = vpop.f32.mrf.mxu0
  %v2416 = vadd.f32 0.0, %v2415
  %v2417 = vpop.f32.mrf.mxu0
  %2418 = vmatprep.mubr.f32.mxu0 0.0
  %2419 = vmatmul.mubr.f32.gmra.mxu0 %v2238
  %v2420 = vpop.f32.mrf.mxu0
  %v2421 = vadd.f32 0.0, %v2420
  %v2422 = vpop.f32.mrf.mxu0
  %2423 = vmatprep.mubr.f32.mxu0 0.0
  %2424 = vmatmul.mubr.f32.gmra.mxu0 %v2239
  %v2425 = vpop.f32.mrf.mxu0
  %v2426 = vadd.f32 0.0, %v2425
  %v2427 = vpop.f32.mrf.mxu0
  %2428 = vmatprep.mubr.f32.mxu0 0.0
  %2429 = vmatmul.mubr.f32.gmra.mxu0 %v2240
  %v2430 = vpop.f32.mrf.mxu0
  %v2431 = vadd.f32 0.0, %v2430
  %v2432 = vpop.f32.mrf.mxu0
  %2433 = vmatprep.mubr.f32.mxu0 0.0
  %2434 = vmatmul.mubr.f32.gmra.mxu0 %v2241
  %v2435 = vpop.f32.mrf.mxu0
  %v2436 = vadd.f32 0.0, %v2435
  %v2437 = vpop.f32.mrf.mxu0
  %2438 = vmatprep.mubr.f32.mxu0 0.0
  %2439 = vmatmul.mubr.f32.gmra.mxu0 %v2242
  %v2440 = vpop.f32.mrf.mxu0
  %v2441 = vadd.f32 0.0, %v2440
  %v2442 = vpop.f32.mrf.mxu0
  %2443 = vmatprep.mubr.f32.mxu0 0.0
  %2444 = vmatmul.mubr.f32.gmra.mxu0 %v2243
  %v2445 = vpop.f32.mrf.mxu0
  %v2446 = vadd.f32 0.0, %v2445
  %v2447 = vpop.f32.mrf.mxu0
  %2448 = vmatprep.mubr.f32.mxu0 0.0
  %2449 = vmatmul.mubr.f32.gmra.mxu0 %v2244
  %v2450 = vpop.f32.mrf.mxu0
  %v2451 = vadd.f32 0.0, %v2450
  %v2452 = vpop.f32.mrf.mxu0
  %2453 = vmatprep.mubr.f32.mxu0 0.0
  %2454 = vmatmul.mubr.f32.gmra.mxu0 %v2245
  %v2455 = vpop.f32.mrf.mxu0
  %v2456 = vadd.f32 0.0, %v2455
  %v2457 = vpop.f32.mrf.mxu0
  %2458 = vmatprep.mubr.f32.mxu0 0.0
  %2459 = vmatmul.mubr.f32.gmra.mxu0 %v2246
  %v2460 = vpop.f32.mrf.mxu0
  %v2461 = vadd.f32 0.0, %v2460
  %v2462 = vpop.f32.mrf.mxu0
  %2463 = vmatprep.mubr.f32.mxu0 0.0
  %2464 = vmatmul.mubr.f32.gmra.mxu0 %v2247
  %v2465 = vpop.f32.mrf.mxu0
  %v2466 = vadd.f32 0.0, %v2465
  %v2467 = vpop.f32.mrf.mxu0
  %2468 = vmatprep.mubr.f32.mxu0 0.0
  %2469 = vmatmul.mubr.f32.gmra.mxu0 %v2248
  %v2470 = vpop.f32.mrf.mxu0
  %v2471 = vadd.f32 0.0, %v2470
  %v2472 = vpop.f32.mrf.mxu0
  %2473 = vdwg.mxu0
  %v2474 = vadd.f32 %v2250, 1e-16
  %v2475 = vadd.f32 %v2252, 1e-16
  %v2476 = vadd.f32 %v2254, 1e-16
  %v2477 = vadd.f32 %v2256, 1e-16
  %v2478 = vadd.f32 %v2258, 1e-16
  %v2479 = vadd.f32 %v2260, 1e-16
  %v2480 = vadd.f32 %v2262, 1e-16
  %v2481 = vadd.f32 %v2264, 1e-16
  %v2482 = vadd.f32 %v2266, 1e-16
  %v2483 = vadd.f32 %v2268, 1e-16
  %v2484 = vadd.f32 %v2270, 1e-16
  %v2485 = vadd.f32 %v2272, 1e-16
  %v2486 = vadd.f32 %v2274, 1e-16
  %v2487 = vadd.f32 %v2276, 1e-16
  %v2488 = vadd.f32 %v2278, 1e-16
  %v2489 = vadd.f32 %v2280, 1e-16
  %v2490 = vrcp.pop %v2474
  %v2491 = vrcp.pop %v2475
  %v2492 = vrcp.pop %v2476
  %v2493 = vrcp.pop %v2477
  %v2494 = vrcp.pop %v2478
  %v2495 = vrcp.pop %v2479
  %v2496 = vrcp.pop %v2480
  %v2497 = vrcp.pop %v2481
  %v2498 = vrcp.pop %v2482
  %v2499 = vrcp.pop %v2483
  %v2500 = vrcp.pop %v2484
  %v2501 = vrcp.pop %v2485
  %v2502 = vrcp.pop %v2486
  %v2503 = vrcp.pop %v2487
  %v2504 = vrcp.pop %v2488
  %v2505 = vrcp.pop %v2489
  %v2506 = vmul.f32 %v2396, %v2490
  %v2507 = vmul.f32 %v2401, %v2491
  %v2508 = vmul.f32 %v2406, %v2492
  %v2509 = vmul.f32 %v2411, %v2493
  %v2510 = vmul.f32 %v2416, %v2494
  %v2511 = vmul.f32 %v2421, %v2495
  %v2512 = vmul.f32 %v2426, %v2496
  %v2513 = vmul.f32 %v2431, %v2497
  %v2514 = vmul.f32 %v2436, %v2498
  %v2515 = vmul.f32 %v2441, %v2499
  %v2516 = vmul.f32 %v2446, %v2500
  %v2517 = vmul.f32 %v2451, %v2501
  %v2518 = vmul.f32 %v2456, %v2502
  %v2519 = vmul.f32 %v2461, %v2503
  %v2520 = vmul.f32 %v2466, %v2504
  %v2521 = vmul.f32 %v2471, %v2505
  %2522 = vrot.lane.b32.xlu0 %v162, 32
  %v2523 = vpop.permute.xlu0 %2522
  %2524 = vrot.lane.b32.xlu0 %v167, 32
  %v2525 = vpop.permute.xlu0 %2524
  %2526 = vrot.lane.b32.xlu0 %v172, 32
  %v2527 = vpop.permute.xlu0 %2526
  %2528 = vrot.lane.b32.xlu0 %v177, 32
  %v2529 = vpop.permute.xlu0 %2528
  %2530 = vrot.lane.b32.xlu0 %v182, 32
  %v2531 = vpop.permute.xlu0 %2530
  %2532 = vrot.lane.b32.xlu0 %v187, 32
  %v2533 = vpop.permute.xlu0 %2532
  %2534 = vrot.lane.b32.xlu0 %v192, 32
  %v2535 = vpop.permute.xlu0 %2534
  %2536 = vrot.lane.b32.xlu0 %v197, 32
  %v2537 = vpop.permute.xlu0 %2536
  %2538 = vrot.lane.b32.xlu0 %v202, 32
  %v2539 = vpop.permute.xlu0 %2538
  %2540 = vrot.lane.b32.xlu0 %v207, 32
  %v2541 = vpop.permute.xlu0 %2540
  %2542 = vrot.lane.b32.xlu0 %v212, 32
  %v2543 = vpop.permute.xlu0 %2542
  %2544 = vrot.lane.b32.xlu0 %v217, 32
  %v2545 = vpop.permute.xlu0 %2544
  %2546 = vrot.lane.b32.xlu0 %v222, 32
  %v2547 = vpop.permute.xlu0 %2546
  %2548 = vrot.lane.b32.xlu0 %v227, 32
  %v2549 = vpop.permute.xlu0 %2548
  %2550 = vrot.lane.b32.xlu0 %v232, 32
  %v2551 = vpop.permute.xlu0 %2550
  %2552 = vrot.lane.b32.xlu0 %v237, 32
  %v2553 = vpop.permute.xlu0 %2552
  %v2570 = vadd.f32 %v2506, %v2523
  %v2571 = vadd.f32 %v2507, %v2525
  %v2572 = vadd.f32 %v2508, %v2527
  %v2573 = vadd.f32 %v2509, %v2529
  %v2574 = vadd.f32 %v2510, %v2531
  %v2575 = vadd.f32 %v2511, %v2533
  %v2576 = vadd.f32 %v2512, %v2535
  %v2577 = vadd.f32 %v2513, %v2537
  %v2578 = vadd.f32 %v2514, %v2539
  %v2579 = vadd.f32 %v2515, %v2541
  %v2580 = vadd.f32 %v2516, %v2543
  %v2581 = vadd.f32 %v2517, %v2545
  %v2582 = vadd.f32 %v2518, %v2547
  %v2583 = vadd.f32 %v2519, %v2549
  %v2584 = vadd.f32 %v2520, %v2551
  %v2585 = vadd.f32 %v2521, %v2553
  %v2586 = vadd.f32 %v1749, %v2570
  %v2587 = vadd.f32 %v1750, %v2571
  %v2588 = vadd.f32 %v1751, %v2572
  %v2589 = vadd.f32 %v1752, %v2573
  %v2590 = vadd.f32 %v1753, %v2574
  %v2591 = vadd.f32 %v1754, %v2575
  %v2592 = vadd.f32 %v1755, %v2576
  %v2593 = vadd.f32 %v1756, %v2577
  %v2594 = vadd.f32 %v1757, %v2578
  %v2595 = vadd.f32 %v1758, %v2579
  %v2596 = vadd.f32 %v1759, %v2580
  %v2597 = vadd.f32 %v1760, %v2581
  %v2598 = vadd.f32 %v1761, %v2582
  %v2599 = vadd.f32 %v1762, %v2583
  %v2600 = vadd.f32 %v1763, %v2584
  %v2601 = vadd.f32 %v1764, %v2585
  %v2602 = vlaneseq
  %v2603 = vshrl.u32 %v2602, 7
  %v2604 = vsub.s32 3, %v2603
  %v2605 = vrot.slane %v256, %v2604
  %2607 = vrot.lane.b32.xlu0 %v2605, 48
  %v2608 = vpop.permute.xlu0 %2607
  %v2610 = vmul.f32 %v162, %v2608
  %v2611 = vmul.f32 %v167, %v2608
  %v2612 = vmul.f32 %v172, %v2608
  %v2613 = vmul.f32 %v177, %v2608
  %v2614 = vmul.f32 %v182, %v2608
  %v2615 = vmul.f32 %v187, %v2608
  %v2616 = vmul.f32 %v192, %v2608
  %v2617 = vmul.f32 %v197, %v2608
  %v2618 = vmul.f32 %v202, %v2608
  %v2619 = vmul.f32 %v207, %v2608
  %v2620 = vmul.f32 %v212, %v2608
  %v2621 = vmul.f32 %v217, %v2608
  %v2622 = vmul.f32 %v222, %v2608
  %v2623 = vmul.f32 %v227, %v2608
  %v2624 = vmul.f32 %v232, %v2608
  %v2625 = vmul.f32 %v237, %v2608
  %2642 = vrot.lane.b32.xlu0 %v2610, 80
  %v2643 = vpop.permute.xlu0 %2642
  %2644 = vrot.lane.b32.xlu0 %v2611, 80
  %v2645 = vpop.permute.xlu0 %2644
  %2646 = vrot.lane.b32.xlu0 %v2612, 80
  %v2647 = vpop.permute.xlu0 %2646
  %2648 = vrot.lane.b32.xlu0 %v2613, 80
  %v2649 = vpop.permute.xlu0 %2648
  %2650 = vrot.lane.b32.xlu0 %v2614, 80
  %v2651 = vpop.permute.xlu0 %2650
  %2652 = vrot.lane.b32.xlu0 %v2615, 80
  %v2653 = vpop.permute.xlu0 %2652
  %2654 = vrot.lane.b32.xlu0 %v2616, 80
  %v2655 = vpop.permute.xlu0 %2654
  %2656 = vrot.lane.b32.xlu0 %v2617, 80
  %v2657 = vpop.permute.xlu0 %2656
  %2658 = vrot.lane.b32.xlu0 %v2618, 80
  %v2659 = vpop.permute.xlu0 %2658
  %2660 = vrot.lane.b32.xlu0 %v2619, 80
  %v2661 = vpop.permute.xlu0 %2660
  %2662 = vrot.lane.b32.xlu0 %v2620, 80
  %v2663 = vpop.permute.xlu0 %2662
  %2664 = vrot.lane.b32.xlu0 %v2621, 80
  %v2665 = vpop.permute.xlu0 %2664
  %2666 = vrot.lane.b32.xlu0 %v2622, 80
  %v2667 = vpop.permute.xlu0 %2666
  %2668 = vrot.lane.b32.xlu0 %v2623, 80
  %v2669 = vpop.permute.xlu0 %2668
  %2670 = vrot.lane.b32.xlu0 %v2624, 80
  %v2671 = vpop.permute.xlu0 %2670
  %2672 = vrot.lane.b32.xlu0 %v2625, 80
  %v2673 = vpop.permute.xlu0 %2672
  %v2690 = vsel %vm278, %v2643, 0.0
  %2691 = vadd.xlane.f32.xlu0 %v2690
  %v2692 = vpop.xlane.xlu0 %2691
  %v2693 = vsel %vm278, %v2645, 0.0
  %2694 = vadd.xlane.f32.xlu0 %v2693
  %v2695 = vpop.xlane.xlu0 %2694
  %v2696 = vsel %vm278, %v2647, 0.0
  %2697 = vadd.xlane.f32.xlu0 %v2696
  %v2698 = vpop.xlane.xlu0 %2697
  %v2699 = vsel %vm278, %v2649, 0.0
  %2700 = vadd.xlane.f32.xlu0 %v2699
  %v2701 = vpop.xlane.xlu0 %2700
  %v2702 = vsel %vm278, %v2651, 0.0
  %2703 = vadd.xlane.f32.xlu0 %v2702
  %v2704 = vpop.xlane.xlu0 %2703
  %v2705 = vsel %vm278, %v2653, 0.0
  %2706 = vadd.xlane.f32.xlu0 %v2705
  %v2707 = vpop.xlane.xlu0 %2706
  %v2708 = vsel %vm278, %v2655, 0.0
  %2709 = vadd.xlane.f32.xlu0 %v2708
  %v2710 = vpop.xlane.xlu0 %2709
  %v2711 = vsel %vm278, %v2657, 0.0
  %2712 = vadd.xlane.f32.xlu0 %v2711
  %v2713 = vpop.xlane.xlu0 %2712
  %v2714 = vsel %vm278, %v2659, 0.0
  %2715 = vadd.xlane.f32.xlu0 %v2714
  %v2716 = vpop.xlane.xlu0 %2715
  %v2717 = vsel %vm278, %v2661, 0.0
  %2718 = vadd.xlane.f32.xlu0 %v2717
  %v2719 = vpop.xlane.xlu0 %2718
  %v2720 = vsel %vm278, %v2663, 0.0
  %2721 = vadd.xlane.f32.xlu0 %v2720
  %v2722 = vpop.xlane.xlu0 %2721
  %v2723 = vsel %vm278, %v2665, 0.0
  %2724 = vadd.xlane.f32.xlu0 %v2723
  %v2725 = vpop.xlane.xlu0 %2724
  %v2726 = vsel %vm278, %v2667, 0.0
  %2727 = vadd.xlane.f32.xlu0 %v2726
  %v2728 = vpop.xlane.xlu0 %2727
  %v2729 = vsel %vm278, %v2669, 0.0
  %2730 = vadd.xlane.f32.xlu0 %v2729
  %v2731 = vpop.xlane.xlu0 %2730
  %v2732 = vsel %vm278, %v2671, 0.0
  %2733 = vadd.xlane.f32.xlu0 %v2732
  %v2734 = vpop.xlane.xlu0 %2733
  %v2735 = vsel %vm278, %v2673, 0.0
  %2736 = vadd.xlane.f32.xlu0 %v2735
  %v2737 = vpop.xlane.xlu0 %2736
  %v2738 = vlaneseq
  %v2739 = vshrl.u32 %v2738, 7
  %v2740 = vsub.s32 3, %v2739
  %v2741 = vrot.slane %v257, %v2740
  %2743 = vrot.lane.b32.xlu0 %v2741, 48
  %v2744 = vpop.permute.xlu0 %2743
  %v2746 = vmul.f32 %v162, %v2744
  %v2747 = vmul.f32 %v167, %v2744
  %v2748 = vmul.f32 %v172, %v2744
  %v2749 = vmul.f32 %v177, %v2744
  %v2750 = vmul.f32 %v182, %v2744
  %v2751 = vmul.f32 %v187, %v2744
  %v2752 = vmul.f32 %v192, %v2744
  %v2753 = vmul.f32 %v197, %v2744
  %v2754 = vmul.f32 %v202, %v2744
  %v2755 = vmul.f32 %v207, %v2744
  %v2756 = vmul.f32 %v212, %v2744
  %v2757 = vmul.f32 %v217, %v2744
  %v2758 = vmul.f32 %v222, %v2744
  %v2759 = vmul.f32 %v227, %v2744
  %v2760 = vmul.f32 %v232, %v2744
  %v2761 = vmul.f32 %v237, %v2744
  %2778 = vrot.lane.b32.xlu0 %v2746, 80
  %v2779 = vpop.permute.xlu0 %2778
  %2780 = vrot.lane.b32.xlu0 %v2747, 80
  %v2781 = vpop.permute.xlu0 %2780
  %2782 = vrot.lane.b32.xlu0 %v2748, 80
  %v2783 = vpop.permute.xlu0 %2782
  %2784 = vrot.lane.b32.xlu0 %v2749, 80
  %v2785 = vpop.permute.xlu0 %2784
  %2786 = vrot.lane.b32.xlu0 %v2750, 80
  %v2787 = vpop.permute.xlu0 %2786
  %2788 = vrot.lane.b32.xlu0 %v2751, 80
  %v2789 = vpop.permute.xlu0 %2788
  %2790 = vrot.lane.b32.xlu0 %v2752, 80
  %v2791 = vpop.permute.xlu0 %2790
  %2792 = vrot.lane.b32.xlu0 %v2753, 80
  %v2793 = vpop.permute.xlu0 %2792
  %2794 = vrot.lane.b32.xlu0 %v2754, 80
  %v2795 = vpop.permute.xlu0 %2794
  %2796 = vrot.lane.b32.xlu0 %v2755, 80
  %v2797 = vpop.permute.xlu0 %2796
  %2798 = vrot.lane.b32.xlu0 %v2756, 80
  %v2799 = vpop.permute.xlu0 %2798
  %2800 = vrot.lane.b32.xlu0 %v2757, 80
  %v2801 = vpop.permute.xlu0 %2800
  %2802 = vrot.lane.b32.xlu0 %v2758, 80
  %v2803 = vpop.permute.xlu0 %2802
  %2804 = vrot.lane.b32.xlu0 %v2759, 80
  %v2805 = vpop.permute.xlu0 %2804
  %2806 = vrot.lane.b32.xlu0 %v2760, 80
  %v2807 = vpop.permute.xlu0 %2806
  %2808 = vrot.lane.b32.xlu0 %v2761, 80
  %v2809 = vpop.permute.xlu0 %2808
  %v2826 = vsel %vm278, %v2779, 0.0
  %2827 = vadd.xlane.f32.xlu0 %v2826
  %v2828 = vpop.xlane.xlu0 %2827
  %v2829 = vsel %vm278, %v2781, 0.0
  %2830 = vadd.xlane.f32.xlu0 %v2829
  %v2831 = vpop.xlane.xlu0 %2830
  %v2832 = vsel %vm278, %v2783, 0.0
  %2833 = vadd.xlane.f32.xlu0 %v2832
  %v2834 = vpop.xlane.xlu0 %2833
  %v2835 = vsel %vm278, %v2785, 0.0
  %2836 = vadd.xlane.f32.xlu0 %v2835
  %v2837 = vpop.xlane.xlu0 %2836
  %v2838 = vsel %vm278, %v2787, 0.0
  %2839 = vadd.xlane.f32.xlu0 %v2838
  %v2840 = vpop.xlane.xlu0 %2839
  %v2841 = vsel %vm278, %v2789, 0.0
  %2842 = vadd.xlane.f32.xlu0 %v2841
  %v2843 = vpop.xlane.xlu0 %2842
  %v2844 = vsel %vm278, %v2791, 0.0
  %2845 = vadd.xlane.f32.xlu0 %v2844
  %v2846 = vpop.xlane.xlu0 %2845
  %v2847 = vsel %vm278, %v2793, 0.0
  %2848 = vadd.xlane.f32.xlu0 %v2847
  %v2849 = vpop.xlane.xlu0 %2848
  %v2850 = vsel %vm278, %v2795, 0.0
  %2851 = vadd.xlane.f32.xlu0 %v2850
  %v2852 = vpop.xlane.xlu0 %2851
  %v2853 = vsel %vm278, %v2797, 0.0
  %2854 = vadd.xlane.f32.xlu0 %v2853
  %v2855 = vpop.xlane.xlu0 %2854
  %v2856 = vsel %vm278, %v2799, 0.0
  %2857 = vadd.xlane.f32.xlu0 %v2856
  %v2858 = vpop.xlane.xlu0 %2857
  %v2859 = vsel %vm278, %v2801, 0.0
  %2860 = vadd.xlane.f32.xlu0 %v2859
  %v2861 = vpop.xlane.xlu0 %2860
  %v2862 = vsel %vm278, %v2803, 0.0
  %2863 = vadd.xlane.f32.xlu0 %v2862
  %v2864 = vpop.xlane.xlu0 %2863
  %v2865 = vsel %vm278, %v2805, 0.0
  %2866 = vadd.xlane.f32.xlu0 %v2865
  %v2867 = vpop.xlane.xlu0 %2866
  %v2868 = vsel %vm278, %v2807, 0.0
  %2869 = vadd.xlane.f32.xlu0 %v2868
  %v2870 = vpop.xlane.xlu0 %2869
  %v2871 = vsel %vm278, %v2809, 0.0
  %2872 = vadd.xlane.f32.xlu0 %v2871
  %v2873 = vpop.xlane.xlu0 %2872
  %2874 = vxpose.xlu0.b32.start [1/16] %v2692, 128
  %2875 = vxpose.xlu0.b32.cont [2/16] %v2695, 128
  %2876 = vxpose.xlu0.b32.cont [3/16] %v2698, 128
  %2877 = vxpose.xlu0.b32.cont [4/16] %v2701, 128
  %2878 = vxpose.xlu0.b32.cont [5/16] %v2704, 128
  %2879 = vxpose.xlu0.b32.cont [6/16] %v2707, 128
  %2880 = vxpose.xlu0.b32.cont [7/16] %v2710, 128
  %2881 = vxpose.xlu0.b32.cont [8/16] %v2713, 128
  %2882 = vxpose.xlu0.b32.cont [9/16] %v2716, 128
  %2883 = vxpose.xlu0.b32.cont [10/16] %v2719, 128
  %2884 = vxpose.xlu0.b32.cont [11/16] %v2722, 128
  %2885 = vxpose.xlu0.b32.cont [12/16] %v2725, 128
  %2886 = vxpose.xlu0.b32.cont [13/16] %v2728, 128
  %2887 = vxpose.xlu0.b32.cont [14/16] %v2731, 128
  %2888 = vxpose.xlu0.b32.cont [15/16] %v2734, 128
  %2889 = vxpose.xlu0.b32.end [16/16] %v2737, 128
  %v2890 = vpop.trf.xlu0
  %v2891 = vpop.trf.xlu0
  %v2892 = vpop.trf.xlu0
  %v2893 = vpop.trf.xlu0
  %v2894 = vpop.trf.xlu0
  %v2895 = vpop.trf.xlu0
  %v2896 = vpop.trf.xlu0
  %v2897 = vpop.trf.xlu0
  %v2898 = vpop.trf.xlu0
  %v2899 = vpop.trf.xlu0
  %v2900 = vpop.trf.xlu0
  %v2901 = vpop.trf.xlu0
  %v2902 = vpop.trf.xlu0
  %v2903 = vpop.trf.xlu0
  %v2904 = vpop.trf.xlu0
  %v2905 = vpop.trf.xlu0
  %v2906 = vlaneseq
  %v2907 = vshrl.u32 %v2906, 7
  %v2908 = vsub.s32 0, %v2907
  %v2909 = vrot.slane %v2890, %v2908
  %v2910 = vadd.f32 %v2828, %v2909
  %v2911 = vadd.f32 %v2831, %v2909
  %v2912 = vadd.f32 %v2834, %v2909
  %v2913 = vadd.f32 %v2837, %v2909
  %v2914 = vadd.f32 %v2840, %v2909
  %v2915 = vadd.f32 %v2843, %v2909
  %v2916 = vadd.f32 %v2846, %v2909
  %v2917 = vadd.f32 %v2849, %v2909
  %v2918 = vadd.f32 %v2852, %v2909
  %v2919 = vadd.f32 %v2855, %v2909
  %v2920 = vadd.f32 %v2858, %v2909
  %v2921 = vadd.f32 %v2861, %v2909
  %v2922 = vadd.f32 %v2864, %v2909
  %v2923 = vadd.f32 %v2867, %v2909
  %v2924 = vadd.f32 %v2870, %v2909
  %v2925 = vadd.f32 %v2873, %v2909
  %vm2926 = vcmp.gt.f32.partialorder %v2910, 0.0
  %vm2927 = vcmp.gt.f32.partialorder %v2911, 0.0
  %vm2928 = vcmp.gt.f32.partialorder %v2912, 0.0
  %vm2929 = vcmp.gt.f32.partialorder %v2913, 0.0
  %vm2930 = vcmp.gt.f32.partialorder %v2914, 0.0
  %vm2931 = vcmp.gt.f32.partialorder %v2915, 0.0
  %vm2932 = vcmp.gt.f32.partialorder %v2916, 0.0
  %vm2933 = vcmp.gt.f32.partialorder %v2917, 0.0
  %vm2934 = vcmp.gt.f32.partialorder %v2918, 0.0
  %vm2935 = vcmp.gt.f32.partialorder %v2919, 0.0
  %vm2936 = vcmp.gt.f32.partialorder %v2920, 0.0
  %vm2937 = vcmp.gt.f32.partialorder %v2921, 0.0
  %vm2938 = vcmp.gt.f32.partialorder %v2922, 0.0
  %vm2939 = vcmp.gt.f32.partialorder %v2923, 0.0
  %vm2940 = vcmp.gt.f32.partialorder %v2924, 0.0
  %vm2941 = vcmp.gt.f32.partialorder %v2925, 0.0
  %v2942 = vmul.f32 %v2910, 0.2
  %v2943 = vmul.f32 %v2911, 0.2
  %v2944 = vmul.f32 %v2912, 0.2
  %v2945 = vmul.f32 %v2913, 0.2
  %v2946 = vmul.f32 %v2914, 0.2
  %v2947 = vmul.f32 %v2915, 0.2
  %v2948 = vmul.f32 %v2916, 0.2
  %v2949 = vmul.f32 %v2917, 0.2
  %v2950 = vmul.f32 %v2918, 0.2
  %v2951 = vmul.f32 %v2919, 0.2
  %v2952 = vmul.f32 %v2920, 0.2
  %v2953 = vmul.f32 %v2921, 0.2
  %v2954 = vmul.f32 %v2922, 0.2
  %v2955 = vmul.f32 %v2923, 0.2
  %v2956 = vmul.f32 %v2924, 0.2
  %v2957 = vmul.f32 %v2925, 0.2
  %v2958 = vsel %vm2926, %v2910, %v2942
  %v2959 = vsel %vm2927, %v2911, %v2943
  %v2960 = vsel %vm2928, %v2912, %v2944
  %v2961 = vsel %vm2929, %v2913, %v2945
  %v2962 = vsel %vm2930, %v2914, %v2946
  %v2963 = vsel %vm2931, %v2915, %v2947
  %v2964 = vsel %vm2932, %v2916, %v2948
  %v2965 = vsel %vm2933, %v2917, %v2949
  %v2966 = vsel %vm2934, %v2918, %v2950
  %v2967 = vsel %vm2935, %v2919, %v2951
  %v2968 = vsel %vm2936, %v2920, %v2952
  %v2969 = vsel %vm2937, %v2921, %v2953
  %v2970 = vsel %vm2938, %v2922, %v2954
  %v2971 = vsel %vm2939, %v2923, %v2955
  %v2972 = vsel %vm2940, %v2924, %v2956
  %v2973 = vsel %vm2941, %v2925, %v2957
  %v2974 = vsel %vm495, %v2958, -1e+30
  %v2975 = vsel %vm496, %v2959, -1e+30
  %v2976 = vsel %vm497, %v2960, -1e+30
  %v2977 = vsel %vm498, %v2961, -1e+30
  %v2978 = vsel %vm499, %v2962, -1e+30
  %v2979 = vsel %vm500, %v2963, -1e+30
  %v2980 = vsel %vm501, %v2964, -1e+30
  %v2981 = vsel %vm502, %v2965, -1e+30
  %v2982 = vsel %vm503, %v2966, -1e+30
  %v2983 = vsel %vm504, %v2967, -1e+30
  %v2984 = vsel %vm505, %v2968, -1e+30
  %v2985 = vsel %vm506, %v2969, -1e+30
  %v2986 = vsel %vm507, %v2970, -1e+30
  %v2987 = vsel %vm508, %v2971, -1e+30
  %v2988 = vsel %vm509, %v2972, -1e+30
  %v2989 = vsel %vm510, %v2973, -1e+30
  %2990 = vmax.xlane.f32.xlu0 %v2974
  %v2991 = vpop.xlane.xlu0 %2990
  %2992 = vmax.xlane.f32.xlu0 %v2975
  %v2993 = vpop.xlane.xlu0 %2992
  %2994 = vmax.xlane.f32.xlu0 %v2976
  %v2995 = vpop.xlane.xlu0 %2994
  %2996 = vmax.xlane.f32.xlu0 %v2977
  %v2997 = vpop.xlane.xlu0 %2996
  %2998 = vmax.xlane.f32.xlu0 %v2978
  %v2999 = vpop.xlane.xlu0 %2998
  %3000 = vmax.xlane.f32.xlu0 %v2979
  %v3001 = vpop.xlane.xlu0 %3000
  %3002 = vmax.xlane.f32.xlu0 %v2980
  %v3003 = vpop.xlane.xlu0 %3002
  %3004 = vmax.xlane.f32.xlu0 %v2981
  %v3005 = vpop.xlane.xlu0 %3004
  %3006 = vmax.xlane.f32.xlu0 %v2982
  %v3007 = vpop.xlane.xlu0 %3006
  %3008 = vmax.xlane.f32.xlu0 %v2983
  %v3009 = vpop.xlane.xlu0 %3008
  %3010 = vmax.xlane.f32.xlu0 %v2984
  %v3011 = vpop.xlane.xlu0 %3010
  %3012 = vmax.xlane.f32.xlu0 %v2985
  %v3013 = vpop.xlane.xlu0 %3012
  %3014 = vmax.xlane.f32.xlu0 %v2986
  %v3015 = vpop.xlane.xlu0 %3014
  %3016 = vmax.xlane.f32.xlu0 %v2987
  %v3017 = vpop.xlane.xlu0 %3016
  %3018 = vmax.xlane.f32.xlu0 %v2988
  %v3019 = vpop.xlane.xlu0 %3018
  %3020 = vmax.xlane.f32.xlu0 %v2989
  %v3021 = vpop.xlane.xlu0 %3020
  %v3022 = vsub.f32 %v2974, %v2991
  %v3023 = vsub.f32 %v2975, %v2993
  %v3024 = vsub.f32 %v2976, %v2995
  %v3025 = vsub.f32 %v2977, %v2997
  %v3026 = vsub.f32 %v2978, %v2999
  %v3027 = vsub.f32 %v2979, %v3001
  %v3028 = vsub.f32 %v2980, %v3003
  %v3029 = vsub.f32 %v2981, %v3005
  %v3030 = vsub.f32 %v2982, %v3007
  %v3031 = vsub.f32 %v2983, %v3009
  %v3032 = vsub.f32 %v2984, %v3011
  %v3033 = vsub.f32 %v2985, %v3013
  %v3034 = vsub.f32 %v2986, %v3015
  %v3035 = vsub.f32 %v2987, %v3017
  %v3036 = vsub.f32 %v2988, %v3019
  %v3037 = vsub.f32 %v2989, %v3021
  %v3038 = vmul.f32 %v3022, 1.442695
  %v3039 = vpow.pop %v3038
  %v3040 = vmul.f32 %v3023, 1.442695
  %v3041 = vpow.pop %v3040
  %v3042 = vmul.f32 %v3024, 1.442695
  %v3043 = vpow.pop %v3042
  %v3044 = vmul.f32 %v3025, 1.442695
  %v3045 = vpow.pop %v3044
  %v3046 = vmul.f32 %v3026, 1.442695
  %v3047 = vpow.pop %v3046
  %v3048 = vmul.f32 %v3027, 1.442695
  %v3049 = vpow.pop %v3048
  %v3050 = vmul.f32 %v3028, 1.442695
  %v3051 = vpow.pop %v3050
  %v3052 = vmul.f32 %v3029, 1.442695
  %v3053 = vpow.pop %v3052
  %v3054 = vmul.f32 %v3030, 1.442695
  %v3055 = vpow.pop %v3054
  %v3056 = vmul.f32 %v3031, 1.442695
  %v3057 = vpow.pop %v3056
  %v3058 = vmul.f32 %v3032, 1.442695
  %v3059 = vpow.pop %v3058
  %v3060 = vmul.f32 %v3033, 1.442695
  %v3061 = vpow.pop %v3060
  %v3062 = vmul.f32 %v3034, 1.442695
  %v3063 = vpow.pop %v3062
  %v3064 = vmul.f32 %v3035, 1.442695
  %v3065 = vpow.pop %v3064
  %v3066 = vmul.f32 %v3036, 1.442695
  %v3067 = vpow.pop %v3066
  %v3068 = vmul.f32 %v3037, 1.442695
  %v3069 = vpow.pop %v3068
  %v3070 = vmul.f32 %v3039, %v240
  %v3071 = vmul.f32 %v3041, %v241
  %v3072 = vmul.f32 %v3043, %v242
  %v3073 = vmul.f32 %v3045, %v243
  %v3074 = vmul.f32 %v3047, %v244
  %v3075 = vmul.f32 %v3049, %v245
  %v3076 = vmul.f32 %v3051, %v246
  %v3077 = vmul.f32 %v3053, %v247
  %v3078 = vmul.f32 %v3055, %v248
  %v3079 = vmul.f32 %v3057, %v249
  %v3080 = vmul.f32 %v3059, %v250
  %v3081 = vmul.f32 %v3061, %v251
  %v3082 = vmul.f32 %v3063, %v252
  %v3083 = vmul.f32 %v3065, %v253
  %v3084 = vmul.f32 %v3067, %v254
  %v3085 = vmul.f32 %v3069, %v255
  %3086 = vadd.xlane.f32.xlu0 %v3070
  %v3087 = vpop.xlane.xlu0 %3086
  %3088 = vadd.xlane.f32.xlu0 %v3071
  %v3089 = vpop.xlane.xlu0 %3088
  %3090 = vadd.xlane.f32.xlu0 %v3072
  %v3091 = vpop.xlane.xlu0 %3090
  %3092 = vadd.xlane.f32.xlu0 %v3073
  %v3093 = vpop.xlane.xlu0 %3092
  %3094 = vadd.xlane.f32.xlu0 %v3074
  %v3095 = vpop.xlane.xlu0 %3094
  %3096 = vadd.xlane.f32.xlu0 %v3075
  %v3097 = vpop.xlane.xlu0 %3096
  %3098 = vadd.xlane.f32.xlu0 %v3076
  %v3099 = vpop.xlane.xlu0 %3098
  %3100 = vadd.xlane.f32.xlu0 %v3077
  %v3101 = vpop.xlane.xlu0 %3100
  %3102 = vadd.xlane.f32.xlu0 %v3078
  %v3103 = vpop.xlane.xlu0 %3102
  %3104 = vadd.xlane.f32.xlu0 %v3079
  %v3105 = vpop.xlane.xlu0 %3104
  %3106 = vadd.xlane.f32.xlu0 %v3080
  %v3107 = vpop.xlane.xlu0 %3106
  %3108 = vadd.xlane.f32.xlu0 %v3081
  %v3109 = vpop.xlane.xlu0 %3108
  %3110 = vadd.xlane.f32.xlu0 %v3082
  %v3111 = vpop.xlane.xlu0 %3110
  %3112 = vadd.xlane.f32.xlu0 %v3083
  %v3113 = vpop.xlane.xlu0 %3112
  %3114 = vadd.xlane.f32.xlu0 %v3084
  %v3115 = vpop.xlane.xlu0 %3114
  %3116 = vadd.xlane.f32.xlu0 %v3085
  %v3117 = vpop.xlane.xlu0 %3116
  %3118 = vrot.lane.b32.xlu0 %v162, 80
  %v3119 = vpop.permute.xlu0 %3118
  %3120 = vrot.lane.b32.xlu0 %v167, 80
  %v3121 = vpop.permute.xlu0 %3120
  %3122 = vrot.lane.b32.xlu0 %v172, 80
  %v3123 = vpop.permute.xlu0 %3122
  %3124 = vrot.lane.b32.xlu0 %v177, 80
  %v3125 = vpop.permute.xlu0 %3124
  %3126 = vrot.lane.b32.xlu0 %v182, 80
  %v3127 = vpop.permute.xlu0 %3126
  %3128 = vrot.lane.b32.xlu0 %v187, 80
  %v3129 = vpop.permute.xlu0 %3128
  %3130 = vrot.lane.b32.xlu0 %v192, 80
  %v3131 = vpop.permute.xlu0 %3130
  %3132 = vrot.lane.b32.xlu0 %v197, 80
  %v3133 = vpop.permute.xlu0 %3132
  %3134 = vrot.lane.b32.xlu0 %v202, 80
  %v3135 = vpop.permute.xlu0 %3134
  %3136 = vrot.lane.b32.xlu0 %v207, 80
  %v3137 = vpop.permute.xlu0 %3136
  %3138 = vrot.lane.b32.xlu0 %v212, 80
  %v3139 = vpop.permute.xlu0 %3138
  %3140 = vrot.lane.b32.xlu0 %v217, 80
  %v3141 = vpop.permute.xlu0 %3140
  %3142 = vrot.lane.b32.xlu0 %v222, 80
  %v3143 = vpop.permute.xlu0 %3142
  %3144 = vrot.lane.b32.xlu0 %v227, 80
  %v3145 = vpop.permute.xlu0 %3144
  %3146 = vrot.lane.b32.xlu0 %v232, 80
  %v3147 = vpop.permute.xlu0 %3146
  %3148 = vrot.lane.b32.xlu0 %v237, 80
  %v3149 = vpop.permute.xlu0 %3148
  %3166 = vmatprep.subr.mxu0 0.0
  %3167 = vmatpush1.msra.mxu0 %v3149
  %3168 = vmatprep.subr.mxu0 0.0
  %3169 = vmatpush1.msra.mxu0 %v3147
  %3170 = vmatprep.subr.mxu0 0.0
  %3171 = vmatpush1.msra.mxu0 %v3145
  %3172 = vmatprep.subr.mxu0 0.0
  %3173 = vmatpush1.msra.mxu0 %v3143
  %3174 = vmatprep.subr.mxu0 0.0
  %3175 = vmatpush1.msra.mxu0 %v3141
  %3176 = vmatprep.subr.mxu0 0.0
  %3177 = vmatpush1.msra.mxu0 %v3139
  %3178 = vmatprep.subr.mxu0 0.0
  %3179 = vmatpush1.msra.mxu0 %v3137
  %3180 = vmatprep.subr.mxu0 0.0
  %3181 = vmatpush1.msra.mxu0 %v3135
  %3182 = vmatprep.subr.mxu0 0.0
  %3183 = vmatpush1.msra.mxu0 %v3133
  %3184 = vmatprep.subr.mxu0 0.0
  %3185 = vmatpush1.msra.mxu0 %v3131
  %3186 = vmatprep.subr.mxu0 0.0
  %3187 = vmatpush1.msra.mxu0 %v3129
  %3188 = vmatprep.subr.mxu0 0.0
  %3189 = vmatpush1.msra.mxu0 %v3127
  %3190 = vmatprep.subr.mxu0 0.0
  %3191 = vmatpush1.msra.mxu0 %v3125
  %3192 = vmatprep.subr.mxu0 0.0
  %3193 = vmatpush1.msra.mxu0 %v3123
  %3194 = vmatprep.subr.mxu0 0.0
  %3195 = vmatpush1.msra.mxu0 %v3121
  %3196 = vmatprep.subr.mxu0 0.0
  %3197 = vmatpush1.msra.mxu0 %v3119
  %3198 = vmatprep.subr.mxu0 0.0
  %3199 = vmatpush2.msra.mxu0 0.0
  %3200 = vmatprep.subr.mxu0 0.0
  %3201 = vmatpush2.msra.mxu0 0.0
  %3202 = vmatprep.subr.mxu0 0.0
  %3203 = vmatpush2.msra.mxu0 0.0
  %3204 = vmatprep.subr.mxu0 0.0
  %3205 = vmatpush2.msra.mxu0 0.0
  %3206 = vmatprep.subr.mxu0 0.0
  %3207 = vmatpush2.msra.mxu0 0.0
  %3208 = vmatprep.subr.mxu0 0.0
  %3209 = vmatpush2.msra.mxu0 0.0
  %3210 = vmatprep.subr.mxu0 0.0
  %3211 = vmatpush2.msra.mxu0 0.0
  %3212 = vmatprep.subr.mxu0 0.0
  %3213 = vmatpush2.msra.mxu0 0.0
  %3214 = vmatprep.subr.mxu0 0.0
  %3215 = vmatpush2.msra.mxu0 0.0
  %3216 = vmatprep.subr.mxu0 0.0
  %3217 = vmatpush2.msra.mxu0 0.0
  %3218 = vmatprep.subr.mxu0 0.0
  %3219 = vmatpush2.msra.mxu0 0.0
  %3220 = vmatprep.subr.mxu0 0.0
  %3221 = vmatpush2.msra.mxu0 0.0
  %3222 = vmatprep.subr.mxu0 0.0
  %3223 = vmatpush2.msra.mxu0 0.0
  %3224 = vmatprep.subr.mxu0 0.0
  %3225 = vmatpush2.msra.mxu0 0.0
  %3226 = vmatprep.subr.mxu0 0.0
  %3227 = vmatpush2.msra.mxu0 0.0
  %3228 = vmatprep.subr.mxu0 0.0
  %3229 = vmatpush2.msra.mxu0 0.0
  %3230 = vmatprep.mubr.f32.mxu0 0.0
  %3231 = vmatmul.mubr.f32.gmra.mxu0 %v3070
  %v3232 = vpop.f32.mrf.mxu0
  %v3233 = vadd.f32 0.0, %v3232
  %v3234 = vpop.f32.mrf.mxu0
  %3235 = vmatprep.mubr.f32.mxu0 0.0
  %3236 = vmatmul.mubr.f32.gmra.mxu0 %v3071
  %v3237 = vpop.f32.mrf.mxu0
  %v3238 = vadd.f32 0.0, %v3237
  %v3239 = vpop.f32.mrf.mxu0
  %3240 = vmatprep.mubr.f32.mxu0 0.0
  %3241 = vmatmul.mubr.f32.gmra.mxu0 %v3072
  %v3242 = vpop.f32.mrf.mxu0
  %v3243 = vadd.f32 0.0, %v3242
  %v3244 = vpop.f32.mrf.mxu0
  %3245 = vmatprep.mubr.f32.mxu0 0.0
  %3246 = vmatmul.mubr.f32.gmra.mxu0 %v3073
  %v3247 = vpop.f32.mrf.mxu0
  %v3248 = vadd.f32 0.0, %v3247
  %v3249 = vpop.f32.mrf.mxu0
  %3250 = vmatprep.mubr.f32.mxu0 0.0
  %3251 = vmatmul.mubr.f32.gmra.mxu0 %v3074
  %v3252 = vpop.f32.mrf.mxu0
  %v3253 = vadd.f32 0.0, %v3252
  %v3254 = vpop.f32.mrf.mxu0
  %3255 = vmatprep.mubr.f32.mxu0 0.0
  %3256 = vmatmul.mubr.f32.gmra.mxu0 %v3075
  %v3257 = vpop.f32.mrf.mxu0
  %v3258 = vadd.f32 0.0, %v3257
  %v3259 = vpop.f32.mrf.mxu0
  %3260 = vmatprep.mubr.f32.mxu0 0.0
  %3261 = vmatmul.mubr.f32.gmra.mxu0 %v3076
  %v3262 = vpop.f32.mrf.mxu0
  %v3263 = vadd.f32 0.0, %v3262
  %v3264 = vpop.f32.mrf.mxu0
  %3265 = vmatprep.mubr.f32.mxu0 0.0
  %3266 = vmatmul.mubr.f32.gmra.mxu0 %v3077
  %v3267 = vpop.f32.mrf.mxu0
  %v3268 = vadd.f32 0.0, %v3267
  %v3269 = vpop.f32.mrf.mxu0
  %3270 = vmatprep.mubr.f32.mxu0 0.0
  %3271 = vmatmul.mubr.f32.gmra.mxu0 %v3078
  %v3272 = vpop.f32.mrf.mxu0
  %v3273 = vadd.f32 0.0, %v3272
  %v3274 = vpop.f32.mrf.mxu0
  %3275 = vmatprep.mubr.f32.mxu0 0.0
  %3276 = vmatmul.mubr.f32.gmra.mxu0 %v3079
  %v3277 = vpop.f32.mrf.mxu0
  %v3278 = vadd.f32 0.0, %v3277
  %v3279 = vpop.f32.mrf.mxu0
  %3280 = vmatprep.mubr.f32.mxu0 0.0
  %3281 = vmatmul.mubr.f32.gmra.mxu0 %v3080
  %v3282 = vpop.f32.mrf.mxu0
  %v3283 = vadd.f32 0.0, %v3282
  %v3284 = vpop.f32.mrf.mxu0
  %3285 = vmatprep.mubr.f32.mxu0 0.0
  %3286 = vmatmul.mubr.f32.gmra.mxu0 %v3081
  %v3287 = vpop.f32.mrf.mxu0
  %v3288 = vadd.f32 0.0, %v3287
  %v3289 = vpop.f32.mrf.mxu0
  %3290 = vmatprep.mubr.f32.mxu0 0.0
  %3291 = vmatmul.mubr.f32.gmra.mxu0 %v3082
  %v3292 = vpop.f32.mrf.mxu0
  %v3293 = vadd.f32 0.0, %v3292
  %v3294 = vpop.f32.mrf.mxu0
  %3295 = vmatprep.mubr.f32.mxu0 0.0
  %3296 = vmatmul.mubr.f32.gmra.mxu0 %v3083
  %v3297 = vpop.f32.mrf.mxu0
  %v3298 = vadd.f32 0.0, %v3297
  %v3299 = vpop.f32.mrf.mxu0
  %3300 = vmatprep.mubr.f32.mxu0 0.0
  %3301 = vmatmul.mubr.f32.gmra.mxu0 %v3084
  %v3302 = vpop.f32.mrf.mxu0
  %v3303 = vadd.f32 0.0, %v3302
  %v3304 = vpop.f32.mrf.mxu0
  %3305 = vmatprep.mubr.f32.mxu0 0.0
  %3306 = vmatmul.mubr.f32.gmra.mxu0 %v3085
  %v3307 = vpop.f32.mrf.mxu0
  %v3308 = vadd.f32 0.0, %v3307
  %v3309 = vpop.f32.mrf.mxu0
  %3310 = vdwg.mxu0
  %v3311 = vadd.f32 %v3087, 1e-16
  %v3312 = vadd.f32 %v3089, 1e-16
  %v3313 = vadd.f32 %v3091, 1e-16
  %v3314 = vadd.f32 %v3093, 1e-16
  %v3315 = vadd.f32 %v3095, 1e-16
  %v3316 = vadd.f32 %v3097, 1e-16
  %v3317 = vadd.f32 %v3099, 1e-16
  %v3318 = vadd.f32 %v3101, 1e-16
  %v3319 = vadd.f32 %v3103, 1e-16
  %v3320 = vadd.f32 %v3105, 1e-16
  %v3321 = vadd.f32 %v3107, 1e-16
  %v3322 = vadd.f32 %v3109, 1e-16
  %v3323 = vadd.f32 %v3111, 1e-16
  %v3324 = vadd.f32 %v3113, 1e-16
  %v3325 = vadd.f32 %v3115, 1e-16
  %v3326 = vadd.f32 %v3117, 1e-16
  %v3327 = vrcp.pop %v3311
  %v3328 = vrcp.pop %v3312
  %v3329 = vrcp.pop %v3313
  %v3330 = vrcp.pop %v3314
  %v3331 = vrcp.pop %v3315
  %v3332 = vrcp.pop %v3316
  %v3333 = vrcp.pop %v3317
  %v3334 = vrcp.pop %v3318
  %v3335 = vrcp.pop %v3319
  %v3336 = vrcp.pop %v3320
  %v3337 = vrcp.pop %v3321
  %v3338 = vrcp.pop %v3322
  %v3339 = vrcp.pop %v3323
  %v3340 = vrcp.pop %v3324
  %v3341 = vrcp.pop %v3325
  %v3342 = vrcp.pop %v3326
  %v3343 = vmul.f32 %v3233, %v3327
  %v3344 = vmul.f32 %v3238, %v3328
  %v3345 = vmul.f32 %v3243, %v3329
  %v3346 = vmul.f32 %v3248, %v3330
  %v3347 = vmul.f32 %v3253, %v3331
  %v3348 = vmul.f32 %v3258, %v3332
  %v3349 = vmul.f32 %v3263, %v3333
  %v3350 = vmul.f32 %v3268, %v3334
  %v3351 = vmul.f32 %v3273, %v3335
  %v3352 = vmul.f32 %v3278, %v3336
  %v3353 = vmul.f32 %v3283, %v3337
  %v3354 = vmul.f32 %v3288, %v3338
  %v3355 = vmul.f32 %v3293, %v3339
  %v3356 = vmul.f32 %v3298, %v3340
  %v3357 = vmul.f32 %v3303, %v3341
  %v3358 = vmul.f32 %v3308, %v3342
  %3359 = vrot.lane.b32.xlu0 %v162, 16
  %v3360 = vpop.permute.xlu0 %3359
  %3361 = vrot.lane.b32.xlu0 %v167, 16
  %v3362 = vpop.permute.xlu0 %3361
  %3363 = vrot.lane.b32.xlu0 %v172, 16
  %v3364 = vpop.permute.xlu0 %3363
  %3365 = vrot.lane.b32.xlu0 %v177, 16
  %v3366 = vpop.permute.xlu0 %3365
  %3367 = vrot.lane.b32.xlu0 %v182, 16
  %v3368 = vpop.permute.xlu0 %3367
  %3369 = vrot.lane.b32.xlu0 %v187, 16
  %v3370 = vpop.permute.xlu0 %3369
  %3371 = vrot.lane.b32.xlu0 %v192, 16
  %v3372 = vpop.permute.xlu0 %3371
  %3373 = vrot.lane.b32.xlu0 %v197, 16
  %v3374 = vpop.permute.xlu0 %3373
  %3375 = vrot.lane.b32.xlu0 %v202, 16
  %v3376 = vpop.permute.xlu0 %3375
  %3377 = vrot.lane.b32.xlu0 %v207, 16
  %v3378 = vpop.permute.xlu0 %3377
  %3379 = vrot.lane.b32.xlu0 %v212, 16
  %v3380 = vpop.permute.xlu0 %3379
  %3381 = vrot.lane.b32.xlu0 %v217, 16
  %v3382 = vpop.permute.xlu0 %3381
  %3383 = vrot.lane.b32.xlu0 %v222, 16
  %v3384 = vpop.permute.xlu0 %3383
  %3385 = vrot.lane.b32.xlu0 %v227, 16
  %v3386 = vpop.permute.xlu0 %3385
  %3387 = vrot.lane.b32.xlu0 %v232, 16
  %v3388 = vpop.permute.xlu0 %3387
  %3389 = vrot.lane.b32.xlu0 %v237, 16
  %v3390 = vpop.permute.xlu0 %3389
  %v3407 = vadd.f32 %v3343, %v3360
  %v3408 = vadd.f32 %v3344, %v3362
  %v3409 = vadd.f32 %v3345, %v3364
  %v3410 = vadd.f32 %v3346, %v3366
  %v3411 = vadd.f32 %v3347, %v3368
  %v3412 = vadd.f32 %v3348, %v3370
  %v3413 = vadd.f32 %v3349, %v3372
  %v3414 = vadd.f32 %v3350, %v3374
  %v3415 = vadd.f32 %v3351, %v3376
  %v3416 = vadd.f32 %v3352, %v3378
  %v3417 = vadd.f32 %v3353, %v3380
  %v3418 = vadd.f32 %v3354, %v3382
  %v3419 = vadd.f32 %v3355, %v3384
  %v3420 = vadd.f32 %v3356, %v3386
  %v3421 = vadd.f32 %v3357, %v3388
  %v3422 = vadd.f32 %v3358, %v3390
  %v3423 = vadd.f32 %v2586, %v3407
  %v3424 = vadd.f32 %v2587, %v3408
  %v3425 = vadd.f32 %v2588, %v3409
  %v3426 = vadd.f32 %v2589, %v3410
  %v3427 = vadd.f32 %v2590, %v3411
  %v3428 = vadd.f32 %v2591, %v3412
  %v3429 = vadd.f32 %v2592, %v3413
  %v3430 = vadd.f32 %v2593, %v3414
  %v3431 = vadd.f32 %v2594, %v3415
  %v3432 = vadd.f32 %v2595, %v3416
  %v3433 = vadd.f32 %v2596, %v3417
  %v3434 = vadd.f32 %v2597, %v3418
  %v3435 = vadd.f32 %v2598, %v3419
  %v3436 = vadd.f32 %v2599, %v3420
  %v3437 = vadd.f32 %v2600, %v3421
  %v3438 = vadd.f32 %v2601, %v3422
  %v3439 = vmul.f32 %v3423, 0.25
  %v3440 = vmul.f32 %v3424, 0.25
  %v3441 = vmul.f32 %v3425, 0.25
  %v3442 = vmul.f32 %v3426, 0.25
  %v3443 = vmul.f32 %v3427, 0.25
  %v3444 = vmul.f32 %v3428, 0.25
  %v3445 = vmul.f32 %v3429, 0.25
  %v3446 = vmul.f32 %v3430, 0.25
  %v3447 = vmul.f32 %v3431, 0.25
  %v3448 = vmul.f32 %v3432, 0.25
  %v3449 = vmul.f32 %v3433, 0.25
  %v3450 = vmul.f32 %v3434, 0.25
  %v3451 = vmul.f32 %v3435, 0.25
  %v3452 = vmul.f32 %v3436, 0.25
  %v3453 = vmul.f32 %v3437, 0.25
  %v3454 = vmul.f32 %v3438, 0.25
  %v3455 = vld [vmem:[%s5] sm:$0x1]
  %v3457 = vlaneseq
  %v3458 = vshrl.u32 %v3457, 7
  %v3459 = vsub.s32 0, %v3458
  %v3460 = vrot.slane %v3455, %v3459
  %v3462 = vadd.f32 %v3439, %v3460
  %v3463 = vadd.f32 %v3440, %v3460
  %v3464 = vadd.f32 %v3441, %v3460
  %v3465 = vadd.f32 %v3442, %v3460
  %v3466 = vadd.f32 %v3443, %v3460
  %v3467 = vadd.f32 %v3444, %v3460
  %v3468 = vadd.f32 %v3445, %v3460
  %v3469 = vadd.f32 %v3446, %v3460
  %v3470 = vadd.f32 %v3447, %v3460
  %v3471 = vadd.f32 %v3448, %v3460
  %v3472 = vadd.f32 %v3449, %v3460
  %v3473 = vadd.f32 %v3450, %v3460
  %v3474 = vadd.f32 %v3451, %v3460
  %v3475 = vadd.f32 %v3452, %v3460
  %v3476 = vadd.f32 %v3453, %v3460
  %v3477 = vadd.f32 %v3454, %v3460
  %vm3478 = vcmp.gt.f32.partialorder %v3462, 0.0
  %vm3479 = vcmp.gt.f32.partialorder %v3463, 0.0
  %vm3480 = vcmp.gt.f32.partialorder %v3464, 0.0
  %vm3481 = vcmp.gt.f32.partialorder %v3465, 0.0
  %vm3482 = vcmp.gt.f32.partialorder %v3466, 0.0
  %vm3483 = vcmp.gt.f32.partialorder %v3467, 0.0
  %vm3484 = vcmp.gt.f32.partialorder %v3468, 0.0
  %vm3485 = vcmp.gt.f32.partialorder %v3469, 0.0
  %vm3486 = vcmp.gt.f32.partialorder %v3470, 0.0
  %vm3487 = vcmp.gt.f32.partialorder %v3471, 0.0
  %vm3488 = vcmp.gt.f32.partialorder %v3472, 0.0
  %vm3489 = vcmp.gt.f32.partialorder %v3473, 0.0
  %vm3490 = vcmp.gt.f32.partialorder %v3474, 0.0
  %vm3491 = vcmp.gt.f32.partialorder %v3475, 0.0
  %vm3492 = vcmp.gt.f32.partialorder %v3476, 0.0
  %vm3493 = vcmp.gt.f32.partialorder %v3477, 0.0
  %v3494 = vmin.f32 %v3462, 0.0
  %v3495 = vmin.f32 %v3463, 0.0
  %v3496 = vmin.f32 %v3464, 0.0
  %v3497 = vmin.f32 %v3465, 0.0
  %v3498 = vmin.f32 %v3466, 0.0
  %v3499 = vmin.f32 %v3467, 0.0
  %v3500 = vmin.f32 %v3468, 0.0
  %v3501 = vmin.f32 %v3469, 0.0
  %v3502 = vmin.f32 %v3470, 0.0
  %v3503 = vmin.f32 %v3471, 0.0
  %v3504 = vmin.f32 %v3472, 0.0
  %v3505 = vmin.f32 %v3473, 0.0
  %v3506 = vmin.f32 %v3474, 0.0
  %v3507 = vmin.f32 %v3475, 0.0
  %v3508 = vmin.f32 %v3476, 0.0
  %v3509 = vmin.f32 %v3477, 0.0
  %v3510 = vmul.f32 %v3494, 1.442695
  %v3511 = vpow.pop %v3510
  %v3512 = vmul.f32 %v3495, 1.442695
  %v3513 = vpow.pop %v3512
  %v3514 = vmul.f32 %v3496, 1.442695
  %v3515 = vpow.pop %v3514
  %v3516 = vmul.f32 %v3497, 1.442695
  %v3517 = vpow.pop %v3516
  %v3518 = vmul.f32 %v3498, 1.442695
  %v3519 = vpow.pop %v3518
  %v3520 = vmul.f32 %v3499, 1.442695
  %v3521 = vpow.pop %v3520
  %v3522 = vmul.f32 %v3500, 1.442695
  %v3523 = vpow.pop %v3522
  %v3524 = vmul.f32 %v3501, 1.442695
  %v3525 = vpow.pop %v3524
  %v3526 = vmul.f32 %v3502, 1.442695
  %v3527 = vpow.pop %v3526
  %v3528 = vmul.f32 %v3503, 1.442695
  %v3529 = vpow.pop %v3528
  %v3530 = vmul.f32 %v3504, 1.442695
  %v3531 = vpow.pop %v3530
  %v3532 = vmul.f32 %v3505, 1.442695
  %v3533 = vpow.pop %v3532
  %v3534 = vmul.f32 %v3506, 1.442695
  %v3535 = vpow.pop %v3534
  %v3536 = vmul.f32 %v3507, 1.442695
  %v3537 = vpow.pop %v3536
  %v3538 = vmul.f32 %v3508, 1.442695
  %v3539 = vpow.pop %v3538
  %v3540 = vmul.f32 %v3509, 1.442695
  %v3541 = vpow.pop %v3540
  %v3542 = vsub.f32 %v3511, 1.0
  %v3543 = vsub.f32 %v3513, 1.0
  %v3544 = vsub.f32 %v3515, 1.0
  %v3545 = vsub.f32 %v3517, 1.0
  %v3546 = vsub.f32 %v3519, 1.0
  %v3547 = vsub.f32 %v3521, 1.0
  %v3548 = vsub.f32 %v3523, 1.0
  %v3549 = vsub.f32 %v3525, 1.0
  %v3550 = vsub.f32 %v3527, 1.0
  %v3551 = vsub.f32 %v3529, 1.0
  %v3552 = vsub.f32 %v3531, 1.0
  %v3553 = vsub.f32 %v3533, 1.0
  %v3554 = vsub.f32 %v3535, 1.0
  %v3555 = vsub.f32 %v3537, 1.0
  %v3556 = vsub.f32 %v3539, 1.0
  %v3557 = vsub.f32 %v3541, 1.0
  %v3558 = vsel %vm3478, %v3462, %v3542
  %v3559 = vsel %vm3479, %v3463, %v3543
  %v3560 = vsel %vm3480, %v3464, %v3544
  %v3561 = vsel %vm3481, %v3465, %v3545
  %v3562 = vsel %vm3482, %v3466, %v3546
  %v3563 = vsel %vm3483, %v3467, %v3547
  %v3564 = vsel %vm3484, %v3468, %v3548
  %v3565 = vsel %vm3485, %v3469, %v3549
  %v3566 = vsel %vm3486, %v3470, %v3550
  %v3567 = vsel %vm3487, %v3471, %v3551
  %v3568 = vsel %vm3488, %v3472, %v3552
  %v3569 = vsel %vm3489, %v3473, %v3553
  %v3570 = vsel %vm3490, %v3474, %v3554
  %v3571 = vsel %vm3491, %v3475, %v3555
  %v3572 = vsel %vm3492, %v3476, %v3556
  %v3573 = vsel %vm3493, %v3477, %v3557
  %3574 = vst.msk [vmem:[%s6] sm:$0xff] %vm278, %v3558
  %3575 = vst.msk [vmem:[%s6 + $0x8] sm:$0xff] %vm278, %v3559
  %3576 = vst.msk [vmem:[%s6 + $0x10] sm:$0xff] %vm278, %v3560
  %3577 = vst.msk [vmem:[%s6 + $0x18] sm:$0xff] %vm278, %v3561
  %3578 = vst.msk [vmem:[%s6 + $0x20] sm:$0xff] %vm278, %v3562
  %3579 = vst.msk [vmem:[%s6 + $0x28] sm:$0xff] %vm278, %v3563
  %3580 = vst.msk [vmem:[%s6 + $0x30] sm:$0xff] %vm278, %v3564
  %3581 = vst.msk [vmem:[%s6 + $0x38] sm:$0xff] %vm278, %v3565
  %3582 = vst.msk [vmem:[%s6 + $0x40] sm:$0xff] %vm278, %v3566
  %3583 = vst.msk [vmem:[%s6 + $0x48] sm:$0xff] %vm278, %v3567
  %3584 = vst.msk [vmem:[%s6 + $0x50] sm:$0xff] %vm278, %v3568
  %3585 = vst.msk [vmem:[%s6 + $0x58] sm:$0xff] %vm278, %v3569
  %3586 = vst.msk [vmem:[%s6 + $0x60] sm:$0xff] %vm278, %v3570
  %3587 = vst.msk [vmem:[%s6 + $0x68] sm:$0xff] %vm278, %v3571
  %3588 = vst.msk [vmem:[%s6 + $0x70] sm:$0xff] %vm278, %v3572
  %3589 = vst.msk [vmem:[%s6 + $0x78] sm:$0xff] %vm278, %v3573
  // Predicated region
  $region26: #{distance_gat_fc_forward.2} parent=0 // pred_check
    _
  $region27: #{distance_gat_fc_forward.2} parent=0 // pred_check_branch
    %3591 = sbr.rel (0) target = $region29
  $region28: #{distance_gat_fc_forward.2} parent=0 // pred_region
    _
  $region29: #{distance_gat_fc_forward.2} parent=0 // pred_fallthru
    _
  // Predicated region
  $region30: #{distance_gat_fc_forward.2} parent=0 // pred_check
    _
  $region31: #{distance_gat_fc_forward.2} parent=0 // pred_check_branch
    %3593 = sbr.rel (0) target = $region33
  $region32: #{distance_gat_fc_forward.2} parent=0 // pred_region
    _
  $region33: #{distance_gat_fc_forward.2} parent=0 // pred_fallthru
    _

</llo_original>
